<compile_context>
chip_gen: v7x
topology: tpu7x:2x2x1
jax: 0.10.0
libtpu: 0.0.40
codegen_flags: <defaults>
</compile_context>

<pallas_src>
import functools

import jax
import jax.numpy as jnp
from jax.experimental import pallas as pl
from jax.experimental.pallas import tpu as pltpu

HIDDEN_SIZE = 32
NUM_CLASSES = 2
NUM_LAYERS = 3


# --------------------------------------------------------------------------
# Fused wavefront kernel: 3 stacked LSTM layers + FC head, all in VMEM/vregs.
# Gate order matches PyTorch nn.LSTM: (i, f, g, o).
# --------------------------------------------------------------------------
def _wavefront_lstm_fc_kernel(x_ref, wx_ref, w0_ref, w1_ref, w2_ref, b_ref,
                              wfc_ref, bfc_ref, out_ref,
                              *, seq_len, batch, hidden):
    H = hidden
    B = batch
    T = seq_len

    # Packed block weights, read once into vregs.
    wx = wx_ref[...]        # (D, 12H): [Wih0 | 0    | 0   ]
    w0 = w0_ref[...]        # (H, 12H): [Whh0 | Wih1 | 0   ]
    w1 = w1_ref[...]        # (H, 12H): [0    | Whh1 | Wih2]
    w2 = w2_ref[...]        # (H, 12H): [0    | 0    | Whh2]
    bias = b_ref[...]       # (1, 12H): [b0   | b1   | b2  ]   (b_ih + b_hh)

    # Lane mask selecting each layer's "g" gate (PyTorch order i,f,g,o),
    # computed once and hoisted out of the timestep loop.
    lane = jax.lax.broadcasted_iota(jnp.int32, (B, 12 * H), 1) % (4 * H)
    g_mask = jnp.logical_and(lane >= 2 * H, lane < 3 * H)
    pre_scale = jnp.where(g_mask, jnp.float32(1.0), jnp.float32(0.5))

    def cell_update(act_block, c):
        i = act_block[:, 0 * H:1 * H]
        f = act_block[:, 1 * H:2 * H]
        g = act_block[:, 2 * H:3 * H]
        o = act_block[:, 3 * H:4 * H]
        c_new = f * c + i * g
        h_new = o * jnp.tanh(c_new)
        return h_new, c_new

    zeros = jnp.zeros((B, H), jnp.float32)
    h0, c0 = zeros, zeros
    h1, c1 = zeros, zeros
    h2, c2 = zeros, zeros

    # Statically unrolled wavefront (T small & fixed): layer0 at t=s,
    # layer1 at t=s-1, layer2 at t=s-2.  Gates for all three layers are
    # computed from start-of-step state (independent chains), then only the
    # active layers are updated; inactive boundary lanes are discarded.
    for s in range(T + 2):
        x_s = x_ref[:, min(s, T - 1), :].astype(jnp.float32)      # (B, D)
        gates = (jnp.dot(x_s, wx, preferred_element_type=jnp.float32)
                 + jnp.dot(h0, w0, preferred_element_type=jnp.float32)
                 + jnp.dot(h1, w1, preferred_element_type=jnp.float32)
                 + jnp.dot(h2, w2, preferred_element_type=jnp.float32)
                 + bias)                                           # (B, 12H)
        # One tanh pass; sigmoid(x) = 0.5 * tanh(x / 2) + 0.5 on non-g lanes.
        th = jnp.tanh(gates * pre_scale)
        act = jnp.where(g_mask, th, 0.5 * th + 0.5)
        if s < T:                                   # layer 0 active
            h0, c0 = cell_update(act[:, 0 * 4 * H:1 * 4 * H], c0)
        if 0 <= s - 1 < T:                          # layer 1 active
            h1, c1 = cell_update(act[:, 1 * 4 * H:2 * 4 * H], c1)
        if 0 <= s - 2 < T:                          # layer 2 active
            h2, c2 = cell_update(act[:, 2 * 4 * H:3 * 4 * H], c2)

    # TODO(synk): nn.LSTM inter-layer dropout(p=0.4) only fires in training
    # mode; this is the eval/inference forward, so it is omitted.

    # FC head on the top layer's final hidden state -> (B, C) logits.
    logits = (jnp.dot(h2, wfc_ref[...], preferred_element_type=jnp.float32)
              + bfc_ref[...])
    out_ref[...] = logits.astype(out_ref.dtype)


# --------------------------------------------------------------------------
# Wrapper
# --------------------------------------------------------------------------
def lstm_classifier_forward_fn(x, kparams):
    """x: (B, T, D) batch-first (PyTorch convention). Returns (B, C) logits."""
    B, T, _ = x.shape
    kernel = functools.partial(_wavefront_lstm_fc_kernel,
                               seq_len=T, batch=B, hidden=HIDDEN_SIZE)
    # TODO(synk): at serving batch sizes add a ("parallel",) batch grid so the
    # second TensorCore on v7x is used; at B=2 there is nothing to split.
    return pl.pallas_call(
        kernel,
        out_shape=jax.ShapeDtypeStruct((B, NUM_CLASSES), jnp.float32),
        in_specs=[pl.BlockSpec(memory_space=pltpu.MemorySpace.VMEM)] * 8,
        out_specs=pl.BlockSpec(memory_space=pltpu.MemorySpace.VMEM),
    )(x, kparams["wx"], kparams["w0"], kparams["w1"], kparams["w2"],
      kparams["bias"], kparams["wfc"], kparams["bfc"])


lstm_classifier_forward = jax.jit(lstm_classifier_forward_fn)


# --------------------------------------------------------------------------
# Parameter init (PyTorch layout, U(-1/sqrt(H), 1/sqrt(H))) + one-time packing
# into the block-padded operands the kernel consumes.
# --------------------------------------------------------------------------
def init_params(key, input_size, hidden_size, num_layers, num_classes):
    k = 1.0 / (hidden_size ** 0.5)
    layers = []
    for layer in range(num_layers):
        d_in = input_size if layer == 0 else hidden_size
        key, k1, k2, k3, k4 = jax.random.split(key, 5)
        layers.append({
            "w_ih": jax.random.uniform(k1, (4 * hidden_size, d_in), jnp.float32, -k, k),
            "w_hh": jax.random.uniform(k2, (4 * hidden_size, hidden_size), jnp.float32, -k, k),
            "b_ih": jax.random.uniform(k3, (4 * hidden_size,), jnp.float32, -k, k),
            "b_hh": jax.random.uniform(k4, (4 * hidden_size,), jnp.float32, -k, k),
        })
    key, k1, k2 = jax.random.split(key, 3)
    fc = {
        "w": jax.random.uniform(k1, (num_classes, hidden_size), jnp.float32, -k, k),
        "b": jax.random.uniform(k2, (num_classes,), jnp.float32, -k, k),
    }
    return {"layers": layers, "fc": fc}


def pack_params(raw, input_size, hidden_size):
    """Build the block-padded kernel operands once (off the per-call path)."""
    H = hidden_size
    D = input_size
    l0, l1, l2 = raw["layers"]
    zH = jnp.zeros((H, 4 * H), jnp.float32)
    wx = jnp.concatenate([l0["w_ih"].T, jnp.zeros((D, 8 * H), jnp.float32)], axis=1)
    w0 = jnp.concatenate([l0["w_hh"].T, l1["w_ih"].T, zH], axis=1)
    w1 = jnp.concatenate([zH, l1["w_hh"].T, l2["w_ih"].T], axis=1)
    w2 = jnp.concatenate([zH, zH, l2["w_hh"].T], axis=1)
    bias = jnp.concatenate([l0["b_ih"] + l0["b_hh"],
                            l1["b_ih"] + l1["b_hh"],
                            l2["b_ih"] + l2["b_hh"]]).reshape(1, 12 * H)
    return {
        "wx": wx, "w0": w0, "w1": w1, "w2": w2, "bias": bias,
        "wfc": raw["fc"]["w"].T,                    # (H, C)
        "bfc": raw["fc"]["b"].reshape(1, -1),       # (1, C)
    }


# --------------------------------------------------------------------------
# Pure-JAX reference (standard sequential stacked LSTM) for verification.
# --------------------------------------------------------------------------
def reference_forward(x, raw):
    B, T, _ = x.shape
    H = HIDDEN_SIZE
    seq = x
    for layer in raw["layers"]:
        b = layer["b_ih"] + layer["b_hh"]
        h = jnp.zeros((B, H), jnp.float32)
        c = jnp.zeros((B, H), jnp.float32)
        outs = []
        for t in range(T):
            gates = seq[:, t, :] @ layer["w_ih"].T + h @ layer["w_hh"].T + b
            i, f, g, o = jnp.split(gates, 4, axis=-1)
            i, f, o = jax.nn.sigmoid(i), jax.nn.sigmoid(f), jax.nn.sigmoid(o)
            g = jnp.tanh(g)
            c = f * c + i * g
            h = o * jnp.tanh(c)
            outs.append(h)
        seq = jnp.stack(outs, axis=1)
    return seq[:, -1, :] @ raw["fc"]["w"].T + raw["fc"]["b"]


if __name__ == "__main__":
    batch, seq_len, input_size = 2, 8, 16

    key = jax.random.PRNGKey(0)
    key, xkey, pkey = jax.random.split(key, 3)
    x = jax.random.normal(xkey, (batch, seq_len, input_size), jnp.float32)

    raw = init_params(pkey, input_size, HIDDEN_SIZE, NUM_LAYERS, NUM_CLASSES)
    kparams = pack_params(raw, input_size, HIDDEN_SIZE)

    out = lstm_classifier_forward(x, kparams)
    jax.block_until_ready(out)
    assert out.shape == (batch, NUM_CLASSES), out.shape

    ref = reference_forward(x, raw)
    assert jnp.allclose(out, ref, atol=2e-3, rtol=2e-3), (out, ref)
    print("KERNEL_OK")
</pallas_src>

<mosaic_0001>
module attributes {stable_mosaic.version = 11 : i64} {
  func.func @_wavefront_lstm_fc_kernel(%arg0: memref<2x8x16xf32, #tpu.memory_space<vmem>>, %arg1: memref<16x384xf32, #tpu.memory_space<vmem>>, %arg2: memref<32x384xf32, #tpu.memory_space<vmem>>, %arg3: memref<32x384xf32, #tpu.memory_space<vmem>>, %arg4: memref<32x384xf32, #tpu.memory_space<vmem>>, %arg5: memref<1x384xf32, #tpu.memory_space<vmem>>, %arg6: memref<32x2xf32, #tpu.memory_space<vmem>>, %arg7: memref<1x2xf32, #tpu.memory_space<vmem>>, %arg8: memref<2x2xf32, #tpu.memory_space<vmem>>) attributes {dimension_semantics = [], scalar_prefetch = 0 : i64, scratch_operands = 0 : i64, tpu.core_type = #tpu.core_type<tc>} {
    %c0 = arith.constant 0 : index
    %c0_0 = arith.constant 0 : index
    %0 = vector.load %arg1[%c0, %c0_0] : memref<16x384xf32, #tpu.memory_space<vmem>>, vector<16x384xf32>
    %c0_1 = arith.constant 0 : index
    %c0_2 = arith.constant 0 : index
    %1 = vector.load %arg2[%c0_1, %c0_2] : memref<32x384xf32, #tpu.memory_space<vmem>>, vector<32x384xf32>
    %c0_3 = arith.constant 0 : index
    %c0_4 = arith.constant 0 : index
    %2 = vector.load %arg3[%c0_3, %c0_4] : memref<32x384xf32, #tpu.memory_space<vmem>>, vector<32x384xf32>
    %c0_5 = arith.constant 0 : index
    %c0_6 = arith.constant 0 : index
    %3 = vector.load %arg4[%c0_5, %c0_6] : memref<32x384xf32, #tpu.memory_space<vmem>>, vector<32x384xf32>
    %c0_7 = arith.constant 0 : index
    %c0_8 = arith.constant 0 : index
    %4 = vector.load %arg5[%c0_7, %c0_8] : memref<1x384xf32, #tpu.memory_space<vmem>>, vector<1x384xf32>
    %5 = tpu.iota {dimensions = array<i32: 1>} : vector<2x384xi32>
    %c128_i32 = arith.constant 128 : i32
    %c0_i32 = arith.constant 0 : i32
    %6 = arith.cmpi eq, %c128_i32, %c0_i32 : i32
    %c1_i32 = arith.constant 1 : i32
    %7 = arith.select %6, %c1_i32, %c128_i32 : i32
    %8 = vector.broadcast %7 : i32 to vector<2x384xi32>
    %9 = arith.remsi %5, %8 : vector<2x384xi32>
    %c0_i32_9 = arith.constant 0 : i32
    %10 = vector.broadcast %c0_i32_9 : i32 to vector<2x384xi32>
    %11 = arith.cmpi ne, %9, %10 : vector<2x384xi32>
    %c0_i32_10 = arith.constant 0 : i32
    %12 = vector.broadcast %c0_i32_10 : i32 to vector<2x384xi32>
    %13 = arith.cmpi slt, %9, %12 : vector<2x384xi32>
    %c0_i32_11 = arith.constant 0 : i32
    %14 = arith.cmpi slt, %7, %c0_i32_11 : i32
    %15 = vector.broadcast %14 : i1 to vector<2x384xi1>
    %16 = vector.broadcast %15 : vector<2x384xi1> to vector<2x384xi1>
    %17 = arith.xori %13, %16 : vector<2x384xi1>
    %18 = arith.andi %17, %11 : vector<2x384xi1>
    %19 = vector.broadcast %7 : i32 to vector<2x384xi32>
    %20 = arith.addi %9, %19 : vector<2x384xi32>
    %21 = arith.select %18, %20, %9 : vector<2x384xi1>, vector<2x384xi32>
    %c64_i32 = arith.constant 64 : i32
    %22 = vector.broadcast %c64_i32 : i32 to vector<2x384xi32>
    %23 = arith.cmpi sge, %21, %22 : vector<2x384xi32>
    %c96_i32 = arith.constant 96 : i32
    %24 = vector.broadcast %c96_i32 : i32 to vector<2x384xi32>
    %25 = arith.cmpi slt, %21, %24 : vector<2x384xi32>
    %26 = arith.andi %23, %25 : vector<2x384xi1>
    %cst = arith.constant 1.000000e+00 : f32
    %cst_12 = arith.constant 5.000000e-01 : f32
    %27 = vector.broadcast %cst : f32 to vector<2x384xf32>
    %28 = vector.broadcast %cst_12 : f32 to vector<2x384xf32>
    %29 = arith.select %26, %27, %28 : vector<2x384xi1>, vector<2x384xf32>
    %cst_13 = arith.constant 0.000000e+00 : f32
    %30 = vector.broadcast %cst_13 : f32 to vector<2x32xf32>
    %c0_14 = arith.constant 0 : index
    %c0_15 = arith.constant 0 : index
    %c0_16 = arith.constant 0 : index
    %31 = vector.load %arg0[%c0_14, %c0_15, %c0_16] : memref<2x8x16xf32, #tpu.memory_space<vmem>>, vector<2x1x16xf32>
    %32 = vector.shape_cast %31 : vector<2x1x16xf32> to vector<2x16xf32>
    %cst_17 = arith.constant dense<0.000000e+00> : vector<2x384xf32>
    %33 = tpu.matmul %32, %0, %cst_17 {dimension_numbers = #tpu.dot_dimension_numbers<[1], [0], [0], [1], [0, 0, 1, 1], [], []>} : vector<2x16xf32>, vector<16x384xf32>, vector<2x384xf32> -> vector<2x384xf32>
    %cst_18 = arith.constant dense<0.000000e+00> : vector<2x384xf32>
    %34 = tpu.matmul %30, %1, %cst_18 {dimension_numbers = #tpu.dot_dimension_numbers<[1], [0], [0], [1], [0, 0, 1, 1], [], []>} : vector<2x32xf32>, vector<32x384xf32>, vector<2x384xf32> -> vector<2x384xf32>
    %35 = arith.addf %33, %34 : vector<2x384xf32>
    %cst_19 = arith.constant dense<0.000000e+00> : vector<2x384xf32>
    %36 = tpu.matmul %30, %2, %cst_19 {dimension_numbers = #tpu.dot_dimension_numbers<[1], [0], [0], [1], [0, 0, 1, 1], [], []>} : vector<2x32xf32>, vector<32x384xf32>, vector<2x384xf32> -> vector<2x384xf32>
    %37 = arith.addf %35, %36 : vector<2x384xf32>
    %cst_20 = arith.constant dense<0.000000e+00> : vector<2x384xf32>
    %38 = tpu.matmul %30, %3, %cst_20 {dimension_numbers = #tpu.dot_dimension_numbers<[1], [0], [0], [1], [0, 0, 1, 1], [], []>} : vector<2x32xf32>, vector<32x384xf32>, vector<2x384xf32> -> vector<2x384xf32>
    %39 = arith.addf %37, %38 : vector<2x384xf32>
    %40 = vector.broadcast %4 : vector<1x384xf32> to vector<2x384xf32>
    %41 = arith.addf %39, %40 : vector<2x384xf32>
    %42 = arith.mulf %41, %29 : vector<2x384xf32>
    %43 = math.tanh %42 : vector<2x384xf32>
    %cst_21 = arith.constant 5.000000e-01 : f32
    %44 = vector.broadcast %cst_21 : f32 to vector<2x384xf32>
    %45 = arith.mulf %44, %43 : vector<2x384xf32>
    %cst_22 = arith.constant 5.000000e-01 : f32
    %46 = vector.broadcast %cst_22 : f32 to vector<2x384xf32>
    %47 = arith.addf %45, %46 : vector<2x384xf32>
    %48 = arith.select %26, %43, %47 : vector<2x384xi1>, vector<2x384xf32>
    %49 = vector.extract_strided_slice %48 {offsets = [0, 0], sizes = [2, 128], strides = [1, 1]} : vector<2x384xf32> to vector<2x128xf32>
    %50 = vector.extract_strided_slice %49 {offsets = [0, 0], sizes = [2, 32], strides = [1, 1]} : vector<2x128xf32> to vector<2x32xf32>
    %51 = vector.extract_strided_slice %49 {offsets = [0, 32], sizes = [2, 32], strides = [1, 1]} : vector<2x128xf32> to vector<2x32xf32>
    %52 = vector.extract_strided_slice %49 {offsets = [0, 64], sizes = [2, 32], strides = [1, 1]} : vector<2x128xf32> to vector<2x32xf32>
    %53 = vector.extract_strided_slice %49 {offsets = [0, 96], sizes = [2, 32], strides = [1, 1]} : vector<2x128xf32> to vector<2x32xf32>
    %54 = arith.mulf %51, %30 : vector<2x32xf32>
    %55 = arith.mulf %50, %52 : vector<2x32xf32>
    %56 = arith.addf %54, %55 : vector<2x32xf32>
    %57 = math.tanh %56 : vector<2x32xf32>
    %58 = arith.mulf %53, %57 : vector<2x32xf32>
    %c0_23 = arith.constant 0 : index
    %c1 = arith.constant 1 : index
    %c0_24 = arith.constant 0 : index
    %59 = vector.load %arg0[%c0_23, %c1, %c0_24] : memref<2x8x16xf32, #tpu.memory_space<vmem>>, vector<2x1x16xf32>
    %60 = vector.shape_cast %59 : vector<2x1x16xf32> to vector<2x16xf32>
    %cst_25 = arith.constant dense<0.000000e+00> : vector<2x384xf32>
    %61 = tpu.matmul %60, %0, %cst_25 {dimension_numbers = #tpu.dot_dimension_numbers<[1], [0], [0], [1], [0, 0, 1, 1], [], []>} : vector<2x16xf32>, vector<16x384xf32>, vector<2x384xf32> -> vector<2x384xf32>
    %cst_26 = arith.constant dense<0.000000e+00> : vector<2x384xf32>
    %62 = tpu.matmul %58, %1, %cst_26 {dimension_numbers = #tpu.dot_dimension_numbers<[1], [0], [0], [1], [0, 0, 1, 1], [], []>} : vector<2x32xf32>, vector<32x384xf32>, vector<2x384xf32> -> vector<2x384xf32>
    %63 = arith.addf %61, %62 : vector<2x384xf32>
    %cst_27 = arith.constant dense<0.000000e+00> : vector<2x384xf32>
    %64 = tpu.matmul %30, %2, %cst_27 {dimension_numbers = #tpu.dot_dimension_numbers<[1], [0], [0], [1], [0, 0, 1, 1], [], []>} : vector<2x32xf32>, vector<32x384xf32>, vector<2x384xf32> -> vector<2x384xf32>
    %65 = arith.addf %63, %64 : vector<2x384xf32>
    %cst_28 = arith.constant dense<0.000000e+00> : vector<2x384xf32>
    %66 = tpu.matmul %30, %3, %cst_28 {dimension_numbers = #tpu.dot_dimension_numbers<[1], [0], [0], [1], [0, 0, 1, 1], [], []>} : vector<2x32xf32>, vector<32x384xf32>, vector<2x384xf32> -> vector<2x384xf32>
    %67 = arith.addf %65, %66 : vector<2x384xf32>
    %68 = vector.broadcast %4 : vector<1x384xf32> to vector<2x384xf32>
    %69 = arith.addf %67, %68 : vector<2x384xf32>
    %70 = arith.mulf %69, %29 : vector<2x384xf32>
    %71 = math.tanh %70 : vector<2x384xf32>
    %cst_29 = arith.constant 5.000000e-01 : f32
    %72 = vector.broadcast %cst_29 : f32 to vector<2x384xf32>
    %73 = arith.mulf %72, %71 : vector<2x384xf32>
    %cst_30 = arith.constant 5.000000e-01 : f32
    %74 = vector.broadcast %cst_30 : f32 to vector<2x384xf32>
    %75 = arith.addf %73, %74 : vector<2x384xf32>
    %76 = arith.select %26, %71, %75 : vector<2x384xi1>, vector<2x384xf32>
    %77 = vector.extract_strided_slice %76 {offsets = [0, 0], sizes = [2, 128], strides = [1, 1]} : vector<2x384xf32> to vector<2x128xf32>
    %78 = vector.extract_strided_slice %77 {offsets = [0, 0], sizes = [2, 32], strides = [1, 1]} : vector<2x128xf32> to vector<2x32xf32>
    %79 = vector.extract_strided_slice %77 {offsets = [0, 32], sizes = [2, 32], strides = [1, 1]} : vector<2x128xf32> to vector<2x32xf32>
    %80 = vector.extract_strided_slice %77 {offsets = [0, 64], sizes = [2, 32], strides = [1, 1]} : vector<2x128xf32> to vector<2x32xf32>
    %81 = vector.extract_strided_slice %77 {offsets = [0, 96], sizes = [2, 32], strides = [1, 1]} : vector<2x128xf32> to vector<2x32xf32>
    %82 = arith.mulf %79, %56 : vector<2x32xf32>
    %83 = arith.mulf %78, %80 : vector<2x32xf32>
    %84 = arith.addf %82, %83 : vector<2x32xf32>
    %85 = math.tanh %84 : vector<2x32xf32>
    %86 = arith.mulf %81, %85 : vector<2x32xf32>
    %87 = vector.extract_strided_slice %76 {offsets = [0, 128], sizes = [2, 128], strides = [1, 1]} : vector<2x384xf32> to vector<2x128xf32>
    %88 = vector.extract_strided_slice %87 {offsets = [0, 0], sizes = [2, 32], strides = [1, 1]} : vector<2x128xf32> to vector<2x32xf32>
    %89 = vector.extract_strided_slice %87 {offsets = [0, 32], sizes = [2, 32], strides = [1, 1]} : vector<2x128xf32> to vector<2x32xf32>
    %90 = vector.extract_strided_slice %87 {offsets = [0, 64], sizes = [2, 32], strides = [1, 1]} : vector<2x128xf32> to vector<2x32xf32>
    %91 = vector.extract_strided_slice %87 {offsets = [0, 96], sizes = [2, 32], strides = [1, 1]} : vector<2x128xf32> to vector<2x32xf32>
    %92 = arith.mulf %89, %30 : vector<2x32xf32>
    %93 = arith.mulf %88, %90 : vector<2x32xf32>
    %94 = arith.addf %92, %93 : vector<2x32xf32>
    %95 = math.tanh %94 : vector<2x32xf32>
    %96 = arith.mulf %91, %95 : vector<2x32xf32>
    %c0_31 = arith.constant 0 : index
    %c2 = arith.constant 2 : index
    %c0_32 = arith.constant 0 : index
    %97 = vector.load %arg0[%c0_31, %c2, %c0_32] : memref<2x8x16xf32, #tpu.memory_space<vmem>>, vector<2x1x16xf32>
    %98 = vector.shape_cast %97 : vector<2x1x16xf32> to vector<2x16xf32>
    %cst_33 = arith.constant dense<0.000000e+00> : vector<2x384xf32>
    %99 = tpu.matmul %98, %0, %cst_33 {dimension_numbers = #tpu.dot_dimension_numbers<[1], [0], [0], [1], [0, 0, 1, 1], [], []>} : vector<2x16xf32>, vector<16x384xf32>, vector<2x384xf32> -> vector<2x384xf32>
    %cst_34 = arith.constant dense<0.000000e+00> : vector<2x384xf32>
    %100 = tpu.matmul %86, %1, %cst_34 {dimension_numbers = #tpu.dot_dimension_numbers<[1], [0], [0], [1], [0, 0, 1, 1], [], []>} : vector<2x32xf32>, vector<32x384xf32>, vector<2x384xf32> -> vector<2x384xf32>
    %101 = arith.addf %99, %100 : vector<2x384xf32>
    %cst_35 = arith.constant dense<0.000000e+00> : vector<2x384xf32>
    %102 = tpu.matmul %96, %2, %cst_35 {dimension_numbers = #tpu.dot_dimension_numbers<[1], [0], [0], [1], [0, 0, 1, 1], [], []>} : vector<2x32xf32>, vector<32x384xf32>, vector<2x384xf32> -> vector<2x384xf32>
    %103 = arith.addf %101, %102 : vector<2x384xf32>
    %cst_36 = arith.constant dense<0.000000e+00> : vector<2x384xf32>
    %104 = tpu.matmul %30, %3, %cst_36 {dimension_numbers = #tpu.dot_dimension_numbers<[1], [0], [0], [1], [0, 0, 1, 1], [], []>} : vector<2x32xf32>, vector<32x384xf32>, vector<2x384xf32> -> vector<2x384xf32>
    %105 = arith.addf %103, %104 : vector<2x384xf32>
    %106 = vector.broadcast %4 : vector<1x384xf32> to vector<2x384xf32>
    %107 = arith.addf %105, %106 : vector<2x384xf32>
    %108 = arith.mulf %107, %29 : vector<2x384xf32>
    %109 = math.tanh %108 : vector<2x384xf32>
    %cst_37 = arith.constant 5.000000e-01 : f32
    %110 = vector.broadcast %cst_37 : f32 to vector<2x384xf32>
    %111 = arith.mulf %110, %109 : vector<2x384xf32>
    %cst_38 = arith.constant 5.000000e-01 : f32
    %112 = vector.broadcast %cst_38 : f32 to vector<2x384xf32>
    %113 = arith.addf %111, %112 : vector<2x384xf32>
    %114 = arith.select %26, %109, %113 : vector<2x384xi1>, vector<2x384xf32>
    %115 = vector.extract_strided_slice %114 {offsets = [0, 0], sizes = [2, 128], strides = [1, 1]} : vector<2x384xf32> to vector<2x128xf32>
    %116 = vector.extract_strided_slice %115 {offsets = [0, 0], sizes = [2, 32], strides = [1, 1]} : vector<2x128xf32> to vector<2x32xf32>
    %117 = vector.extract_strided_slice %115 {offsets = [0, 32], sizes = [2, 32], strides = [1, 1]} : vector<2x128xf32> to vector<2x32xf32>
    %118 = vector.extract_strided_slice %115 {offsets = [0, 64], sizes = [2, 32], strides = [1, 1]} : vector<2x128xf32> to vector<2x32xf32>
    %119 = vector.extract_strided_slice %115 {offsets = [0, 96], sizes = [2, 32], strides = [1, 1]} : vector<2x128xf32> to vector<2x32xf32>
    %120 = arith.mulf %117, %84 : vector<2x32xf32>
    %121 = arith.mulf %116, %118 : vector<2x32xf32>
    %122 = arith.addf %120, %121 : vector<2x32xf32>
    %123 = math.tanh %122 : vector<2x32xf32>
    %124 = arith.mulf %119, %123 : vector<2x32xf32>
    %125 = vector.extract_strided_slice %114 {offsets = [0, 128], sizes = [2, 128], strides = [1, 1]} : vector<2x384xf32> to vector<2x128xf32>
    %126 = vector.extract_strided_slice %125 {offsets = [0, 0], sizes = [2, 32], strides = [1, 1]} : vector<2x128xf32> to vector<2x32xf32>
    %127 = vector.extract_strided_slice %125 {offsets = [0, 32], sizes = [2, 32], strides = [1, 1]} : vector<2x128xf32> to vector<2x32xf32>
    %128 = vector.extract_strided_slice %125 {offsets = [0, 64], sizes = [2, 32], strides = [1, 1]} : vector<2x128xf32> to vector<2x32xf32>
    %129 = vector.extract_strided_slice %125 {offsets = [0, 96], sizes = [2, 32], strides = [1, 1]} : vector<2x128xf32> to vector<2x32xf32>
    %130 = arith.mulf %127, %94 : vector<2x32xf32>
    %131 = arith.mulf %126, %128 : vector<2x32xf32>
    %132 = arith.addf %130, %131 : vector<2x32xf32>
    %133 = math.tanh %132 : vector<2x32xf32>
    %134 = arith.mulf %129, %133 : vector<2x32xf32>
    %135 = vector.extract_strided_slice %114 {offsets = [0, 256], sizes = [2, 128], strides = [1, 1]} : vector<2x384xf32> to vector<2x128xf32>
    %136 = vector.extract_strided_slice %135 {offsets = [0, 0], sizes = [2, 32], strides = [1, 1]} : vector<2x128xf32> to vector<2x32xf32>
    %137 = vector.extract_strided_slice %135 {offsets = [0, 32], sizes = [2, 32], strides = [1, 1]} : vector<2x128xf32> to vector<2x32xf32>
    %138 = vector.extract_strided_slice %135 {offsets = [0, 64], sizes = [2, 32], strides = [1, 1]} : vector<2x128xf32> to vector<2x32xf32>
    %139 = vector.extract_strided_slice %135 {offsets = [0, 96], sizes = [2, 32], strides = [1, 1]} : vector<2x128xf32> to vector<2x32xf32>
    %140 = arith.mulf %137, %30 : vector<2x32xf32>
    %141 = arith.mulf %136, %138 : vector<2x32xf32>
    %142 = arith.addf %140, %141 : vector<2x32xf32>
    %143 = math.tanh %142 : vector<2x32xf32>
    %144 = arith.mulf %139, %143 : vector<2x32xf32>
    %c0_39 = arith.constant 0 : index
    %c3 = arith.constant 3 : index
    %c0_40 = arith.constant 0 : index
    %145 = vector.load %arg0[%c0_39, %c3, %c0_40] : memref<2x8x16xf32, #tpu.memory_space<vmem>>, vector<2x1x16xf32>
    %146 = vector.shape_cast %145 : vector<2x1x16xf32> to vector<2x16xf32>
    %cst_41 = arith.constant dense<0.000000e+00> : vector<2x384xf32>
    %147 = tpu.matmul %146, %0, %cst_41 {dimension_numbers = #tpu.dot_dimension_numbers<[1], [0], [0], [1], [0, 0, 1, 1], [], []>} : vector<2x16xf32>, vector<16x384xf32>, vector<2x384xf32> -> vector<2x384xf32>
    %cst_42 = arith.constant dense<0.000000e+00> : vector<2x384xf32>
    %148 = tpu.matmul %124, %1, %cst_42 {dimension_numbers = #tpu.dot_dimension_numbers<[1], [0], [0], [1], [0, 0, 1, 1], [], []>} : vector<2x32xf32>, vector<32x384xf32>, vector<2x384xf32> -> vector<2x384xf32>
    %149 = arith.addf %147, %148 : vector<2x384xf32>
    %cst_43 = arith.constant dense<0.000000e+00> : vector<2x384xf32>
    %150 = tpu.matmul %134, %2, %cst_43 {dimension_numbers = #tpu.dot_dimension_numbers<[1], [0], [0], [1], [0, 0, 1, 1], [], []>} : vector<2x32xf32>, vector<32x384xf32>, vector<2x384xf32> -> vector<2x384xf32>
    %151 = arith.addf %149, %150 : vector<2x384xf32>
    %cst_44 = arith.constant dense<0.000000e+00> : vector<2x384xf32>
    %152 = tpu.matmul %144, %3, %cst_44 {dimension_numbers = #tpu.dot_dimension_numbers<[1], [0], [0], [1], [0, 0, 1, 1], [], []>} : vector<2x32xf32>, vector<32x384xf32>, vector<2x384xf32> -> vector<2x384xf32>
    %153 = arith.addf %151, %152 : vector<2x384xf32>
    %154 = vector.broadcast %4 : vector<1x384xf32> to vector<2x384xf32>
    %155 = arith.addf %153, %154 : vector<2x384xf32>
    %156 = arith.mulf %155, %29 : vector<2x384xf32>
    %157 = math.tanh %156 : vector<2x384xf32>
    %cst_45 = arith.constant 5.000000e-01 : f32
    %158 = vector.broadcast %cst_45 : f32 to vector<2x384xf32>
    %159 = arith.mulf %158, %157 : vector<2x384xf32>
    %cst_46 = arith.constant 5.000000e-01 : f32
    %160 = vector.broadcast %cst_46 : f32 to vector<2x384xf32>
    %161 = arith.addf %159, %160 : vector<2x384xf32>
    %162 = arith.select %26, %157, %161 : vector<2x384xi1>, vector<2x384xf32>
    %163 = vector.extract_strided_slice %162 {offsets = [0, 0], sizes = [2, 128], strides = [1, 1]} : vector<2x384xf32> to vector<2x128xf32>
    %164 = vector.extract_strided_slice %163 {offsets = [0, 0], sizes = [2, 32], strides = [1, 1]} : vector<2x128xf32> to vector<2x32xf32>
    %165 = vector.extract_strided_slice %163 {offsets = [0, 32], sizes = [2, 32], strides = [1, 1]} : vector<2x128xf32> to vector<2x32xf32>
    %166 = vector.extract_strided_slice %163 {offsets = [0, 64], sizes = [2, 32], strides = [1, 1]} : vector<2x128xf32> to vector<2x32xf32>
    %167 = vector.extract_strided_slice %163 {offsets = [0, 96], sizes = [2, 32], strides = [1, 1]} : vector<2x128xf32> to vector<2x32xf32>
    %168 = arith.mulf %165, %122 : vector<2x32xf32>
    %169 = arith.mulf %164, %166 : vector<2x32xf32>
    %170 = arith.addf %168, %169 : vector<2x32xf32>
    %171 = math.tanh %170 : vector<2x32xf32>
    %172 = arith.mulf %167, %171 : vector<2x32xf32>
    %173 = vector.extract_strided_slice %162 {offsets = [0, 128], sizes = [2, 128], strides = [1, 1]} : vector<2x384xf32> to vector<2x128xf32>
    %174 = vector.extract_strided_slice %173 {offsets = [0, 0], sizes = [2, 32], strides = [1, 1]} : vector<2x128xf32> to vector<2x32xf32>
    %175 = vector.extract_strided_slice %173 {offsets = [0, 32], sizes = [2, 32], strides = [1, 1]} : vector<2x128xf32> to vector<2x32xf32>
    %176 = vector.extract_strided_slice %173 {offsets = [0, 64], sizes = [2, 32], strides = [1, 1]} : vector<2x128xf32> to vector<2x32xf32>
    %177 = vector.extract_strided_slice %173 {offsets = [0, 96], sizes = [2, 32], strides = [1, 1]} : vector<2x128xf32> to vector<2x32xf32>
    %178 = arith.mulf %175, %132 : vector<2x32xf32>
    %179 = arith.mulf %174, %176 : vector<2x32xf32>
    %180 = arith.addf %178, %179 : vector<2x32xf32>
    %181 = math.tanh %180 : vector<2x32xf32>
    %182 = arith.mulf %177, %181 : vector<2x32xf32>
    %183 = vector.extract_strided_slice %162 {offsets = [0, 256], sizes = [2, 128], strides = [1, 1]} : vector<2x384xf32> to vector<2x128xf32>
    %184 = vector.extract_strided_slice %183 {offsets = [0, 0], sizes = [2, 32], strides = [1, 1]} : vector<2x128xf32> to vector<2x32xf32>
    %185 = vector.extract_strided_slice %183 {offsets = [0, 32], sizes = [2, 32], strides = [1, 1]} : vector<2x128xf32> to vector<2x32xf32>
    %186 = vector.extract_strided_slice %183 {offsets = [0, 64], sizes = [2, 32], strides = [1, 1]} : vector<2x128xf32> to vector<2x32xf32>
    %187 = vector.extract_strided_slice %183 {offsets = [0, 96], sizes = [2, 32], strides = [1, 1]} : vector<2x128xf32> to vector<2x32xf32>
    %188 = arith.mulf %185, %142 : vector<2x32xf32>
    %189 = arith.mulf %184, %186 : vector<2x32xf32>
    %190 = arith.addf %188, %189 : vector<2x32xf32>
    %191 = math.tanh %190 : vector<2x32xf32>
    %192 = arith.mulf %187, %191 : vector<2x32xf32>
    %c0_47 = arith.constant 0 : index
    %c4 = arith.constant 4 : index
    %c0_48 = arith.constant 0 : index
    %193 = vector.load %arg0[%c0_47, %c4, %c0_48] : memref<2x8x16xf32, #tpu.memory_space<vmem>>, vector<2x1x16xf32>
    %194 = vector.shape_cast %193 : vector<2x1x16xf32> to vector<2x16xf32>
    %cst_49 = arith.constant dense<0.000000e+00> : vector<2x384xf32>
    %195 = tpu.matmul %194, %0, %cst_49 {dimension_numbers = #tpu.dot_dimension_numbers<[1], [0], [0], [1], [0, 0, 1, 1], [], []>} : vector<2x16xf32>, vector<16x384xf32>, vector<2x384xf32> -> vector<2x384xf32>
    %cst_50 = arith.constant dense<0.000000e+00> : vector<2x384xf32>
    %196 = tpu.matmul %172, %1, %cst_50 {dimension_numbers = #tpu.dot_dimension_numbers<[1], [0], [0], [1], [0, 0, 1, 1], [], []>} : vector<2x32xf32>, vector<32x384xf32>, vector<2x384xf32> -> vector<2x384xf32>
    %197 = arith.addf %195, %196 : vector<2x384xf32>
    %cst_51 = arith.constant dense<0.000000e+00> : vector<2x384xf32>
    %198 = tpu.matmul %182, %2, %cst_51 {dimension_numbers = #tpu.dot_dimension_numbers<[1], [0], [0], [1], [0, 0, 1, 1], [], []>} : vector<2x32xf32>, vector<32x384xf32>, vector<2x384xf32> -> vector<2x384xf32>
    %199 = arith.addf %197, %198 : vector<2x384xf32>
    %cst_52 = arith.constant dense<0.000000e+00> : vector<2x384xf32>
    %200 = tpu.matmul %192, %3, %cst_52 {dimension_numbers = #tpu.dot_dimension_numbers<[1], [0], [0], [1], [0, 0, 1, 1], [], []>} : vector<2x32xf32>, vector<32x384xf32>, vector<2x384xf32> -> vector<2x384xf32>
    %201 = arith.addf %199, %200 : vector<2x384xf32>
    %202 = vector.broadcast %4 : vector<1x384xf32> to vector<2x384xf32>
    %203 = arith.addf %201, %202 : vector<2x384xf32>
    %204 = arith.mulf %203, %29 : vector<2x384xf32>
    %205 = math.tanh %204 : vector<2x384xf32>
    %cst_53 = arith.constant 5.000000e-01 : f32
    %206 = vector.broadcast %cst_53 : f32 to vector<2x384xf32>
    %207 = arith.mulf %206, %205 : vector<2x384xf32>
    %cst_54 = arith.constant 5.000000e-01 : f32
    %208 = vector.broadcast %cst_54 : f32 to vector<2x384xf32>
    %209 = arith.addf %207, %208 : vector<2x384xf32>
    %210 = arith.select %26, %205, %209 : vector<2x384xi1>, vector<2x384xf32>
    %211 = vector.extract_strided_slice %210 {offsets = [0, 0], sizes = [2, 128], strides = [1, 1]} : vector<2x384xf32> to vector<2x128xf32>
    %212 = vector.extract_strided_slice %211 {offsets = [0, 0], sizes = [2, 32], strides = [1, 1]} : vector<2x128xf32> to vector<2x32xf32>
    %213 = vector.extract_strided_slice %211 {offsets = [0, 32], sizes = [2, 32], strides = [1, 1]} : vector<2x128xf32> to vector<2x32xf32>
    %214 = vector.extract_strided_slice %211 {offsets = [0, 64], sizes = [2, 32], strides = [1, 1]} : vector<2x128xf32> to vector<2x32xf32>
    %215 = vector.extract_strided_slice %211 {offsets = [0, 96], sizes = [2, 32], strides = [1, 1]} : vector<2x128xf32> to vector<2x32xf32>
    %216 = arith.mulf %213, %170 : vector<2x32xf32>
    %217 = arith.mulf %212, %214 : vector<2x32xf32>
    %218 = arith.addf %216, %217 : vector<2x32xf32>
    %219 = math.tanh %218 : vector<2x32xf32>
    %220 = arith.mulf %215, %219 : vector<2x32xf32>
    %221 = vector.extract_strided_slice %210 {offsets = [0, 128], sizes = [2, 128], strides = [1, 1]} : vector<2x384xf32> to vector<2x128xf32>
    %222 = vector.extract_strided_slice %221 {offsets = [0, 0], sizes = [2, 32], strides = [1, 1]} : vector<2x128xf32> to vector<2x32xf32>
    %223 = vector.extract_strided_slice %221 {offsets = [0, 32], sizes = [2, 32], strides = [1, 1]} : vector<2x128xf32> to vector<2x32xf32>
    %224 = vector.extract_strided_slice %221 {offsets = [0, 64], sizes = [2, 32], strides = [1, 1]} : vector<2x128xf32> to vector<2x32xf32>
    %225 = vector.extract_strided_slice %221 {offsets = [0, 96], sizes = [2, 32], strides = [1, 1]} : vector<2x128xf32> to vector<2x32xf32>
    %226 = arith.mulf %223, %180 : vector<2x32xf32>
    %227 = arith.mulf %222, %224 : vector<2x32xf32>
    %228 = arith.addf %226, %227 : vector<2x32xf32>
    %229 = math.tanh %228 : vector<2x32xf32>
    %230 = arith.mulf %225, %229 : vector<2x32xf32>
    %231 = vector.extract_strided_slice %210 {offsets = [0, 256], sizes = [2, 128], strides = [1, 1]} : vector<2x384xf32> to vector<2x128xf32>
    %232 = vector.extract_strided_slice %231 {offsets = [0, 0], sizes = [2, 32], strides = [1, 1]} : vector<2x128xf32> to vector<2x32xf32>
    %233 = vector.extract_strided_slice %231 {offsets = [0, 32], sizes = [2, 32], strides = [1, 1]} : vector<2x128xf32> to vector<2x32xf32>
    %234 = vector.extract_strided_slice %231 {offsets = [0, 64], sizes = [2, 32], strides = [1, 1]} : vector<2x128xf32> to vector<2x32xf32>
    %235 = vector.extract_strided_slice %231 {offsets = [0, 96], sizes = [2, 32], strides = [1, 1]} : vector<2x128xf32> to vector<2x32xf32>
    %236 = arith.mulf %233, %190 : vector<2x32xf32>
    %237 = arith.mulf %232, %234 : vector<2x32xf32>
    %238 = arith.addf %236, %237 : vector<2x32xf32>
    %239 = math.tanh %238 : vector<2x32xf32>
    %240 = arith.mulf %235, %239 : vector<2x32xf32>
    %c0_55 = arith.constant 0 : index
    %c5 = arith.constant 5 : index
    %c0_56 = arith.constant 0 : index
    %241 = vector.load %arg0[%c0_55, %c5, %c0_56] : memref<2x8x16xf32, #tpu.memory_space<vmem>>, vector<2x1x16xf32>
    %242 = vector.shape_cast %241 : vector<2x1x16xf32> to vector<2x16xf32>
    %cst_57 = arith.constant dense<0.000000e+00> : vector<2x384xf32>
    %243 = tpu.matmul %242, %0, %cst_57 {dimension_numbers = #tpu.dot_dimension_numbers<[1], [0], [0], [1], [0, 0, 1, 1], [], []>} : vector<2x16xf32>, vector<16x384xf32>, vector<2x384xf32> -> vector<2x384xf32>
    %cst_58 = arith.constant dense<0.000000e+00> : vector<2x384xf32>
    %244 = tpu.matmul %220, %1, %cst_58 {dimension_numbers = #tpu.dot_dimension_numbers<[1], [0], [0], [1], [0, 0, 1, 1], [], []>} : vector<2x32xf32>, vector<32x384xf32>, vector<2x384xf32> -> vector<2x384xf32>
    %245 = arith.addf %243, %244 : vector<2x384xf32>
    %cst_59 = arith.constant dense<0.000000e+00> : vector<2x384xf32>
    %246 = tpu.matmul %230, %2, %cst_59 {dimension_numbers = #tpu.dot_dimension_numbers<[1], [0], [0], [1], [0, 0, 1, 1], [], []>} : vector<2x32xf32>, vector<32x384xf32>, vector<2x384xf32> -> vector<2x384xf32>
    %247 = arith.addf %245, %246 : vector<2x384xf32>
    %cst_60 = arith.constant dense<0.000000e+00> : vector<2x384xf32>
    %248 = tpu.matmul %240, %3, %cst_60 {dimension_numbers = #tpu.dot_dimension_numbers<[1], [0], [0], [1], [0, 0, 1, 1], [], []>} : vector<2x32xf32>, vector<32x384xf32>, vector<2x384xf32> -> vector<2x384xf32>
    %249 = arith.addf %247, %248 : vector<2x384xf32>
    %250 = vector.broadcast %4 : vector<1x384xf32> to vector<2x384xf32>
    %251 = arith.addf %249, %250 : vector<2x384xf32>
    %252 = arith.mulf %251, %29 : vector<2x384xf32>
    %253 = math.tanh %252 : vector<2x384xf32>
    %cst_61 = arith.constant 5.000000e-01 : f32
    %254 = vector.broadcast %cst_61 : f32 to vector<2x384xf32>
    %255 = arith.mulf %254, %253 : vector<2x384xf32>
    %cst_62 = arith.constant 5.000000e-01 : f32
    %256 = vector.broadcast %cst_62 : f32 to vector<2x384xf32>
    %257 = arith.addf %255, %256 : vector<2x384xf32>
    %258 = arith.select %26, %253, %257 : vector<2x384xi1>, vector<2x384xf32>
    %259 = vector.extract_strided_slice %258 {offsets = [0, 0], sizes = [2, 128], strides = [1, 1]} : vector<2x384xf32> to vector<2x128xf32>
    %260 = vector.extract_strided_slice %259 {offsets = [0, 0], sizes = [2, 32], strides = [1, 1]} : vector<2x128xf32> to vector<2x32xf32>
    %261 = vector.extract_strided_slice %259 {offsets = [0, 32], sizes = [2, 32], strides = [1, 1]} : vector<2x128xf32> to vector<2x32xf32>
    %262 = vector.extract_strided_slice %259 {offsets = [0, 64], sizes = [2, 32], strides = [1, 1]} : vector<2x128xf32> to vector<2x32xf32>
    %263 = vector.extract_strided_slice %259 {offsets = [0, 96], sizes = [2, 32], strides = [1, 1]} : vector<2x128xf32> to vector<2x32xf32>
    %264 = arith.mulf %261, %218 : vector<2x32xf32>
    %265 = arith.mulf %260, %262 : vector<2x32xf32>
    %266 = arith.addf %264, %265 : vector<2x32xf32>
    %267 = math.tanh %266 : vector<2x32xf32>
    %268 = arith.mulf %263, %267 : vector<2x32xf32>
    %269 = vector.extract_strided_slice %258 {offsets = [0, 128], sizes = [2, 128], strides = [1, 1]} : vector<2x384xf32> to vector<2x128xf32>
    %270 = vector.extract_strided_slice %269 {offsets = [0, 0], sizes = [2, 32], strides = [1, 1]} : vector<2x128xf32> to vector<2x32xf32>
    %271 = vector.extract_strided_slice %269 {offsets = [0, 32], sizes = [2, 32], strides = [1, 1]} : vector<2x128xf32> to vector<2x32xf32>
    %272 = vector.extract_strided_slice %269 {offsets = [0, 64], sizes = [2, 32], strides = [1, 1]} : vector<2x128xf32> to vector<2x32xf32>
    %273 = vector.extract_strided_slice %269 {offsets = [0, 96], sizes = [2, 32], strides = [1, 1]} : vector<2x128xf32> to vector<2x32xf32>
    %274 = arith.mulf %271, %228 : vector<2x32xf32>
    %275 = arith.mulf %270, %272 : vector<2x32xf32>
    %276 = arith.addf %274, %275 : vector<2x32xf32>
    %277 = math.tanh %276 : vector<2x32xf32>
    %278 = arith.mulf %273, %277 : vector<2x32xf32>
    %279 = vector.extract_strided_slice %258 {offsets = [0, 256], sizes = [2, 128], strides = [1, 1]} : vector<2x384xf32> to vector<2x128xf32>
    %280 = vector.extract_strided_slice %279 {offsets = [0, 0], sizes = [2, 32], strides = [1, 1]} : vector<2x128xf32> to vector<2x32xf32>
    %281 = vector.extract_strided_slice %279 {offsets = [0, 32], sizes = [2, 32], strides = [1, 1]} : vector<2x128xf32> to vector<2x32xf32>
    %282 = vector.extract_strided_slice %279 {offsets = [0, 64], sizes = [2, 32], strides = [1, 1]} : vector<2x128xf32> to vector<2x32xf32>
    %283 = vector.extract_strided_slice %279 {offsets = [0, 96], sizes = [2, 32], strides = [1, 1]} : vector<2x128xf32> to vector<2x32xf32>
    %284 = arith.mulf %281, %238 : vector<2x32xf32>
    %285 = arith.mulf %280, %282 : vector<2x32xf32>
    %286 = arith.addf %284, %285 : vector<2x32xf32>
    %287 = math.tanh %286 : vector<2x32xf32>
    %288 = arith.mulf %283, %287 : vector<2x32xf32>
    %c0_63 = arith.constant 0 : index
    %c6 = arith.constant 6 : index
    %c0_64 = arith.constant 0 : index
    %289 = vector.load %arg0[%c0_63, %c6, %c0_64] : memref<2x8x16xf32, #tpu.memory_space<vmem>>, vector<2x1x16xf32>
    %290 = vector.shape_cast %289 : vector<2x1x16xf32> to vector<2x16xf32>
    %cst_65 = arith.constant dense<0.000000e+00> : vector<2x384xf32>
    %291 = tpu.matmul %290, %0, %cst_65 {dimension_numbers = #tpu.dot_dimension_numbers<[1], [0], [0], [1], [0, 0, 1, 1], [], []>} : vector<2x16xf32>, vector<16x384xf32>, vector<2x384xf32> -> vector<2x384xf32>
    %cst_66 = arith.constant dense<0.000000e+00> : vector<2x384xf32>
    %292 = tpu.matmul %268, %1, %cst_66 {dimension_numbers = #tpu.dot_dimension_numbers<[1], [0], [0], [1], [0, 0, 1, 1], [], []>} : vector<2x32xf32>, vector<32x384xf32>, vector<2x384xf32> -> vector<2x384xf32>
    %293 = arith.addf %291, %292 : vector<2x384xf32>
    %cst_67 = arith.constant dense<0.000000e+00> : vector<2x384xf32>
    %294 = tpu.matmul %278, %2, %cst_67 {dimension_numbers = #tpu.dot_dimension_numbers<[1], [0], [0], [1], [0, 0, 1, 1], [], []>} : vector<2x32xf32>, vector<32x384xf32>, vector<2x384xf32> -> vector<2x384xf32>
    %295 = arith.addf %293, %294 : vector<2x384xf32>
    %cst_68 = arith.constant dense<0.000000e+00> : vector<2x384xf32>
    %296 = tpu.matmul %288, %3, %cst_68 {dimension_numbers = #tpu.dot_dimension_numbers<[1], [0], [0], [1], [0, 0, 1, 1], [], []>} : vector<2x32xf32>, vector<32x384xf32>, vector<2x384xf32> -> vector<2x384xf32>
    %297 = arith.addf %295, %296 : vector<2x384xf32>
    %298 = vector.broadcast %4 : vector<1x384xf32> to vector<2x384xf32>
    %299 = arith.addf %297, %298 : vector<2x384xf32>
    %300 = arith.mulf %299, %29 : vector<2x384xf32>
    %301 = math.tanh %300 : vector<2x384xf32>
    %cst_69 = arith.constant 5.000000e-01 : f32
    %302 = vector.broadcast %cst_69 : f32 to vector<2x384xf32>
    %303 = arith.mulf %302, %301 : vector<2x384xf32>
    %cst_70 = arith.constant 5.000000e-01 : f32
    %304 = vector.broadcast %cst_70 : f32 to vector<2x384xf32>
    %305 = arith.addf %303, %304 : vector<2x384xf32>
    %306 = arith.select %26, %301, %305 : vector<2x384xi1>, vector<2x384xf32>
    %307 = vector.extract_strided_slice %306 {offsets = [0, 0], sizes = [2, 128], strides = [1, 1]} : vector<2x384xf32> to vector<2x128xf32>
    %308 = vector.extract_strided_slice %307 {offsets = [0, 0], sizes = [2, 32], strides = [1, 1]} : vector<2x128xf32> to vector<2x32xf32>
    %309 = vector.extract_strided_slice %307 {offsets = [0, 32], sizes = [2, 32], strides = [1, 1]} : vector<2x128xf32> to vector<2x32xf32>
    %310 = vector.extract_strided_slice %307 {offsets = [0, 64], sizes = [2, 32], strides = [1, 1]} : vector<2x128xf32> to vector<2x32xf32>
    %311 = vector.extract_strided_slice %307 {offsets = [0, 96], sizes = [2, 32], strides = [1, 1]} : vector<2x128xf32> to vector<2x32xf32>
    %312 = arith.mulf %309, %266 : vector<2x32xf32>
    %313 = arith.mulf %308, %310 : vector<2x32xf32>
    %314 = arith.addf %312, %313 : vector<2x32xf32>
    %315 = math.tanh %314 : vector<2x32xf32>
    %316 = arith.mulf %311, %315 : vector<2x32xf32>
    %317 = vector.extract_strided_slice %306 {offsets = [0, 128], sizes = [2, 128], strides = [1, 1]} : vector<2x384xf32> to vector<2x128xf32>
    %318 = vector.extract_strided_slice %317 {offsets = [0, 0], sizes = [2, 32], strides = [1, 1]} : vector<2x128xf32> to vector<2x32xf32>
    %319 = vector.extract_strided_slice %317 {offsets = [0, 32], sizes = [2, 32], strides = [1, 1]} : vector<2x128xf32> to vector<2x32xf32>
    %320 = vector.extract_strided_slice %317 {offsets = [0, 64], sizes = [2, 32], strides = [1, 1]} : vector<2x128xf32> to vector<2x32xf32>
    %321 = vector.extract_strided_slice %317 {offsets = [0, 96], sizes = [2, 32], strides = [1, 1]} : vector<2x128xf32> to vector<2x32xf32>
    %322 = arith.mulf %319, %276 : vector<2x32xf32>
    %323 = arith.mulf %318, %320 : vector<2x32xf32>
    %324 = arith.addf %322, %323 : vector<2x32xf32>
    %325 = math.tanh %324 : vector<2x32xf32>
    %326 = arith.mulf %321, %325 : vector<2x32xf32>
    %327 = vector.extract_strided_slice %306 {offsets = [0, 256], sizes = [2, 128], strides = [1, 1]} : vector<2x384xf32> to vector<2x128xf32>
    %328 = vector.extract_strided_slice %327 {offsets = [0, 0], sizes = [2, 32], strides = [1, 1]} : vector<2x128xf32> to vector<2x32xf32>
    %329 = vector.extract_strided_slice %327 {offsets = [0, 32], sizes = [2, 32], strides = [1, 1]} : vector<2x128xf32> to vector<2x32xf32>
    %330 = vector.extract_strided_slice %327 {offsets = [0, 64], sizes = [2, 32], strides = [1, 1]} : vector<2x128xf32> to vector<2x32xf32>
    %331 = vector.extract_strided_slice %327 {offsets = [0, 96], sizes = [2, 32], strides = [1, 1]} : vector<2x128xf32> to vector<2x32xf32>
    %332 = arith.mulf %329, %286 : vector<2x32xf32>
    %333 = arith.mulf %328, %330 : vector<2x32xf32>
    %334 = arith.addf %332, %333 : vector<2x32xf32>
    %335 = math.tanh %334 : vector<2x32xf32>
    %336 = arith.mulf %331, %335 : vector<2x32xf32>
    %c0_71 = arith.constant 0 : index
    %c7 = arith.constant 7 : index
    %c0_72 = arith.constant 0 : index
    %337 = vector.load %arg0[%c0_71, %c7, %c0_72] : memref<2x8x16xf32, #tpu.memory_space<vmem>>, vector<2x1x16xf32>
    %338 = vector.shape_cast %337 : vector<2x1x16xf32> to vector<2x16xf32>
    %cst_73 = arith.constant dense<0.000000e+00> : vector<2x384xf32>
    %339 = tpu.matmul %338, %0, %cst_73 {dimension_numbers = #tpu.dot_dimension_numbers<[1], [0], [0], [1], [0, 0, 1, 1], [], []>} : vector<2x16xf32>, vector<16x384xf32>, vector<2x384xf32> -> vector<2x384xf32>
    %cst_74 = arith.constant dense<0.000000e+00> : vector<2x384xf32>
    %340 = tpu.matmul %316, %1, %cst_74 {dimension_numbers = #tpu.dot_dimension_numbers<[1], [0], [0], [1], [0, 0, 1, 1], [], []>} : vector<2x32xf32>, vector<32x384xf32>, vector<2x384xf32> -> vector<2x384xf32>
    %341 = arith.addf %339, %340 : vector<2x384xf32>
    %cst_75 = arith.constant dense<0.000000e+00> : vector<2x384xf32>
    %342 = tpu.matmul %326, %2, %cst_75 {dimension_numbers = #tpu.dot_dimension_numbers<[1], [0], [0], [1], [0, 0, 1, 1], [], []>} : vector<2x32xf32>, vector<32x384xf32>, vector<2x384xf32> -> vector<2x384xf32>
    %343 = arith.addf %341, %342 : vector<2x384xf32>
    %cst_76 = arith.constant dense<0.000000e+00> : vector<2x384xf32>
    %344 = tpu.matmul %336, %3, %cst_76 {dimension_numbers = #tpu.dot_dimension_numbers<[1], [0], [0], [1], [0, 0, 1, 1], [], []>} : vector<2x32xf32>, vector<32x384xf32>, vector<2x384xf32> -> vector<2x384xf32>
    %345 = arith.addf %343, %344 : vector<2x384xf32>
    %346 = vector.broadcast %4 : vector<1x384xf32> to vector<2x384xf32>
    %347 = arith.addf %345, %346 : vector<2x384xf32>
    %348 = arith.mulf %347, %29 : vector<2x384xf32>
    %349 = math.tanh %348 : vector<2x384xf32>
    %cst_77 = arith.constant 5.000000e-01 : f32
    %350 = vector.broadcast %cst_77 : f32 to vector<2x384xf32>
    %351 = arith.mulf %350, %349 : vector<2x384xf32>
    %cst_78 = arith.constant 5.000000e-01 : f32
    %352 = vector.broadcast %cst_78 : f32 to vector<2x384xf32>
    %353 = arith.addf %351, %352 : vector<2x384xf32>
    %354 = arith.select %26, %349, %353 : vector<2x384xi1>, vector<2x384xf32>
    %355 = vector.extract_strided_slice %354 {offsets = [0, 0], sizes = [2, 128], strides = [1, 1]} : vector<2x384xf32> to vector<2x128xf32>
    %356 = vector.extract_strided_slice %355 {offsets = [0, 0], sizes = [2, 32], strides = [1, 1]} : vector<2x128xf32> to vector<2x32xf32>
    %357 = vector.extract_strided_slice %355 {offsets = [0, 32], sizes = [2, 32], strides = [1, 1]} : vector<2x128xf32> to vector<2x32xf32>
    %358 = vector.extract_strided_slice %355 {offsets = [0, 64], sizes = [2, 32], strides = [1, 1]} : vector<2x128xf32> to vector<2x32xf32>
    %359 = vector.extract_strided_slice %355 {offsets = [0, 96], sizes = [2, 32], strides = [1, 1]} : vector<2x128xf32> to vector<2x32xf32>
    %360 = arith.mulf %357, %314 : vector<2x32xf32>
    %361 = arith.mulf %356, %358 : vector<2x32xf32>
    %362 = arith.addf %360, %361 : vector<2x32xf32>
    %363 = math.tanh %362 : vector<2x32xf32>
    %364 = arith.mulf %359, %363 : vector<2x32xf32>
    %365 = vector.extract_strided_slice %354 {offsets = [0, 128], sizes = [2, 128], strides = [1, 1]} : vector<2x384xf32> to vector<2x128xf32>
    %366 = vector.extract_strided_slice %365 {offsets = [0, 0], sizes = [2, 32], strides = [1, 1]} : vector<2x128xf32> to vector<2x32xf32>
    %367 = vector.extract_strided_slice %365 {offsets = [0, 32], sizes = [2, 32], strides = [1, 1]} : vector<2x128xf32> to vector<2x32xf32>
    %368 = vector.extract_strided_slice %365 {offsets = [0, 64], sizes = [2, 32], strides = [1, 1]} : vector<2x128xf32> to vector<2x32xf32>
    %369 = vector.extract_strided_slice %365 {offsets = [0, 96], sizes = [2, 32], strides = [1, 1]} : vector<2x128xf32> to vector<2x32xf32>
    %370 = arith.mulf %367, %324 : vector<2x32xf32>
    %371 = arith.mulf %366, %368 : vector<2x32xf32>
    %372 = arith.addf %370, %371 : vector<2x32xf32>
    %373 = math.tanh %372 : vector<2x32xf32>
    %374 = arith.mulf %369, %373 : vector<2x32xf32>
    %375 = vector.extract_strided_slice %354 {offsets = [0, 256], sizes = [2, 128], strides = [1, 1]} : vector<2x384xf32> to vector<2x128xf32>
    %376 = vector.extract_strided_slice %375 {offsets = [0, 0], sizes = [2, 32], strides = [1, 1]} : vector<2x128xf32> to vector<2x32xf32>
    %377 = vector.extract_strided_slice %375 {offsets = [0, 32], sizes = [2, 32], strides = [1, 1]} : vector<2x128xf32> to vector<2x32xf32>
    %378 = vector.extract_strided_slice %375 {offsets = [0, 64], sizes = [2, 32], strides = [1, 1]} : vector<2x128xf32> to vector<2x32xf32>
    %379 = vector.extract_strided_slice %375 {offsets = [0, 96], sizes = [2, 32], strides = [1, 1]} : vector<2x128xf32> to vector<2x32xf32>
    %380 = arith.mulf %377, %334 : vector<2x32xf32>
    %381 = arith.mulf %376, %378 : vector<2x32xf32>
    %382 = arith.addf %380, %381 : vector<2x32xf32>
    %383 = math.tanh %382 : vector<2x32xf32>
    %384 = arith.mulf %379, %383 : vector<2x32xf32>
    %c0_79 = arith.constant 0 : index
    %c7_80 = arith.constant 7 : index
    %c0_81 = arith.constant 0 : index
    %385 = vector.load %arg0[%c0_79, %c7_80, %c0_81] : memref<2x8x16xf32, #tpu.memory_space<vmem>>, vector<2x1x16xf32>
    %386 = vector.shape_cast %385 : vector<2x1x16xf32> to vector<2x16xf32>
    %cst_82 = arith.constant dense<0.000000e+00> : vector<2x384xf32>
    %387 = tpu.matmul %386, %0, %cst_82 {dimension_numbers = #tpu.dot_dimension_numbers<[1], [0], [0], [1], [0, 0, 1, 1], [], []>} : vector<2x16xf32>, vector<16x384xf32>, vector<2x384xf32> -> vector<2x384xf32>
    %cst_83 = arith.constant dense<0.000000e+00> : vector<2x384xf32>
    %388 = tpu.matmul %364, %1, %cst_83 {dimension_numbers = #tpu.dot_dimension_numbers<[1], [0], [0], [1], [0, 0, 1, 1], [], []>} : vector<2x32xf32>, vector<32x384xf32>, vector<2x384xf32> -> vector<2x384xf32>
    %389 = arith.addf %387, %388 : vector<2x384xf32>
    %cst_84 = arith.constant dense<0.000000e+00> : vector<2x384xf32>
    %390 = tpu.matmul %374, %2, %cst_84 {dimension_numbers = #tpu.dot_dimension_numbers<[1], [0], [0], [1], [0, 0, 1, 1], [], []>} : vector<2x32xf32>, vector<32x384xf32>, vector<2x384xf32> -> vector<2x384xf32>
    %391 = arith.addf %389, %390 : vector<2x384xf32>
    %cst_85 = arith.constant dense<0.000000e+00> : vector<2x384xf32>
    %392 = tpu.matmul %384, %3, %cst_85 {dimension_numbers = #tpu.dot_dimension_numbers<[1], [0], [0], [1], [0, 0, 1, 1], [], []>} : vector<2x32xf32>, vector<32x384xf32>, vector<2x384xf32> -> vector<2x384xf32>
    %393 = arith.addf %391, %392 : vector<2x384xf32>
    %394 = vector.broadcast %4 : vector<1x384xf32> to vector<2x384xf32>
    %395 = arith.addf %393, %394 : vector<2x384xf32>
    %396 = arith.mulf %395, %29 : vector<2x384xf32>
    %397 = math.tanh %396 : vector<2x384xf32>
    %cst_86 = arith.constant 5.000000e-01 : f32
    %398 = vector.broadcast %cst_86 : f32 to vector<2x384xf32>
    %399 = arith.mulf %398, %397 : vector<2x384xf32>
    %cst_87 = arith.constant 5.000000e-01 : f32
    %400 = vector.broadcast %cst_87 : f32 to vector<2x384xf32>
    %401 = arith.addf %399, %400 : vector<2x384xf32>
    %402 = arith.select %26, %397, %401 : vector<2x384xi1>, vector<2x384xf32>
    %403 = vector.extract_strided_slice %402 {offsets = [0, 128], sizes = [2, 128], strides = [1, 1]} : vector<2x384xf32> to vector<2x128xf32>
    %404 = vector.extract_strided_slice %403 {offsets = [0, 0], sizes = [2, 32], strides = [1, 1]} : vector<2x128xf32> to vector<2x32xf32>
    %405 = vector.extract_strided_slice %403 {offsets = [0, 32], sizes = [2, 32], strides = [1, 1]} : vector<2x128xf32> to vector<2x32xf32>
    %406 = vector.extract_strided_slice %403 {offsets = [0, 64], sizes = [2, 32], strides = [1, 1]} : vector<2x128xf32> to vector<2x32xf32>
    %407 = vector.extract_strided_slice %403 {offsets = [0, 96], sizes = [2, 32], strides = [1, 1]} : vector<2x128xf32> to vector<2x32xf32>
    %408 = arith.mulf %405, %372 : vector<2x32xf32>
    %409 = arith.mulf %404, %406 : vector<2x32xf32>
    %410 = arith.addf %408, %409 : vector<2x32xf32>
    %411 = math.tanh %410 : vector<2x32xf32>
    %412 = arith.mulf %407, %411 : vector<2x32xf32>
    %413 = vector.extract_strided_slice %402 {offsets = [0, 256], sizes = [2, 128], strides = [1, 1]} : vector<2x384xf32> to vector<2x128xf32>
    %414 = vector.extract_strided_slice %413 {offsets = [0, 0], sizes = [2, 32], strides = [1, 1]} : vector<2x128xf32> to vector<2x32xf32>
    %415 = vector.extract_strided_slice %413 {offsets = [0, 32], sizes = [2, 32], strides = [1, 1]} : vector<2x128xf32> to vector<2x32xf32>
    %416 = vector.extract_strided_slice %413 {offsets = [0, 64], sizes = [2, 32], strides = [1, 1]} : vector<2x128xf32> to vector<2x32xf32>
    %417 = vector.extract_strided_slice %413 {offsets = [0, 96], sizes = [2, 32], strides = [1, 1]} : vector<2x128xf32> to vector<2x32xf32>
    %418 = arith.mulf %415, %382 : vector<2x32xf32>
    %419 = arith.mulf %414, %416 : vector<2x32xf32>
    %420 = arith.addf %418, %419 : vector<2x32xf32>
    %421 = math.tanh %420 : vector<2x32xf32>
    %422 = arith.mulf %417, %421 : vector<2x32xf32>
    %c0_88 = arith.constant 0 : index
    %c7_89 = arith.constant 7 : index
    %c0_90 = arith.constant 0 : index
    %423 = vector.load %arg0[%c0_88, %c7_89, %c0_90] : memref<2x8x16xf32, #tpu.memory_space<vmem>>, vector<2x1x16xf32>
    %424 = vector.shape_cast %423 : vector<2x1x16xf32> to vector<2x16xf32>
    %cst_91 = arith.constant dense<0.000000e+00> : vector<2x384xf32>
    %425 = tpu.matmul %424, %0, %cst_91 {dimension_numbers = #tpu.dot_dimension_numbers<[1], [0], [0], [1], [0, 0, 1, 1], [], []>} : vector<2x16xf32>, vector<16x384xf32>, vector<2x384xf32> -> vector<2x384xf32>
    %cst_92 = arith.constant dense<0.000000e+00> : vector<2x384xf32>
    %426 = tpu.matmul %364, %1, %cst_92 {dimension_numbers = #tpu.dot_dimension_numbers<[1], [0], [0], [1], [0, 0, 1, 1], [], []>} : vector<2x32xf32>, vector<32x384xf32>, vector<2x384xf32> -> vector<2x384xf32>
    %427 = arith.addf %425, %426 : vector<2x384xf32>
    %cst_93 = arith.constant dense<0.000000e+00> : vector<2x384xf32>
    %428 = tpu.matmul %412, %2, %cst_93 {dimension_numbers = #tpu.dot_dimension_numbers<[1], [0], [0], [1], [0, 0, 1, 1], [], []>} : vector<2x32xf32>, vector<32x384xf32>, vector<2x384xf32> -> vector<2x384xf32>
    %429 = arith.addf %427, %428 : vector<2x384xf32>
    %cst_94 = arith.constant dense<0.000000e+00> : vector<2x384xf32>
    %430 = tpu.matmul %422, %3, %cst_94 {dimension_numbers = #tpu.dot_dimension_numbers<[1], [0], [0], [1], [0, 0, 1, 1], [], []>} : vector<2x32xf32>, vector<32x384xf32>, vector<2x384xf32> -> vector<2x384xf32>
    %431 = arith.addf %429, %430 : vector<2x384xf32>
    %432 = vector.broadcast %4 : vector<1x384xf32> to vector<2x384xf32>
    %433 = arith.addf %431, %432 : vector<2x384xf32>
    %434 = arith.mulf %433, %29 : vector<2x384xf32>
    %435 = math.tanh %434 : vector<2x384xf32>
    %cst_95 = arith.constant 5.000000e-01 : f32
    %436 = vector.broadcast %cst_95 : f32 to vector<2x384xf32>
    %437 = arith.mulf %436, %435 : vector<2x384xf32>
    %cst_96 = arith.constant 5.000000e-01 : f32
    %438 = vector.broadcast %cst_96 : f32 to vector<2x384xf32>
    %439 = arith.addf %437, %438 : vector<2x384xf32>
    %440 = arith.select %26, %435, %439 : vector<2x384xi1>, vector<2x384xf32>
    %441 = vector.extract_strided_slice %440 {offsets = [0, 256], sizes = [2, 128], strides = [1, 1]} : vector<2x384xf32> to vector<2x128xf32>
    %442 = vector.extract_strided_slice %441 {offsets = [0, 0], sizes = [2, 32], strides = [1, 1]} : vector<2x128xf32> to vector<2x32xf32>
    %443 = vector.extract_strided_slice %441 {offsets = [0, 32], sizes = [2, 32], strides = [1, 1]} : vector<2x128xf32> to vector<2x32xf32>
    %444 = vector.extract_strided_slice %441 {offsets = [0, 64], sizes = [2, 32], strides = [1, 1]} : vector<2x128xf32> to vector<2x32xf32>
    %445 = vector.extract_strided_slice %441 {offsets = [0, 96], sizes = [2, 32], strides = [1, 1]} : vector<2x128xf32> to vector<2x32xf32>
    %446 = arith.mulf %443, %420 : vector<2x32xf32>
    %447 = arith.mulf %442, %444 : vector<2x32xf32>
    %448 = arith.addf %446, %447 : vector<2x32xf32>
    %449 = math.tanh %448 : vector<2x32xf32>
    %450 = arith.mulf %445, %449 : vector<2x32xf32>
    %c0_97 = arith.constant 0 : index
    %c0_98 = arith.constant 0 : index
    %451 = vector.load %arg6[%c0_97, %c0_98] : memref<32x2xf32, #tpu.memory_space<vmem>>, vector<32x2xf32>
    %cst_99 = arith.constant dense<0.000000e+00> : vector<2x2xf32>
    %452 = tpu.matmul %450, %451, %cst_99 {dimension_numbers = #tpu.dot_dimension_numbers<[1], [0], [0], [1], [0, 0, 1, 1], [], []>} : vector<2x32xf32>, vector<32x2xf32>, vector<2x2xf32> -> vector<2x2xf32>
    %c0_100 = arith.constant 0 : index
    %c0_101 = arith.constant 0 : index
    %453 = vector.load %arg7[%c0_100, %c0_101] : memref<1x2xf32, #tpu.memory_space<vmem>>, vector<1x2xf32>
    %454 = vector.broadcast %453 : vector<1x2xf32> to vector<2x2xf32>
    %455 = arith.addf %452, %454 : vector<2x2xf32>
    %c0_102 = arith.constant 0 : index
    %c0_103 = arith.constant 0 : index
    %456 = vector.load %arg8[%c0_102, %c0_103] : memref<2x2xf32, #tpu.memory_space<vmem>>, vector<2x2xf32>
    tpu.vector_store %arg8[%c0_102, %c0_103], %455 {strides = array<i32>} : memref<2x2xf32, #tpu.memory_space<vmem>>, vector<2x2xf32>,
    return
  }
}

</mosaic_0001>

<llo_original>
// kernel: lstm_classifier_forward_fn.1
$region0: #{lstm_classifier_forward_fn.1}
  #allocation0 [shape = 'u32[]', space=smem, size = 0x4, offset = 0x4, fixed_abs, tag = 'smem constant byte address 0x4 - core index']
  #allocation1 [shape = 'u32[144,128]{1,0:T(1,128)}', space=vmem, size = 0x12000, scoped, tag = 'internal scratch']
  %s0 = inlined_call_operand.hbm [shape: f32[2,8,16], index: 0, kind: input, shape index: {}]
  %s1 = inlined_call_operand.vmem [shape: f32[16,384], index: 1, kind: input, shape index: {}]
  %s2 = inlined_call_operand.hbm [shape: f32[32,384], index: 2, kind: input, shape index: {}]
  %s3 = inlined_call_operand.hbm [shape: f32[32,384], index: 3, kind: input, shape index: {}]
  %s4 = inlined_call_operand.hbm [shape: f32[32,384], index: 4, kind: input, shape index: {}]
  %s5 = inlined_call_operand.vmem [shape: f32[1,384], index: 5, kind: input, shape index: {}]
  %s6 = inlined_call_operand.vmem [shape: f32[32,2], index: 6, kind: input, shape index: {}]
  %s7 = inlined_call_operand.vmem [shape: f32[1,2], index: 7, kind: input, shape index: {}]
  %s8 = inlined_call_operand.hbm [shape: f32[2,2], index: 8, kind: output, shape index: {}]
  %s9 = sld [smem:[#allocation0]]
  $region58: #{lstm_classifier_forward_fn.1} parent=0
    _
  %s11 = ssub.s32 1, %s9
  %s12 = scalar_select 0, %s11, %s9
  $region1: #{lstm_classifier_forward_fn.1} parent=0
    #allocation2 [shape = 'u8[8192]{0}', space=vmem, size = 0x2000, scoped, tag = 'input window, operand 0, single buffered']
    #allocation3 [shape = 's32[1]{0}', space=sflag, size = 0x4, scoped, tag = 'scoped memory for lstm_classifier_forward_fn.1']
    #allocation4 [shape = 's32[1]{0}', space=sflag, size = 0x4, scoped, tag = 'scoped memory for lstm_classifier_forward_fn.1']
    #allocation5 [shape = 'u8[49152]{0}', space=vmem, size = 0xc000, scoped, tag = 'input window, operand 2, single buffered']
    #allocation6 [shape = 's32[1]{0}', space=sflag, size = 0x4, scoped, tag = 'scoped memory for lstm_classifier_forward_fn.1']
    #allocation7 [shape = 'u8[49152]{0}', space=vmem, size = 0xc000, scoped, tag = 'input window, operand 3, single buffered']
    #allocation8 [shape = 'u8[49152]{0}', space=vmem, size = 0xc000, scoped, tag = 'input window, operand 4, single buffered']
    #allocation9 [shape = 's32[1]{0}', space=sflag, size = 0x4, scoped, tag = 'scoped memory for lstm_classifier_forward_fn.1']
    #allocation10 [shape = 'u8[1024]{0}', space=vmem, size = 0x400, scoped, tag = 'output window, operand 0, single buffered']
    %13 = vsyncpa [#allocation3], 0
    %14 = vsyncpa [#allocation6], 0
    %15 = vsyncpa [#allocation9], 0
    %16 = vsyncpa [#allocation4], 0
    // Predicated region
    $region2: #{lstm_classifier_forward_fn.1} parent=1 // pred_check
      _
    $region3: #{lstm_classifier_forward_fn.1} parent=1 // pred_check_branch
      %18 = sbr.rel (0) target = $region5
    $region4: #{lstm_classifier_forward_fn.1} parent=1 // pred_region
      %s20 = ssub.s32 256, 256
      %21 = vsyncadd [#allocation3], %s20
      %s22 = sshll.u32 [#allocation2], 4
      %s23 = int_to_ptr.vmem [resolvable:$true] %s22
      %28 = dma.hbm_to_vmem [thread:$0]  %s0, 256, %s23, [#allocation3], 128, 128, 8
    $region5: #{lstm_classifier_forward_fn.1} parent=1 // pred_fallthru
      _
    // Predicated region
    $region6: #{lstm_classifier_forward_fn.1} parent=1 // pred_check
      _
    $region7: #{lstm_classifier_forward_fn.1} parent=1 // pred_check_branch
      %30 = sbr.rel (0) target = $region9
    $region8: #{lstm_classifier_forward_fn.1} parent=1 // pred_region
      _
    $region9: #{lstm_classifier_forward_fn.1} parent=1 // pred_fallthru
      _
    // Predicated region
    $region10: #{lstm_classifier_forward_fn.1} parent=1 // pred_check
      _
    $region11: #{lstm_classifier_forward_fn.1} parent=1 // pred_check_branch
      %32 = sbr.rel (0) target = $region13
    $region12: #{lstm_classifier_forward_fn.1} parent=1 // pred_region
      %s34 = ssub.s32 1536, 1536
      %35 = vsyncadd [#allocation6], %s34
      %s36 = sshll.u32 [#allocation5], 4
      %s37 = int_to_ptr.vmem [resolvable:$true] %s36
      %42 = dma.hbm_to_vmem [thread:$0]  %s2, 1536, %s37, [#allocation6], 384, 384, 24
    $region13: #{lstm_classifier_forward_fn.1} parent=1 // pred_fallthru
      _
    // Predicated region
    $region14: #{lstm_classifier_forward_fn.1} parent=1 // pred_check
      _
    $region15: #{lstm_classifier_forward_fn.1} parent=1 // pred_check_branch
      %44 = sbr.rel (0) target = $region17
    $region16: #{lstm_classifier_forward_fn.1} parent=1 // pred_region
      %s46 = ssub.s32 1536, 1536
      %47 = vsyncadd [#allocation6], %s46
      %s48 = sshll.u32 [#allocation7], 4
      %s49 = int_to_ptr.vmem [resolvable:$true] %s48
      %54 = dma.hbm_to_vmem [thread:$0]  %s3, 1536, %s49, [#allocation6], 384, 384, 24
    $region17: #{lstm_classifier_forward_fn.1} parent=1 // pred_fallthru
      _
    // Predicated region
    $region18: #{lstm_classifier_forward_fn.1} parent=1 // pred_check
      _
    $region19: #{lstm_classifier_forward_fn.1} parent=1 // pred_check_branch
      %56 = sbr.rel (0) target = $region21
    $region20: #{lstm_classifier_forward_fn.1} parent=1 // pred_region
      %s58 = ssub.s32 1536, 1536
      %59 = vsyncadd [#allocation9], %s58
      %s60 = sshll.u32 [#allocation8], 4
      %s61 = int_to_ptr.vmem [resolvable:$true] %s60
      %66 = dma.hbm_to_vmem [thread:$0]  %s4, 1536, %s61, [#allocation9], 384, 384, 24
    $region21: #{lstm_classifier_forward_fn.1} parent=1 // pred_fallthru
      _
    // Predicated region
    $region22: #{lstm_classifier_forward_fn.1} parent=1 // pred_check
      _
    $region23: #{lstm_classifier_forward_fn.1} parent=1 // pred_check_branch
      %68 = sbr.rel (0) target = $region25
    $region24: #{lstm_classifier_forward_fn.1} parent=1 // pred_region
      _
    $region25: #{lstm_classifier_forward_fn.1} parent=1 // pred_fallthru
      _
    // Predicated region
    $region26: #{lstm_classifier_forward_fn.1} parent=1 // pred_check
      _
    $region27: #{lstm_classifier_forward_fn.1} parent=1 // pred_check_branch
      %70 = sbr.rel (0) target = $region29
    $region28: #{lstm_classifier_forward_fn.1} parent=1 // pred_region
      _
    $region29: #{lstm_classifier_forward_fn.1} parent=1 // pred_fallthru
      _
    // Predicated region
    $region30: #{lstm_classifier_forward_fn.1} parent=1 // pred_check
      _
    $region31: #{lstm_classifier_forward_fn.1} parent=1 // pred_check_branch
      %72 = sbr.rel (0) target = $region33
    $region32: #{lstm_classifier_forward_fn.1} parent=1 // pred_region
      _
    $region33: #{lstm_classifier_forward_fn.1} parent=1 // pred_fallthru
      _
    // Predicated region
    $region34: #{lstm_classifier_forward_fn.1} parent=1 // pred_check
      _
    $region35: #{lstm_classifier_forward_fn.1} parent=1 // pred_check_branch
      %74 = sbr.rel (0) target = $region37
    $region36: #{lstm_classifier_forward_fn.1} parent=1 // pred_region
      %75 = dma.done [#allocation3], 256
    $region37: #{lstm_classifier_forward_fn.1} parent=1 // pred_fallthru
      _
    // Predicated region
    $region38: #{lstm_classifier_forward_fn.1} parent=1 // pred_check
      _
    $region39: #{lstm_classifier_forward_fn.1} parent=1 // pred_check_branch
      %77 = sbr.rel (0) target = $region41
    $region40: #{lstm_classifier_forward_fn.1} parent=1 // pred_region
      %78 = dma.done [#allocation6], 1536
    $region41: #{lstm_classifier_forward_fn.1} parent=1 // pred_fallthru
      _
    // Predicated region
    $region42: #{lstm_classifier_forward_fn.1} parent=1 // pred_check
      _
    $region43: #{lstm_classifier_forward_fn.1} parent=1 // pred_check_branch
      %80 = sbr.rel (0) target = $region45
    $region44: #{lstm_classifier_forward_fn.1} parent=1 // pred_region
      %81 = dma.done [#allocation6], 1536
    $region45: #{lstm_classifier_forward_fn.1} parent=1 // pred_fallthru
      _
    // Predicated region
    $region46: #{lstm_classifier_forward_fn.1} parent=1 // pred_check
      _
    $region47: #{lstm_classifier_forward_fn.1} parent=1 // pred_check_branch
      %83 = sbr.rel (0) target = $region49
    $region48: #{lstm_classifier_forward_fn.1} parent=1 // pred_region
      %84 = dma.done [#allocation9], 1536
    $region49: #{lstm_classifier_forward_fn.1} parent=1 // pred_fallthru
      _
    %v85 = vld [vmem:[%s1] sm:$0xff]
    %v86 = vld [vmem:[%s1 + $0x8] sm:$0xff]
    %v87 = vld [vmem:[%s1 + $0x10] sm:$0xff]
    %v88 = vld [vmem:[%s1 + $0x18] sm:$0xff]
    %v89 = vld [vmem:[%s1 + $0x20] sm:$0xff]
    %v90 = vld [vmem:[%s1 + $0x28] sm:$0xff]
    %v91 = vld [vmem:[#allocation5] sm:$0xff]
    %v92 = vld [vmem:[#allocation5 + $0x8] sm:$0xff]
    %v93 = vld [vmem:[#allocation5 + $0x10] sm:$0xff]
    %v94 = vld [vmem:[#allocation5 + $0x18] sm:$0xff]
    %v95 = vld [vmem:[#allocation5 + $0x20] sm:$0xff]
    %v96 = vld [vmem:[#allocation5 + $0x28] sm:$0xff]
    %v97 = vld [vmem:[#allocation5 + $0x30] sm:$0xff]
    %v98 = vld [vmem:[#allocation5 + $0x38] sm:$0xff]
    %v99 = vld [vmem:[#allocation5 + $0x40] sm:$0xff]
    %v100 = vld [vmem:[#allocation5 + $0x48] sm:$0xff]
    %v101 = vld [vmem:[#allocation5 + $0x50] sm:$0xff]
    %v102 = vld [vmem:[#allocation5 + $0x58] sm:$0xff]
    %v103 = vld [vmem:[#allocation7] sm:$0xff]
    %v104 = vld [vmem:[#allocation7 + $0x8] sm:$0xff]
    %v105 = vld [vmem:[#allocation7 + $0x10] sm:$0xff]
    %v106 = vld [vmem:[#allocation7 + $0x18] sm:$0xff]
    %v107 = vld [vmem:[#allocation7 + $0x20] sm:$0xff]
    %v108 = vld [vmem:[#allocation7 + $0x28] sm:$0xff]
    %v109 = vld [vmem:[#allocation7 + $0x30] sm:$0xff]
    %v110 = vld [vmem:[#allocation7 + $0x38] sm:$0xff]
    %v111 = vld [vmem:[#allocation7 + $0x40] sm:$0xff]
    %v112 = vld [vmem:[#allocation7 + $0x48] sm:$0xff]
    %v113 = vld [vmem:[#allocation7 + $0x50] sm:$0xff]
    %v114 = vld [vmem:[#allocation7 + $0x58] sm:$0xff]
    %v115 = vld [vmem:[#allocation8] sm:$0xff]
    %v116 = vld [vmem:[#allocation8 + $0x8] sm:$0xff]
    %v117 = vld [vmem:[#allocation8 + $0x10] sm:$0xff]
    %v118 = vld [vmem:[#allocation8 + $0x18] sm:$0xff]
    %v119 = vld [vmem:[#allocation8 + $0x20] sm:$0xff]
    %v120 = vld [vmem:[#allocation8 + $0x28] sm:$0xff]
    %v121 = vld [vmem:[#allocation8 + $0x30] sm:$0xff]
    %v122 = vld [vmem:[#allocation8 + $0x38] sm:$0xff]
    %v123 = vld [vmem:[#allocation8 + $0x40] sm:$0xff]
    %v124 = vld [vmem:[#allocation8 + $0x48] sm:$0xff]
    %v125 = vld [vmem:[#allocation8 + $0x50] sm:$0xff]
    %v126 = vld [vmem:[#allocation8 + $0x58] sm:$0xff]
    %v127 = vld [vmem:[%s5] sm:$0x7]
    %v128 = vlaneseq
    %v129 = vand.u32 %v128, 127
    %v130 = vadd.s32 %v129, 128
    %v131 = vadd.s32 %v129, 256
    %vm132 = vcmp.lt.s32.totalorder %v129, 0
    %v133 = vsub.s32 0, %v129
    %v134 = vsel %vm132, %v133, %v129
    %v135 = vshrl.u32 %v134, 7
    %v136 = vand.u32 %v134, 127
    %v137 = vsub.s32 0, %v136
    %v138 = vsel %vm132, %v137, %v136
    %vm139 = vcmp.lt.s32.totalorder %v130, 0
    %v140 = vsub.s32 0, %v130
    %v141 = vsel %vm139, %v140, %v130
    %v142 = vshrl.u32 %v141, 7
    %v143 = vand.u32 %v141, 127
    %v144 = vsub.s32 0, %v143
    %v145 = vsel %vm139, %v144, %v143
    %vm146 = vcmp.lt.s32.totalorder %v131, 0
    %v147 = vsub.s32 0, %v131
    %v148 = vsel %vm146, %v147, %v131
    %v149 = vshrl.u32 %v148, 7
    %v150 = vand.u32 %v148, 127
    %v151 = vsub.s32 0, %v150
    %v152 = vsel %vm146, %v151, %v150
    %vm153 = vcmp.ne.s32.totalorder %v138, 0
    %vm154 = vcmp.ne.s32.totalorder %v145, 0
    %vm155 = vcmp.ne.s32.totalorder %v152, 0
    %vm156 = vcmp.lt.s32.totalorder %v138, 0
    %vm157 = vcmp.lt.s32.totalorder %v145, 0
    %vm158 = vcmp.lt.s32.totalorder %v152, 0
    %vm159 = vmand %vm156, %vm153
    %vm160 = vmand %vm157, %vm154
    %vm161 = vmand %vm158, %vm155
    %v162 = vadd.s32 %v138, 128
    %v163 = vadd.s32 %v145, 128
    %v164 = vadd.s32 %v152, 128
    %v165 = vsel %vm159, %v162, %v138
    %v166 = vsel %vm160, %v163, %v145
    %v167 = vsel %vm161, %v164, %v152
    %vm168 = vcmp.ge.s32.totalorder %v165, 64
    %vm169 = vcmp.ge.s32.totalorder %v166, 64
    %vm170 = vcmp.ge.s32.totalorder %v167, 64
    %vm171 = vcmp.lt.s32.totalorder %v165, 96
    %vm172 = vcmp.lt.s32.totalorder %v166, 96
    %vm173 = vcmp.lt.s32.totalorder %v167, 96
    %vm174 = vmand %vm168, %vm171
    %vm175 = vmand %vm169, %vm172
    %vm176 = vmand %vm170, %vm173
    %v177 = vsel %vm174, 1.0, 0.5
    %v178 = vsel %vm175, 1.0, 0.5
    %v179 = vsel %vm176, 1.0, 0.5
    %v180 = vld [vmem:[#allocation2] sm:$0x1]
    %v181 = vld [vmem:[#allocation2 + $0x8] sm:$0x1]
    %vm182 = vcmask 261120
    %v184 = vsel %vm182, 0.0, 0
    %186 = vmatprep.subr.mxu0 %v92
    %187 = vmatpush1.msra.mxu0 %v91
    %188 = vmatprep.subr.mxu0 %v95
    %189 = vmatpush1.msra.mxu0 %v94
    %190 = vmatprep.subr.mxu0 %v98
    %191 = vmatpush1.msra.mxu0 %v97
    %192 = vmatprep.subr.mxu0 %v101
    %193 = vmatpush1.msra.mxu0 %v100
    %194 = vmatprep.subr.mxu0 0.0
    %195 = vmatpush1.msra.mxu0 0.0
    %196 = vmatprep.subr.mxu0 0.0
    %197 = vmatpush1.msra.mxu0 0.0
    %198 = vmatprep.subr.mxu0 0.0
    %199 = vmatpush1.msra.mxu0 0.0
    %200 = vmatprep.subr.mxu0 0.0
    %201 = vmatpush1.msra.mxu0 0.0
    %202 = vmatprep.subr.mxu0 0.0
    %203 = vmatpush1.msra.mxu0 0.0
    %204 = vmatprep.subr.mxu0 0.0
    %205 = vmatpush1.msra.mxu0 0.0
    %206 = vmatprep.subr.mxu0 0.0
    %207 = vmatpush1.msra.mxu0 0.0
    %208 = vmatprep.subr.mxu0 0.0
    %209 = vmatpush1.msra.mxu0 0.0
    %210 = vmatprep.subr.mxu0 0.0
    %211 = vmatpush1.msra.mxu0 0.0
    %212 = vmatprep.subr.mxu0 0.0
    %213 = vmatpush1.msra.mxu0 0.0
    %214 = vmatprep.subr.mxu0 0.0
    %215 = vmatpush1.msra.mxu0 0.0
    %216 = vmatprep.subr.mxu0 0.0
    %217 = vmatpush1.msra.mxu0 0.0
    %218 = vmatprep.subr.mxu0 0.0
    %219 = vmatpush1.msra.mxu0 0.0
    %220 = vmatprep.subr.mxu0 0.0
    %221 = vmatpush1.msra.mxu0 0.0
    %222 = vmatprep.subr.mxu0 0.0
    %223 = vmatpush1.msra.mxu0 0.0
    %224 = vmatprep.subr.mxu0 0.0
    %225 = vmatpush1.msra.mxu0 0.0
    %226 = vmatprep.subr.mxu0 0.0
    %227 = vmatpush1.msra.mxu0 0.0
    %228 = vmatprep.subr.mxu0 0.0
    %229 = vmatpush1.msra.mxu0 0.0
    %230 = vmatprep.subr.mxu0 0.0
    %231 = vmatpush1.msra.mxu0 0.0
    %232 = vmatprep.subr.mxu0 0.0
    %233 = vmatpush1.msra.mxu0 0.0
    %234 = vmatprep.subr.mxu0 0.0
    %235 = vmatpush1.msra.mxu0 0.0
    %236 = vmatprep.subr.mxu0 0.0
    %237 = vmatpush1.msra.mxu0 0.0
    %238 = vmatprep.subr.mxu0 0.0
    %239 = vmatpush1.msra.mxu0 0.0
    %240 = vmatprep.subr.mxu0 0.0
    %241 = vmatpush1.msra.mxu0 0.0
    %242 = vmatprep.subr.mxu0 0.0
    %243 = vmatpush1.msra.mxu0 0.0
    %244 = vmatprep.subr.mxu0 0.0
    %245 = vmatpush1.msra.mxu0 0.0
    %246 = vmatprep.subr.mxu0 0.0
    %247 = vmatpush1.msra.mxu0 0.0
    %248 = vmatprep.subr.mxu0 0.0
    %249 = vmatpush1.msra.mxu0 0.0
    %250 = vmatprep.mubr.f32.mxu0 0.0
    %251 = vmatmul.mubr.f32.gmra.mrb[0].mxu0 %v184
    %v252 = vpop.f32.mrb[0].mxu0
    %v253 = vadd.f32 0.0, %v252
    %v254 = vpop.f32.mrb[0].mxu0
    %255 = vdwg.mxu0
    %v258 = vrot.slane %v181, 7
    %vm259 = vcmask 1041409
    %v260 = vsel %vm259, %v258, %v180
    %vm261 = vcmask 130048
    %v262 = vsel %vm261, %v260, 0
    %264 = vmatprep.subr.mxu0 %v86
    %265 = vmatpush1.msra.mxu0 %v85
    %266 = vmatprep.subr.mxu0 %v89
    %267 = vmatpush1.msra.mxu0 %v88
    %268 = vmatprep.subr.mxu0 0.0
    %269 = vmatpush1.msra.mxu0 0.0
    %270 = vmatprep.subr.mxu0 0.0
    %271 = vmatpush1.msra.mxu0 0.0
    %272 = vmatprep.subr.mxu0 0.0
    %273 = vmatpush1.msra.mxu0 0.0
    %274 = vmatprep.subr.mxu0 0.0
    %275 = vmatpush1.msra.mxu0 0.0
    %276 = vmatprep.subr.mxu0 0.0
    %277 = vmatpush1.msra.mxu0 0.0
    %278 = vmatprep.subr.mxu0 0.0
    %279 = vmatpush1.msra.mxu0 0.0
    %280 = vmatprep.subr.mxu0 0.0
    %281 = vmatpush1.msra.mxu0 0.0
    %282 = vmatprep.subr.mxu0 0.0
    %283 = vmatpush1.msra.mxu0 0.0
    %284 = vmatprep.subr.mxu0 0.0
    %285 = vmatpush1.msra.mxu0 0.0
    %286 = vmatprep.subr.mxu0 0.0
    %287 = vmatpush1.msra.mxu0 0.0
    %288 = vmatprep.subr.mxu0 0.0
    %289 = vmatpush1.msra.mxu0 0.0
    %290 = vmatprep.subr.mxu0 0.0
    %291 = vmatpush1.msra.mxu0 0.0
    %292 = vmatprep.subr.mxu0 0.0
    %293 = vmatpush1.msra.mxu0 0.0
    %294 = vmatprep.subr.mxu0 0.0
    %295 = vmatpush1.msra.mxu0 0.0
    %296 = vmatprep.subr.mxu0 0.0
    %297 = vmatpush1.msra.mxu0 0.0
    %298 = vmatprep.subr.mxu0 0.0
    %299 = vmatpush1.msra.mxu0 0.0
    %300 = vmatprep.subr.mxu0 0.0
    %301 = vmatpush1.msra.mxu0 0.0
    %302 = vmatprep.subr.mxu0 0.0
    %303 = vmatpush1.msra.mxu0 0.0
    %304 = vmatprep.subr.mxu0 0.0
    %305 = vmatpush1.msra.mxu0 0.0
    %306 = vmatprep.subr.mxu0 0.0
    %307 = vmatpush1.msra.mxu0 0.0
    %308 = vmatprep.subr.mxu0 0.0
    %309 = vmatpush1.msra.mxu0 0.0
    %310 = vmatprep.subr.mxu0 0.0
    %311 = vmatpush1.msra.mxu0 0.0
    %312 = vmatprep.subr.mxu0 0.0
    %313 = vmatpush1.msra.mxu0 0.0
    %314 = vmatprep.subr.mxu0 0.0
    %315 = vmatpush1.msra.mxu0 0.0
    %316 = vmatprep.subr.mxu0 0.0
    %317 = vmatpush1.msra.mxu0 0.0
    %318 = vmatprep.subr.mxu0 0.0
    %319 = vmatpush1.msra.mxu0 0.0
    %320 = vmatprep.subr.mxu0 0.0
    %321 = vmatpush1.msra.mxu0 0.0
    %322 = vmatprep.subr.mxu0 0.0
    %323 = vmatpush1.msra.mxu0 0.0
    %324 = vmatprep.subr.mxu0 0.0
    %325 = vmatpush1.msra.mxu0 0.0
    %326 = vmatprep.subr.mxu0 0.0
    %327 = vmatpush1.msra.mxu0 0.0
    %328 = vmatprep.mubr.f32.mxu0 0.0
    %329 = vmatmul.mubr.f32.gmra.mrb[0].mxu0 %v262
    %v330 = vpop.f32.mrb[0].mxu0
    %v331 = vadd.f32 %v253, %v330
    %v332 = vpop.f32.mrb[0].mxu0
    %333 = vdwg.mxu0
    %334 = vmatprep.subr.mxu0 %v104
    %335 = vmatpush1.msra.mxu0 %v103
    %336 = vmatprep.subr.mxu0 %v107
    %337 = vmatpush1.msra.mxu0 %v106
    %338 = vmatprep.subr.mxu0 %v110
    %339 = vmatpush1.msra.mxu0 %v109
    %340 = vmatprep.subr.mxu0 %v113
    %341 = vmatpush1.msra.mxu0 %v112
    %342 = vmatprep.subr.mxu0 0.0
    %343 = vmatpush1.msra.mxu0 0.0
    %344 = vmatprep.subr.mxu0 0.0
    %345 = vmatpush1.msra.mxu0 0.0
    %346 = vmatprep.subr.mxu0 0.0
    %347 = vmatpush1.msra.mxu0 0.0
    %348 = vmatprep.subr.mxu0 0.0
    %349 = vmatpush1.msra.mxu0 0.0
    %350 = vmatprep.subr.mxu0 0.0
    %351 = vmatpush1.msra.mxu0 0.0
    %352 = vmatprep.subr.mxu0 0.0
    %353 = vmatpush1.msra.mxu0 0.0
    %354 = vmatprep.subr.mxu0 0.0
    %355 = vmatpush1.msra.mxu0 0.0
    %356 = vmatprep.subr.mxu0 0.0
    %357 = vmatpush1.msra.mxu0 0.0
    %358 = vmatprep.subr.mxu0 0.0
    %359 = vmatpush1.msra.mxu0 0.0
    %360 = vmatprep.subr.mxu0 0.0
    %361 = vmatpush1.msra.mxu0 0.0
    %362 = vmatprep.subr.mxu0 0.0
    %363 = vmatpush1.msra.mxu0 0.0
    %364 = vmatprep.subr.mxu0 0.0
    %365 = vmatpush1.msra.mxu0 0.0
    %366 = vmatprep.subr.mxu0 0.0
    %367 = vmatpush1.msra.mxu0 0.0
    %368 = vmatprep.subr.mxu0 0.0
    %369 = vmatpush1.msra.mxu0 0.0
    %370 = vmatprep.subr.mxu0 0.0
    %371 = vmatpush1.msra.mxu0 0.0
    %372 = vmatprep.subr.mxu0 0.0
    %373 = vmatpush1.msra.mxu0 0.0
    %374 = vmatprep.subr.mxu0 0.0
    %375 = vmatpush1.msra.mxu0 0.0
    %376 = vmatprep.subr.mxu0 0.0
    %377 = vmatpush1.msra.mxu0 0.0
    %378 = vmatprep.subr.mxu0 0.0
    %379 = vmatpush1.msra.mxu0 0.0
    %380 = vmatprep.subr.mxu0 0.0
    %381 = vmatpush1.msra.mxu0 0.0
    %382 = vmatprep.subr.mxu0 0.0
    %383 = vmatpush1.msra.mxu0 0.0
    %384 = vmatprep.subr.mxu0 0.0
    %385 = vmatpush1.msra.mxu0 0.0
    %386 = vmatprep.subr.mxu0 0.0
    %387 = vmatpush1.msra.mxu0 0.0
    %388 = vmatprep.subr.mxu0 0.0
    %389 = vmatpush1.msra.mxu0 0.0
    %390 = vmatprep.subr.mxu0 0.0
    %391 = vmatpush1.msra.mxu0 0.0
    %392 = vmatprep.subr.mxu0 0.0
    %393 = vmatpush1.msra.mxu0 0.0
    %394 = vmatprep.subr.mxu0 0.0
    %395 = vmatpush1.msra.mxu0 0.0
    %396 = vmatprep.subr.mxu0 0.0
    %397 = vmatpush1.msra.mxu0 0.0
    %398 = vmatprep.mubr.f32.mxu0 0.0
    %399 = vmatmul.mubr.f32.gmra.mrb[0].mxu0 %v184
    %v400 = vpop.f32.mrb[0].mxu0
    %v401 = vadd.f32 0.0, %v400
    %v402 = vpop.f32.mrb[0].mxu0
    %v403 = vadd.f32 0.0, %v402
    %404 = vdwg.mxu0
    %v405 = vadd.f32 %v331, %v401
    %406 = vmatprep.subr.mxu0 %v116
    %407 = vmatpush1.msra.mxu0 %v115
    %408 = vmatprep.subr.mxu0 %v119
    %409 = vmatpush1.msra.mxu0 %v118
    %410 = vmatprep.subr.mxu0 %v122
    %411 = vmatpush1.msra.mxu0 %v121
    %412 = vmatprep.subr.mxu0 %v125
    %413 = vmatpush1.msra.mxu0 %v124
    %414 = vmatprep.subr.mxu0 0.0
    %415 = vmatpush1.msra.mxu0 0.0
    %416 = vmatprep.subr.mxu0 0.0
    %417 = vmatpush1.msra.mxu0 0.0
    %418 = vmatprep.subr.mxu0 0.0
    %419 = vmatpush1.msra.mxu0 0.0
    %420 = vmatprep.subr.mxu0 0.0
    %421 = vmatpush1.msra.mxu0 0.0
    %422 = vmatprep.subr.mxu0 0.0
    %423 = vmatpush1.msra.mxu0 0.0
    %424 = vmatprep.subr.mxu0 0.0
    %425 = vmatpush1.msra.mxu0 0.0
    %426 = vmatprep.subr.mxu0 0.0
    %427 = vmatpush1.msra.mxu0 0.0
    %428 = vmatprep.subr.mxu0 0.0
    %429 = vmatpush1.msra.mxu0 0.0
    %430 = vmatprep.subr.mxu0 0.0
    %431 = vmatpush1.msra.mxu0 0.0
    %432 = vmatprep.subr.mxu0 0.0
    %433 = vmatpush1.msra.mxu0 0.0
    %434 = vmatprep.subr.mxu0 0.0
    %435 = vmatpush1.msra.mxu0 0.0
    %436 = vmatprep.subr.mxu0 0.0
    %437 = vmatpush1.msra.mxu0 0.0
    %438 = vmatprep.subr.mxu0 0.0
    %439 = vmatpush1.msra.mxu0 0.0
    %440 = vmatprep.subr.mxu0 0.0
    %441 = vmatpush1.msra.mxu0 0.0
    %442 = vmatprep.subr.mxu0 0.0
    %443 = vmatpush1.msra.mxu0 0.0
    %444 = vmatprep.subr.mxu0 0.0
    %445 = vmatpush1.msra.mxu0 0.0
    %446 = vmatprep.subr.mxu0 0.0
    %447 = vmatpush1.msra.mxu0 0.0
    %448 = vmatprep.subr.mxu0 0.0
    %449 = vmatpush1.msra.mxu0 0.0
    %450 = vmatprep.subr.mxu0 0.0
    %451 = vmatpush1.msra.mxu0 0.0
    %452 = vmatprep.subr.mxu0 0.0
    %453 = vmatpush1.msra.mxu0 0.0
    %454 = vmatprep.subr.mxu0 0.0
    %455 = vmatpush1.msra.mxu0 0.0
    %456 = vmatprep.subr.mxu0 0.0
    %457 = vmatpush1.msra.mxu0 0.0
    %458 = vmatprep.subr.mxu0 0.0
    %459 = vmatpush1.msra.mxu0 0.0
    %460 = vmatprep.subr.mxu0 0.0
    %461 = vmatpush1.msra.mxu0 0.0
    %462 = vmatprep.subr.mxu0 0.0
    %463 = vmatpush1.msra.mxu0 0.0
    %464 = vmatprep.subr.mxu0 0.0
    %465 = vmatpush1.msra.mxu0 0.0
    %466 = vmatprep.subr.mxu0 0.0
    %467 = vmatpush1.msra.mxu0 0.0
    %468 = vmatprep.subr.mxu0 0.0
    %469 = vmatpush1.msra.mxu0 0.0
    %470 = vmatprep.mubr.f32.mxu0 0.0
    %471 = vmatmul.mubr.f32.gmra.mrb[0].mxu0 %v184
    %v472 = vpop.f32.mrb[0].mxu0
    %v473 = vadd.f32 0.0, %v472
    %v474 = vpop.f32.mrb[0].mxu0
    %v475 = vadd.f32 0.0, %v474
    %476 = vdwg.mxu0
    %477 = vmatprep.subr.mxu0 0.0
    %478 = vmatpush1.msra.mxu0 %v117
    %479 = vmatprep.subr.mxu0 0.0
    %480 = vmatpush1.msra.mxu0 %v120
    %481 = vmatprep.subr.mxu0 0.0
    %482 = vmatpush1.msra.mxu0 %v123
    %483 = vmatprep.subr.mxu0 0.0
    %484 = vmatpush1.msra.mxu0 %v126
    %485 = vmatprep.subr.mxu0 0.0
    %486 = vmatpush1.msra.mxu0 0.0
    %487 = vmatprep.subr.mxu0 0.0
    %488 = vmatpush1.msra.mxu0 0.0
    %489 = vmatprep.subr.mxu0 0.0
    %490 = vmatpush1.msra.mxu0 0.0
    %491 = vmatprep.subr.mxu0 0.0
    %492 = vmatpush1.msra.mxu0 0.0
    %493 = vmatprep.subr.mxu0 0.0
    %494 = vmatpush1.msra.mxu0 0.0
    %495 = vmatprep.subr.mxu0 0.0
    %496 = vmatpush1.msra.mxu0 0.0
    %497 = vmatprep.subr.mxu0 0.0
    %498 = vmatpush1.msra.mxu0 0.0
    %499 = vmatprep.subr.mxu0 0.0
    %500 = vmatpush1.msra.mxu0 0.0
    %501 = vmatprep.subr.mxu0 0.0
    %502 = vmatpush1.msra.mxu0 0.0
    %503 = vmatprep.subr.mxu0 0.0
    %504 = vmatpush1.msra.mxu0 0.0
    %505 = vmatprep.subr.mxu0 0.0
    %506 = vmatpush1.msra.mxu0 0.0
    %507 = vmatprep.subr.mxu0 0.0
    %508 = vmatpush1.msra.mxu0 0.0
    %509 = vmatprep.subr.mxu0 0.0
    %510 = vmatpush1.msra.mxu0 0.0
    %511 = vmatprep.subr.mxu0 0.0
    %512 = vmatpush1.msra.mxu0 0.0
    %513 = vmatprep.subr.mxu0 0.0
    %514 = vmatpush1.msra.mxu0 0.0
    %515 = vmatprep.subr.mxu0 0.0
    %516 = vmatpush1.msra.mxu0 0.0
    %517 = vmatprep.subr.mxu0 0.0
    %518 = vmatpush1.msra.mxu0 0.0
    %519 = vmatprep.subr.mxu0 0.0
    %520 = vmatpush1.msra.mxu0 0.0
    %521 = vmatprep.subr.mxu0 0.0
    %522 = vmatpush1.msra.mxu0 0.0
    %523 = vmatprep.subr.mxu0 0.0
    %524 = vmatpush1.msra.mxu0 0.0
    %525 = vmatprep.subr.mxu0 0.0
    %526 = vmatpush1.msra.mxu0 0.0
    %527 = vmatprep.subr.mxu0 0.0
    %528 = vmatpush1.msra.mxu0 0.0
    %529 = vmatprep.subr.mxu0 0.0
    %530 = vmatpush1.msra.mxu0 0.0
    %531 = vmatprep.subr.mxu0 0.0
    %532 = vmatpush1.msra.mxu0 0.0
    %533 = vmatprep.subr.mxu0 0.0
    %534 = vmatpush1.msra.mxu0 0.0
    %535 = vmatprep.subr.mxu0 0.0
    %536 = vmatpush1.msra.mxu0 0.0
    %537 = vmatprep.subr.mxu0 0.0
    %538 = vmatpush1.msra.mxu0 0.0
    %539 = vmatprep.subr.mxu0 0.0
    %540 = vmatpush1.msra.mxu0 0.0
    %541 = vmatprep.mubr.f32.mxu0 0.0
    %542 = vmatmul.mubr.f32.gmra.mrb[0].mxu0 %v184
    %v543 = vpop.f32.mrb[0].mxu0
    %v544 = vadd.f32 0.0, %v543
    %v545 = vpop.f32.mrb[0].mxu0
    %546 = vdwg.mxu0
    %v547 = vadd.f32 %v405, %v473
    %v549 = vlaneseq
    %v550 = vshrl.u32 %v549, 7
    %v551 = vsub.s32 0, %v550
    %v552 = vrot.slane %v127, %v551
    %v553 = vlaneseq
    %v554 = vshrl.u32 %v553, 7
    %v555 = vsub.s32 1, %v554
    %v556 = vrot.slane %v127, %v555
    %v557 = vlaneseq
    %v558 = vshrl.u32 %v557, 7
    %v559 = vsub.s32 2, %v558
    %v560 = vrot.slane %v127, %v559
    %v564 = vadd.f32 %v547, %v552
    %v565 = vmul.f32 %v564, %v177
    %v566 = vtanh.pop %v565
    %v567 = vmul.f32 %v566, 0.5
    %v568 = vadd.f32 %v567, 0.5
    %v569 = vsel %vm174, %v566, %v568
    %v570 = vmul.f32 %v569, 0.0
    %572 = vrot.lane.b32.xlu0 %v569, 64
    %v573 = vpop.permute.xlu0 %572
    %v575 = vmul.f32 %v569, %v573
    %577 = vrot.lane.b32.xlu0 %v575, 32
    %v578 = vpop.permute.xlu0 %577
    %v580 = vadd.f32 %v570, %v578
    %v581 = vtanh.pop %v580
    %583 = vrot.lane.b32.xlu0 %v581, 64
    %v584 = vpop.permute.xlu0 %583
    %v586 = vmul.f32 %v569, %v584
    %v587 = vld [vmem:[#allocation2 + $0x1] sm:$0x1]
    %v588 = vld [vmem:[#allocation2 + $0x9] sm:$0x1]
    %590 = vrot.lane.b32.xlu0 %v586, 32
    %v591 = vpop.permute.xlu0 %590
    %v592 = vsel %vm182, %v591, 0
    %594 = vmatprep.subr.mxu0 %v92
    %595 = vmatpush1.msra.mxu0 %v91
    %596 = vmatprep.subr.mxu0 %v95
    %597 = vmatpush1.msra.mxu0 %v94
    %598 = vmatprep.subr.mxu0 %v98
    %599 = vmatpush1.msra.mxu0 %v97
    %600 = vmatprep.subr.mxu0 %v101
    %601 = vmatpush1.msra.mxu0 %v100
    %602 = vmatprep.subr.mxu0 0.0
    %603 = vmatpush1.msra.mxu0 0.0
    %604 = vmatprep.subr.mxu0 0.0
    %605 = vmatpush1.msra.mxu0 0.0
    %606 = vmatprep.subr.mxu0 0.0
    %607 = vmatpush1.msra.mxu0 0.0
    %608 = vmatprep.subr.mxu0 0.0
    %609 = vmatpush1.msra.mxu0 0.0
    %610 = vmatprep.subr.mxu0 0.0
    %611 = vmatpush1.msra.mxu0 0.0
    %612 = vmatprep.subr.mxu0 0.0
    %613 = vmatpush1.msra.mxu0 0.0
    %614 = vmatprep.subr.mxu0 0.0
    %615 = vmatpush1.msra.mxu0 0.0
    %616 = vmatprep.subr.mxu0 0.0
    %617 = vmatpush1.msra.mxu0 0.0
    %618 = vmatprep.subr.mxu0 0.0
    %619 = vmatpush1.msra.mxu0 0.0
    %620 = vmatprep.subr.mxu0 0.0
    %621 = vmatpush1.msra.mxu0 0.0
    %622 = vmatprep.subr.mxu0 0.0
    %623 = vmatpush1.msra.mxu0 0.0
    %624 = vmatprep.subr.mxu0 0.0
    %625 = vmatpush1.msra.mxu0 0.0
    %626 = vmatprep.subr.mxu0 0.0
    %627 = vmatpush1.msra.mxu0 0.0
    %628 = vmatprep.subr.mxu0 0.0
    %629 = vmatpush1.msra.mxu0 0.0
    %630 = vmatprep.subr.mxu0 0.0
    %631 = vmatpush1.msra.mxu0 0.0
    %632 = vmatprep.subr.mxu0 0.0
    %633 = vmatpush1.msra.mxu0 0.0
    %634 = vmatprep.subr.mxu0 0.0
    %635 = vmatpush1.msra.mxu0 0.0
    %636 = vmatprep.subr.mxu0 0.0
    %637 = vmatpush1.msra.mxu0 0.0
    %638 = vmatprep.subr.mxu0 0.0
    %639 = vmatpush1.msra.mxu0 0.0
    %640 = vmatprep.subr.mxu0 0.0
    %641 = vmatpush1.msra.mxu0 0.0
    %642 = vmatprep.subr.mxu0 0.0
    %643 = vmatpush1.msra.mxu0 0.0
    %644 = vmatprep.subr.mxu0 0.0
    %645 = vmatpush1.msra.mxu0 0.0
    %646 = vmatprep.subr.mxu0 0.0
    %647 = vmatpush1.msra.mxu0 0.0
    %648 = vmatprep.subr.mxu0 0.0
    %649 = vmatpush1.msra.mxu0 0.0
    %650 = vmatprep.subr.mxu0 0.0
    %651 = vmatpush1.msra.mxu0 0.0
    %652 = vmatprep.subr.mxu0 0.0
    %653 = vmatpush1.msra.mxu0 0.0
    %654 = vmatprep.subr.mxu0 0.0
    %655 = vmatpush1.msra.mxu0 0.0
    %656 = vmatprep.subr.mxu0 0.0
    %657 = vmatpush1.msra.mxu0 0.0
    %658 = vmatprep.mubr.f32.mxu0 0.0
    %659 = vmatmul.mubr.f32.gmra.mrb[0].mxu0 %v592
    %v660 = vpop.f32.mrb[0].mxu0
    %v661 = vadd.f32 0.0, %v660
    %v662 = vpop.f32.mrb[0].mxu0
    %v663 = vadd.f32 0.0, %v662
    %664 = vdwg.mxu0
    %v667 = vrot.slane %v588, 7
    %v668 = vsel %vm259, %v667, %v587
    %v669 = vsel %vm261, %v668, 0
    %671 = vmatprep.subr.mxu0 %v86
    %672 = vmatpush1.msra.mxu0 %v85
    %673 = vmatprep.subr.mxu0 %v89
    %674 = vmatpush1.msra.mxu0 %v88
    %675 = vmatprep.subr.mxu0 0.0
    %676 = vmatpush1.msra.mxu0 0.0
    %677 = vmatprep.subr.mxu0 0.0
    %678 = vmatpush1.msra.mxu0 0.0
    %679 = vmatprep.subr.mxu0 0.0
    %680 = vmatpush1.msra.mxu0 0.0
    %681 = vmatprep.subr.mxu0 0.0
    %682 = vmatpush1.msra.mxu0 0.0
    %683 = vmatprep.subr.mxu0 0.0
    %684 = vmatpush1.msra.mxu0 0.0
    %685 = vmatprep.subr.mxu0 0.0
    %686 = vmatpush1.msra.mxu0 0.0
    %687 = vmatprep.subr.mxu0 0.0
    %688 = vmatpush1.msra.mxu0 0.0
    %689 = vmatprep.subr.mxu0 0.0
    %690 = vmatpush1.msra.mxu0 0.0
    %691 = vmatprep.subr.mxu0 0.0
    %692 = vmatpush1.msra.mxu0 0.0
    %693 = vmatprep.subr.mxu0 0.0
    %694 = vmatpush1.msra.mxu0 0.0
    %695 = vmatprep.subr.mxu0 0.0
    %696 = vmatpush1.msra.mxu0 0.0
    %697 = vmatprep.subr.mxu0 0.0
    %698 = vmatpush1.msra.mxu0 0.0
    %699 = vmatprep.subr.mxu0 0.0
    %700 = vmatpush1.msra.mxu0 0.0
    %701 = vmatprep.subr.mxu0 0.0
    %702 = vmatpush1.msra.mxu0 0.0
    %703 = vmatprep.subr.mxu0 0.0
    %704 = vmatpush1.msra.mxu0 0.0
    %705 = vmatprep.subr.mxu0 0.0
    %706 = vmatpush1.msra.mxu0 0.0
    %707 = vmatprep.subr.mxu0 0.0
    %708 = vmatpush1.msra.mxu0 0.0
    %709 = vmatprep.subr.mxu0 0.0
    %710 = vmatpush1.msra.mxu0 0.0
    %711 = vmatprep.subr.mxu0 0.0
    %712 = vmatpush1.msra.mxu0 0.0
    %713 = vmatprep.subr.mxu0 0.0
    %714 = vmatpush1.msra.mxu0 0.0
    %715 = vmatprep.subr.mxu0 0.0
    %716 = vmatpush1.msra.mxu0 0.0
    %717 = vmatprep.subr.mxu0 0.0
    %718 = vmatpush1.msra.mxu0 0.0
    %719 = vmatprep.subr.mxu0 0.0
    %720 = vmatpush1.msra.mxu0 0.0
    %721 = vmatprep.subr.mxu0 0.0
    %722 = vmatpush1.msra.mxu0 0.0
    %723 = vmatprep.subr.mxu0 0.0
    %724 = vmatpush1.msra.mxu0 0.0
    %725 = vmatprep.subr.mxu0 0.0
    %726 = vmatpush1.msra.mxu0 0.0
    %727 = vmatprep.subr.mxu0 0.0
    %728 = vmatpush1.msra.mxu0 0.0
    %729 = vmatprep.subr.mxu0 0.0
    %730 = vmatpush1.msra.mxu0 0.0
    %731 = vmatprep.subr.mxu0 0.0
    %732 = vmatpush1.msra.mxu0 0.0
    %733 = vmatprep.subr.mxu0 0.0
    %734 = vmatpush1.msra.mxu0 0.0
    %735 = vmatprep.mubr.f32.mxu0 0.0
    %736 = vmatmul.mubr.f32.gmra.mrb[0].mxu0 %v669
    %v737 = vpop.f32.mrb[0].mxu0
    %v738 = vadd.f32 %v661, %v737
    %v739 = vpop.f32.mrb[0].mxu0
    %v740 = vadd.f32 %v663, %v739
    %741 = vdwg.mxu0
    %v742 = vadd.f32 %v738, %v401
    %v743 = vadd.f32 %v740, %v403
    %v744 = vadd.f32 %v742, %v473
    %v745 = vadd.f32 %v743, %v475
    %v746 = vadd.f32 %v744, %v552
    %v747 = vadd.f32 %v745, %v556
    %v748 = vmul.f32 %v746, %v177
    %v749 = vmul.f32 %v747, %v178
    %v750 = vtanh.pop %v748
    %v751 = vtanh.pop %v749
    %v752 = vmul.f32 %v750, 0.5
    %v753 = vmul.f32 %v751, 0.5
    %v754 = vadd.f32 %v752, 0.5
    %v755 = vadd.f32 %v753, 0.5
    %v756 = vsel %vm174, %v750, %v754
    %v757 = vsel %vm175, %v751, %v755
    %v758 = vmul.f32 %v756, %v580
    %760 = vrot.lane.b32.xlu0 %v756, 64
    %v761 = vpop.permute.xlu0 %760
    %v763 = vmul.f32 %v756, %v761
    %765 = vrot.lane.b32.xlu0 %v763, 32
    %v766 = vpop.permute.xlu0 %765
    %v768 = vadd.f32 %v758, %v766
    %v769 = vtanh.pop %v768
    %771 = vrot.lane.b32.xlu0 %v769, 64
    %v772 = vpop.permute.xlu0 %771
    %v774 = vmul.f32 %v756, %v772
    %v775 = vmul.f32 %v757, 0.0
    %777 = vrot.lane.b32.xlu0 %v757, 64
    %v778 = vpop.permute.xlu0 %777
    %v780 = vmul.f32 %v757, %v778
    %782 = vrot.lane.b32.xlu0 %v780, 32
    %v783 = vpop.permute.xlu0 %782
    %v785 = vadd.f32 %v775, %v783
    %v786 = vtanh.pop %v785
    %788 = vrot.lane.b32.xlu0 %v786, 64
    %v789 = vpop.permute.xlu0 %788
    %v791 = vmul.f32 %v757, %v789
    %v792 = vld [vmem:[#allocation2 + $0x2] sm:$0x1]
    %v793 = vld [vmem:[#allocation2 + $0xa] sm:$0x1]
    %795 = vrot.lane.b32.xlu0 %v774, 32
    %v796 = vpop.permute.xlu0 %795
    %v797 = vsel %vm182, %v796, 0
    %799 = vmatprep.subr.mxu0 %v92
    %800 = vmatpush1.msra.mxu0 %v91
    %801 = vmatprep.subr.mxu0 %v95
    %802 = vmatpush1.msra.mxu0 %v94
    %803 = vmatprep.subr.mxu0 %v98
    %804 = vmatpush1.msra.mxu0 %v97
    %805 = vmatprep.subr.mxu0 %v101
    %806 = vmatpush1.msra.mxu0 %v100
    %807 = vmatprep.subr.mxu0 0.0
    %808 = vmatpush1.msra.mxu0 0.0
    %809 = vmatprep.subr.mxu0 0.0
    %810 = vmatpush1.msra.mxu0 0.0
    %811 = vmatprep.subr.mxu0 0.0
    %812 = vmatpush1.msra.mxu0 0.0
    %813 = vmatprep.subr.mxu0 0.0
    %814 = vmatpush1.msra.mxu0 0.0
    %815 = vmatprep.subr.mxu0 0.0
    %816 = vmatpush1.msra.mxu0 0.0
    %817 = vmatprep.subr.mxu0 0.0
    %818 = vmatpush1.msra.mxu0 0.0
    %819 = vmatprep.subr.mxu0 0.0
    %820 = vmatpush1.msra.mxu0 0.0
    %821 = vmatprep.subr.mxu0 0.0
    %822 = vmatpush1.msra.mxu0 0.0
    %823 = vmatprep.subr.mxu0 0.0
    %824 = vmatpush1.msra.mxu0 0.0
    %825 = vmatprep.subr.mxu0 0.0
    %826 = vmatpush1.msra.mxu0 0.0
    %827 = vmatprep.subr.mxu0 0.0
    %828 = vmatpush1.msra.mxu0 0.0
    %829 = vmatprep.subr.mxu0 0.0
    %830 = vmatpush1.msra.mxu0 0.0
    %831 = vmatprep.subr.mxu0 0.0
    %832 = vmatpush1.msra.mxu0 0.0
    %833 = vmatprep.subr.mxu0 0.0
    %834 = vmatpush1.msra.mxu0 0.0
    %835 = vmatprep.subr.mxu0 0.0
    %836 = vmatpush1.msra.mxu0 0.0
    %837 = vmatprep.subr.mxu0 0.0
    %838 = vmatpush1.msra.mxu0 0.0
    %839 = vmatprep.subr.mxu0 0.0
    %840 = vmatpush1.msra.mxu0 0.0
    %841 = vmatprep.subr.mxu0 0.0
    %842 = vmatpush1.msra.mxu0 0.0
    %843 = vmatprep.subr.mxu0 0.0
    %844 = vmatpush1.msra.mxu0 0.0
    %845 = vmatprep.subr.mxu0 0.0
    %846 = vmatpush1.msra.mxu0 0.0
    %847 = vmatprep.subr.mxu0 0.0
    %848 = vmatpush1.msra.mxu0 0.0
    %849 = vmatprep.subr.mxu0 0.0
    %850 = vmatpush1.msra.mxu0 0.0
    %851 = vmatprep.subr.mxu0 0.0
    %852 = vmatpush1.msra.mxu0 0.0
    %853 = vmatprep.subr.mxu0 0.0
    %854 = vmatpush1.msra.mxu0 0.0
    %855 = vmatprep.subr.mxu0 0.0
    %856 = vmatpush1.msra.mxu0 0.0
    %857 = vmatprep.subr.mxu0 0.0
    %858 = vmatpush1.msra.mxu0 0.0
    %859 = vmatprep.subr.mxu0 0.0
    %860 = vmatpush1.msra.mxu0 0.0
    %861 = vmatprep.subr.mxu0 0.0
    %862 = vmatpush1.msra.mxu0 0.0
    %863 = vmatprep.mubr.f32.mxu0 0.0
    %864 = vmatmul.mubr.f32.gmra.mrb[0].mxu0 %v797
    %v865 = vpop.f32.mrb[0].mxu0
    %v866 = vadd.f32 0.0, %v865
    %v867 = vpop.f32.mrb[0].mxu0
    %v868 = vadd.f32 0.0, %v867
    %869 = vdwg.mxu0
    %870 = vmatprep.subr.mxu0 0.0
    %871 = vmatpush1.msra.mxu0 %v93
    %872 = vmatprep.subr.mxu0 0.0
    %873 = vmatpush1.msra.mxu0 %v96
    %874 = vmatprep.subr.mxu0 0.0
    %875 = vmatpush1.msra.mxu0 %v99
    %876 = vmatprep.subr.mxu0 0.0
    %877 = vmatpush1.msra.mxu0 %v102
    %878 = vmatprep.subr.mxu0 0.0
    %879 = vmatpush1.msra.mxu0 0.0
    %880 = vmatprep.subr.mxu0 0.0
    %881 = vmatpush1.msra.mxu0 0.0
    %882 = vmatprep.subr.mxu0 0.0
    %883 = vmatpush1.msra.mxu0 0.0
    %884 = vmatprep.subr.mxu0 0.0
    %885 = vmatpush1.msra.mxu0 0.0
    %886 = vmatprep.subr.mxu0 0.0
    %887 = vmatpush1.msra.mxu0 0.0
    %888 = vmatprep.subr.mxu0 0.0
    %889 = vmatpush1.msra.mxu0 0.0
    %890 = vmatprep.subr.mxu0 0.0
    %891 = vmatpush1.msra.mxu0 0.0
    %892 = vmatprep.subr.mxu0 0.0
    %893 = vmatpush1.msra.mxu0 0.0
    %894 = vmatprep.subr.mxu0 0.0
    %895 = vmatpush1.msra.mxu0 0.0
    %896 = vmatprep.subr.mxu0 0.0
    %897 = vmatpush1.msra.mxu0 0.0
    %898 = vmatprep.subr.mxu0 0.0
    %899 = vmatpush1.msra.mxu0 0.0
    %900 = vmatprep.subr.mxu0 0.0
    %901 = vmatpush1.msra.mxu0 0.0
    %902 = vmatprep.subr.mxu0 0.0
    %903 = vmatpush1.msra.mxu0 0.0
    %904 = vmatprep.subr.mxu0 0.0
    %905 = vmatpush1.msra.mxu0 0.0
    %906 = vmatprep.subr.mxu0 0.0
    %907 = vmatpush1.msra.mxu0 0.0
    %908 = vmatprep.subr.mxu0 0.0
    %909 = vmatpush1.msra.mxu0 0.0
    %910 = vmatprep.subr.mxu0 0.0
    %911 = vmatpush1.msra.mxu0 0.0
    %912 = vmatprep.subr.mxu0 0.0
    %913 = vmatpush1.msra.mxu0 0.0
    %914 = vmatprep.subr.mxu0 0.0
    %915 = vmatpush1.msra.mxu0 0.0
    %916 = vmatprep.subr.mxu0 0.0
    %917 = vmatpush1.msra.mxu0 0.0
    %918 = vmatprep.subr.mxu0 0.0
    %919 = vmatpush1.msra.mxu0 0.0
    %920 = vmatprep.subr.mxu0 0.0
    %921 = vmatpush1.msra.mxu0 0.0
    %922 = vmatprep.subr.mxu0 0.0
    %923 = vmatpush1.msra.mxu0 0.0
    %924 = vmatprep.subr.mxu0 0.0
    %925 = vmatpush1.msra.mxu0 0.0
    %926 = vmatprep.subr.mxu0 0.0
    %927 = vmatpush1.msra.mxu0 0.0
    %928 = vmatprep.subr.mxu0 0.0
    %929 = vmatpush1.msra.mxu0 0.0
    %930 = vmatprep.subr.mxu0 0.0
    %931 = vmatpush1.msra.mxu0 0.0
    %932 = vmatprep.subr.mxu0 0.0
    %933 = vmatpush1.msra.mxu0 0.0
    %934 = vmatprep.mubr.f32.mxu0 0.0
    %935 = vmatmul.mubr.f32.gmra.mrb[0].mxu0 %v797
    %v936 = vpop.f32.mrb[0].mxu0
    %v937 = vadd.f32 0.0, %v936
    %v938 = vpop.f32.mrb[0].mxu0
    %939 = vdwg.mxu0
    %v942 = vrot.slane %v793, 7
    %v943 = vsel %vm259, %v942, %v792
    %v944 = vsel %vm261, %v943, 0
    %946 = vmatprep.subr.mxu0 %v86
    %947 = vmatpush1.msra.mxu0 %v85
    %948 = vmatprep.subr.mxu0 %v89
    %949 = vmatpush1.msra.mxu0 %v88
    %950 = vmatprep.subr.mxu0 0.0
    %951 = vmatpush1.msra.mxu0 0.0
    %952 = vmatprep.subr.mxu0 0.0
    %953 = vmatpush1.msra.mxu0 0.0
    %954 = vmatprep.subr.mxu0 0.0
    %955 = vmatpush1.msra.mxu0 0.0
    %956 = vmatprep.subr.mxu0 0.0
    %957 = vmatpush1.msra.mxu0 0.0
    %958 = vmatprep.subr.mxu0 0.0
    %959 = vmatpush1.msra.mxu0 0.0
    %960 = vmatprep.subr.mxu0 0.0
    %961 = vmatpush1.msra.mxu0 0.0
    %962 = vmatprep.subr.mxu0 0.0
    %963 = vmatpush1.msra.mxu0 0.0
    %964 = vmatprep.subr.mxu0 0.0
    %965 = vmatpush1.msra.mxu0 0.0
    %966 = vmatprep.subr.mxu0 0.0
    %967 = vmatpush1.msra.mxu0 0.0
    %968 = vmatprep.subr.mxu0 0.0
    %969 = vmatpush1.msra.mxu0 0.0
    %970 = vmatprep.subr.mxu0 0.0
    %971 = vmatpush1.msra.mxu0 0.0
    %972 = vmatprep.subr.mxu0 0.0
    %973 = vmatpush1.msra.mxu0 0.0
    %974 = vmatprep.subr.mxu0 0.0
    %975 = vmatpush1.msra.mxu0 0.0
    %976 = vmatprep.subr.mxu0 0.0
    %977 = vmatpush1.msra.mxu0 0.0
    %978 = vmatprep.subr.mxu0 0.0
    %979 = vmatpush1.msra.mxu0 0.0
    %980 = vmatprep.subr.mxu0 0.0
    %981 = vmatpush1.msra.mxu0 0.0
    %982 = vmatprep.subr.mxu0 0.0
    %983 = vmatpush1.msra.mxu0 0.0
    %984 = vmatprep.subr.mxu0 0.0
    %985 = vmatpush1.msra.mxu0 0.0
    %986 = vmatprep.subr.mxu0 0.0
    %987 = vmatpush1.msra.mxu0 0.0
    %988 = vmatprep.subr.mxu0 0.0
    %989 = vmatpush1.msra.mxu0 0.0
    %990 = vmatprep.subr.mxu0 0.0
    %991 = vmatpush1.msra.mxu0 0.0
    %992 = vmatprep.subr.mxu0 0.0
    %993 = vmatpush1.msra.mxu0 0.0
    %994 = vmatprep.subr.mxu0 0.0
    %995 = vmatpush1.msra.mxu0 0.0
    %996 = vmatprep.subr.mxu0 0.0
    %997 = vmatpush1.msra.mxu0 0.0
    %998 = vmatprep.subr.mxu0 0.0
    %999 = vmatpush1.msra.mxu0 0.0
    %1000 = vmatprep.subr.mxu0 0.0
    %1001 = vmatpush1.msra.mxu0 0.0
    %1002 = vmatprep.subr.mxu0 0.0
    %1003 = vmatpush1.msra.mxu0 0.0
    %1004 = vmatprep.subr.mxu0 0.0
    %1005 = vmatpush1.msra.mxu0 0.0
    %1006 = vmatprep.subr.mxu0 0.0
    %1007 = vmatpush1.msra.mxu0 0.0
    %1008 = vmatprep.subr.mxu0 0.0
    %1009 = vmatpush1.msra.mxu0 0.0
    %1010 = vmatprep.mubr.f32.mxu0 0.0
    %1011 = vmatmul.mubr.f32.gmra.mrb[0].mxu0 %v944
    %v1012 = vpop.f32.mrb[0].mxu0
    %v1013 = vadd.f32 %v866, %v1012
    %v1014 = vpop.f32.mrb[0].mxu0
    %v1015 = vadd.f32 %v868, %v1014
    %1016 = vdwg.mxu0
    %1017 = vmatprep.subr.mxu0 0.0
    %1018 = vmatpush1.msra.mxu0 %v87
    %1019 = vmatprep.subr.mxu0 0.0
    %1020 = vmatpush1.msra.mxu0 %v90
    %1021 = vmatprep.subr.mxu0 0.0
    %1022 = vmatpush1.msra.mxu0 0.0
    %1023 = vmatprep.subr.mxu0 0.0
    %1024 = vmatpush1.msra.mxu0 0.0
    %1025 = vmatprep.subr.mxu0 0.0
    %1026 = vmatpush1.msra.mxu0 0.0
    %1027 = vmatprep.subr.mxu0 0.0
    %1028 = vmatpush1.msra.mxu0 0.0
    %1029 = vmatprep.subr.mxu0 0.0
    %1030 = vmatpush1.msra.mxu0 0.0
    %1031 = vmatprep.subr.mxu0 0.0
    %1032 = vmatpush1.msra.mxu0 0.0
    %1033 = vmatprep.subr.mxu0 0.0
    %1034 = vmatpush1.msra.mxu0 0.0
    %1035 = vmatprep.subr.mxu0 0.0
    %1036 = vmatpush1.msra.mxu0 0.0
    %1037 = vmatprep.subr.mxu0 0.0
    %1038 = vmatpush1.msra.mxu0 0.0
    %1039 = vmatprep.subr.mxu0 0.0
    %1040 = vmatpush1.msra.mxu0 0.0
    %1041 = vmatprep.subr.mxu0 0.0
    %1042 = vmatpush1.msra.mxu0 0.0
    %1043 = vmatprep.subr.mxu0 0.0
    %1044 = vmatpush1.msra.mxu0 0.0
    %1045 = vmatprep.subr.mxu0 0.0
    %1046 = vmatpush1.msra.mxu0 0.0
    %1047 = vmatprep.subr.mxu0 0.0
    %1048 = vmatpush1.msra.mxu0 0.0
    %1049 = vmatprep.subr.mxu0 0.0
    %1050 = vmatpush1.msra.mxu0 0.0
    %1051 = vmatprep.subr.mxu0 0.0
    %1052 = vmatpush1.msra.mxu0 0.0
    %1053 = vmatprep.subr.mxu0 0.0
    %1054 = vmatpush1.msra.mxu0 0.0
    %1055 = vmatprep.subr.mxu0 0.0
    %1056 = vmatpush1.msra.mxu0 0.0
    %1057 = vmatprep.subr.mxu0 0.0
    %1058 = vmatpush1.msra.mxu0 0.0
    %1059 = vmatprep.subr.mxu0 0.0
    %1060 = vmatpush1.msra.mxu0 0.0
    %1061 = vmatprep.subr.mxu0 0.0
    %1062 = vmatpush1.msra.mxu0 0.0
    %1063 = vmatprep.subr.mxu0 0.0
    %1064 = vmatpush1.msra.mxu0 0.0
    %1065 = vmatprep.subr.mxu0 0.0
    %1066 = vmatpush1.msra.mxu0 0.0
    %1067 = vmatprep.subr.mxu0 0.0
    %1068 = vmatpush1.msra.mxu0 0.0
    %1069 = vmatprep.subr.mxu0 0.0
    %1070 = vmatpush1.msra.mxu0 0.0
    %1071 = vmatprep.subr.mxu0 0.0
    %1072 = vmatpush1.msra.mxu0 0.0
    %1073 = vmatprep.subr.mxu0 0.0
    %1074 = vmatpush1.msra.mxu0 0.0
    %1075 = vmatprep.subr.mxu0 0.0
    %1076 = vmatpush1.msra.mxu0 0.0
    %1077 = vmatprep.subr.mxu0 0.0
    %1078 = vmatpush1.msra.mxu0 0.0
    %1079 = vmatprep.subr.mxu0 0.0
    %1080 = vmatpush1.msra.mxu0 0.0
    %1081 = vmatprep.mubr.f32.mxu0 0.0
    %1082 = vmatmul.mubr.f32.gmra.mrb[0].mxu0 %v944
    %v1083 = vpop.f32.mrb[0].mxu0
    %v1084 = vadd.f32 %v937, %v1083
    %v1085 = vpop.f32.mrb[0].mxu0
    %1086 = vdwg.mxu0
    %1088 = vrot.lane.b32.xlu0 %v791, 32
    %v1089 = vpop.permute.xlu0 %1088
    %v1090 = vsel %vm182, %v1089, 0
    %1092 = vmatprep.subr.mxu0 %v104
    %1093 = vmatpush1.msra.mxu0 %v103
    %1094 = vmatprep.subr.mxu0 %v107
    %1095 = vmatpush1.msra.mxu0 %v106
    %1096 = vmatprep.subr.mxu0 %v110
    %1097 = vmatpush1.msra.mxu0 %v109
    %1098 = vmatprep.subr.mxu0 %v113
    %1099 = vmatpush1.msra.mxu0 %v112
    %1100 = vmatprep.subr.mxu0 0.0
    %1101 = vmatpush1.msra.mxu0 0.0
    %1102 = vmatprep.subr.mxu0 0.0
    %1103 = vmatpush1.msra.mxu0 0.0
    %1104 = vmatprep.subr.mxu0 0.0
    %1105 = vmatpush1.msra.mxu0 0.0
    %1106 = vmatprep.subr.mxu0 0.0
    %1107 = vmatpush1.msra.mxu0 0.0
    %1108 = vmatprep.subr.mxu0 0.0
    %1109 = vmatpush1.msra.mxu0 0.0
    %1110 = vmatprep.subr.mxu0 0.0
    %1111 = vmatpush1.msra.mxu0 0.0
    %1112 = vmatprep.subr.mxu0 0.0
    %1113 = vmatpush1.msra.mxu0 0.0
    %1114 = vmatprep.subr.mxu0 0.0
    %1115 = vmatpush1.msra.mxu0 0.0
    %1116 = vmatprep.subr.mxu0 0.0
    %1117 = vmatpush1.msra.mxu0 0.0
    %1118 = vmatprep.subr.mxu0 0.0
    %1119 = vmatpush1.msra.mxu0 0.0
    %1120 = vmatprep.subr.mxu0 0.0
    %1121 = vmatpush1.msra.mxu0 0.0
    %1122 = vmatprep.subr.mxu0 0.0
    %1123 = vmatpush1.msra.mxu0 0.0
    %1124 = vmatprep.subr.mxu0 0.0
    %1125 = vmatpush1.msra.mxu0 0.0
    %1126 = vmatprep.subr.mxu0 0.0
    %1127 = vmatpush1.msra.mxu0 0.0
    %1128 = vmatprep.subr.mxu0 0.0
    %1129 = vmatpush1.msra.mxu0 0.0
    %1130 = vmatprep.subr.mxu0 0.0
    %1131 = vmatpush1.msra.mxu0 0.0
    %1132 = vmatprep.subr.mxu0 0.0
    %1133 = vmatpush1.msra.mxu0 0.0
    %1134 = vmatprep.subr.mxu0 0.0
    %1135 = vmatpush1.msra.mxu0 0.0
    %1136 = vmatprep.subr.mxu0 0.0
    %1137 = vmatpush1.msra.mxu0 0.0
    %1138 = vmatprep.subr.mxu0 0.0
    %1139 = vmatpush1.msra.mxu0 0.0
    %1140 = vmatprep.subr.mxu0 0.0
    %1141 = vmatpush1.msra.mxu0 0.0
    %1142 = vmatprep.subr.mxu0 0.0
    %1143 = vmatpush1.msra.mxu0 0.0
    %1144 = vmatprep.subr.mxu0 0.0
    %1145 = vmatpush1.msra.mxu0 0.0
    %1146 = vmatprep.subr.mxu0 0.0
    %1147 = vmatpush1.msra.mxu0 0.0
    %1148 = vmatprep.subr.mxu0 0.0
    %1149 = vmatpush1.msra.mxu0 0.0
    %1150 = vmatprep.subr.mxu0 0.0
    %1151 = vmatpush1.msra.mxu0 0.0
    %1152 = vmatprep.subr.mxu0 0.0
    %1153 = vmatpush1.msra.mxu0 0.0
    %1154 = vmatprep.subr.mxu0 0.0
    %1155 = vmatpush1.msra.mxu0 0.0
    %1156 = vmatprep.mubr.f32.mxu0 0.0
    %1157 = vmatmul.mubr.f32.gmra.mrb[0].mxu0 %v1090
    %v1158 = vpop.f32.mrb[0].mxu0
    %v1159 = vadd.f32 0.0, %v1158
    %v1160 = vpop.f32.mrb[0].mxu0
    %v1161 = vadd.f32 0.0, %v1160
    %1162 = vdwg.mxu0
    %1163 = vmatprep.subr.mxu0 0.0
    %1164 = vmatpush1.msra.mxu0 %v105
    %1165 = vmatprep.subr.mxu0 0.0
    %1166 = vmatpush1.msra.mxu0 %v108
    %1167 = vmatprep.subr.mxu0 0.0
    %1168 = vmatpush1.msra.mxu0 %v111
    %1169 = vmatprep.subr.mxu0 0.0
    %1170 = vmatpush1.msra.mxu0 %v114
    %1171 = vmatprep.subr.mxu0 0.0
    %1172 = vmatpush1.msra.mxu0 0.0
    %1173 = vmatprep.subr.mxu0 0.0
    %1174 = vmatpush1.msra.mxu0 0.0
    %1175 = vmatprep.subr.mxu0 0.0
    %1176 = vmatpush1.msra.mxu0 0.0
    %1177 = vmatprep.subr.mxu0 0.0
    %1178 = vmatpush1.msra.mxu0 0.0
    %1179 = vmatprep.subr.mxu0 0.0
    %1180 = vmatpush1.msra.mxu0 0.0
    %1181 = vmatprep.subr.mxu0 0.0
    %1182 = vmatpush1.msra.mxu0 0.0
    %1183 = vmatprep.subr.mxu0 0.0
    %1184 = vmatpush1.msra.mxu0 0.0
    %1185 = vmatprep.subr.mxu0 0.0
    %1186 = vmatpush1.msra.mxu0 0.0
    %1187 = vmatprep.subr.mxu0 0.0
    %1188 = vmatpush1.msra.mxu0 0.0
    %1189 = vmatprep.subr.mxu0 0.0
    %1190 = vmatpush1.msra.mxu0 0.0
    %1191 = vmatprep.subr.mxu0 0.0
    %1192 = vmatpush1.msra.mxu0 0.0
    %1193 = vmatprep.subr.mxu0 0.0
    %1194 = vmatpush1.msra.mxu0 0.0
    %1195 = vmatprep.subr.mxu0 0.0
    %1196 = vmatpush1.msra.mxu0 0.0
    %1197 = vmatprep.subr.mxu0 0.0
    %1198 = vmatpush1.msra.mxu0 0.0
    %1199 = vmatprep.subr.mxu0 0.0
    %1200 = vmatpush1.msra.mxu0 0.0
    %1201 = vmatprep.subr.mxu0 0.0
    %1202 = vmatpush1.msra.mxu0 0.0
    %1203 = vmatprep.subr.mxu0 0.0
    %1204 = vmatpush1.msra.mxu0 0.0
    %1205 = vmatprep.subr.mxu0 0.0
    %1206 = vmatpush1.msra.mxu0 0.0
    %1207 = vmatprep.subr.mxu0 0.0
    %1208 = vmatpush1.msra.mxu0 0.0
    %1209 = vmatprep.subr.mxu0 0.0
    %1210 = vmatpush1.msra.mxu0 0.0
    %1211 = vmatprep.subr.mxu0 0.0
    %1212 = vmatpush1.msra.mxu0 0.0
    %1213 = vmatprep.subr.mxu0 0.0
    %1214 = vmatpush1.msra.mxu0 0.0
    %1215 = vmatprep.subr.mxu0 0.0
    %1216 = vmatpush1.msra.mxu0 0.0
    %1217 = vmatprep.subr.mxu0 0.0
    %1218 = vmatpush1.msra.mxu0 0.0
    %1219 = vmatprep.subr.mxu0 0.0
    %1220 = vmatpush1.msra.mxu0 0.0
    %1221 = vmatprep.subr.mxu0 0.0
    %1222 = vmatpush1.msra.mxu0 0.0
    %1223 = vmatprep.subr.mxu0 0.0
    %1224 = vmatpush1.msra.mxu0 0.0
    %1225 = vmatprep.subr.mxu0 0.0
    %1226 = vmatpush1.msra.mxu0 0.0
    %1227 = vmatprep.mubr.f32.mxu0 0.0
    %1228 = vmatmul.mubr.f32.gmra.mrb[0].mxu0 %v1090
    %v1229 = vpop.f32.mrb[0].mxu0
    %v1230 = vadd.f32 0.0, %v1229
    %v1231 = vpop.f32.mrb[0].mxu0
    %1232 = vdwg.mxu0
    %v1233 = vadd.f32 %v1013, %v1159
    %v1234 = vadd.f32 %v1015, %v1161
    %v1235 = vadd.f32 %v1084, %v1230
    %v1236 = vadd.f32 %v1233, %v473
    %v1237 = vadd.f32 %v1234, %v475
    %v1238 = vadd.f32 %v1235, %v544
    %v1239 = vadd.f32 %v1236, %v552
    %v1240 = vadd.f32 %v1237, %v556
    %v1241 = vadd.f32 %v1238, %v560
    %v1242 = vmul.f32 %v1239, %v177
    %v1243 = vmul.f32 %v1240, %v178
    %v1244 = vmul.f32 %v1241, %v179
    %v1245 = vtanh.pop %v1242
    %v1246 = vtanh.pop %v1243
    %v1247 = vtanh.pop %v1244
    %v1248 = vmul.f32 %v1245, 0.5
    %v1249 = vmul.f32 %v1246, 0.5
    %v1250 = vmul.f32 %v1247, 0.5
    %v1251 = vadd.f32 %v1248, 0.5
    %v1252 = vadd.f32 %v1249, 0.5
    %v1253 = vadd.f32 %v1250, 0.5
    %v1254 = vsel %vm174, %v1245, %v1251
    %v1255 = vsel %vm175, %v1246, %v1252
    %v1256 = vsel %vm176, %v1247, %v1253
    %v1257 = vmul.f32 %v1254, %v768
    %1259 = vrot.lane.b32.xlu0 %v1254, 64
    %v1260 = vpop.permute.xlu0 %1259
    %v1262 = vmul.f32 %v1254, %v1260
    %1264 = vrot.lane.b32.xlu0 %v1262, 32
    %v1265 = vpop.permute.xlu0 %1264
    %v1267 = vadd.f32 %v1257, %v1265
    %v1268 = vtanh.pop %v1267
    %1270 = vrot.lane.b32.xlu0 %v1268, 64
    %v1271 = vpop.permute.xlu0 %1270
    %v1273 = vmul.f32 %v1254, %v1271
    %v1274 = vmul.f32 %v1255, %v785
    %1276 = vrot.lane.b32.xlu0 %v1255, 64
    %v1277 = vpop.permute.xlu0 %1276
    %v1279 = vmul.f32 %v1255, %v1277
    %1281 = vrot.lane.b32.xlu0 %v1279, 32
    %v1282 = vpop.permute.xlu0 %1281
    %v1284 = vadd.f32 %v1274, %v1282
    %v1285 = vtanh.pop %v1284
    %1287 = vrot.lane.b32.xlu0 %v1285, 64
    %v1288 = vpop.permute.xlu0 %1287
    %v1290 = vmul.f32 %v1255, %v1288
    %v1291 = vmul.f32 %v1256, 0.0
    %1293 = vrot.lane.b32.xlu0 %v1256, 64
    %v1294 = vpop.permute.xlu0 %1293
    %v1296 = vmul.f32 %v1256, %v1294
    %1298 = vrot.lane.b32.xlu0 %v1296, 32
    %v1299 = vpop.permute.xlu0 %1298
    %v1301 = vadd.f32 %v1291, %v1299
    %v1302 = vtanh.pop %v1301
    %1304 = vrot.lane.b32.xlu0 %v1302, 64
    %v1305 = vpop.permute.xlu0 %1304
    %v1307 = vmul.f32 %v1256, %v1305
    %v1308 = vld [vmem:[#allocation2 + $0x3] sm:$0x1]
    %v1309 = vld [vmem:[#allocation2 + $0xb] sm:$0x1]
    %1311 = vrot.lane.b32.xlu0 %v1273, 32
    %v1312 = vpop.permute.xlu0 %1311
    %v1313 = vsel %vm182, %v1312, 0
    %1315 = vmatprep.subr.mxu0 %v92
    %1316 = vmatpush1.msra.mxu0 %v91
    %1317 = vmatprep.subr.mxu0 %v95
    %1318 = vmatpush1.msra.mxu0 %v94
    %1319 = vmatprep.subr.mxu0 %v98
    %1320 = vmatpush1.msra.mxu0 %v97
    %1321 = vmatprep.subr.mxu0 %v101
    %1322 = vmatpush1.msra.mxu0 %v100
    %1323 = vmatprep.subr.mxu0 0.0
    %1324 = vmatpush1.msra.mxu0 0.0
    %1325 = vmatprep.subr.mxu0 0.0
    %1326 = vmatpush1.msra.mxu0 0.0
    %1327 = vmatprep.subr.mxu0 0.0
    %1328 = vmatpush1.msra.mxu0 0.0
    %1329 = vmatprep.subr.mxu0 0.0
    %1330 = vmatpush1.msra.mxu0 0.0
    %1331 = vmatprep.subr.mxu0 0.0
    %1332 = vmatpush1.msra.mxu0 0.0
    %1333 = vmatprep.subr.mxu0 0.0
    %1334 = vmatpush1.msra.mxu0 0.0
    %1335 = vmatprep.subr.mxu0 0.0
    %1336 = vmatpush1.msra.mxu0 0.0
    %1337 = vmatprep.subr.mxu0 0.0
    %1338 = vmatpush1.msra.mxu0 0.0
    %1339 = vmatprep.subr.mxu0 0.0
    %1340 = vmatpush1.msra.mxu0 0.0
    %1341 = vmatprep.subr.mxu0 0.0
    %1342 = vmatpush1.msra.mxu0 0.0
    %1343 = vmatprep.subr.mxu0 0.0
    %1344 = vmatpush1.msra.mxu0 0.0
    %1345 = vmatprep.subr.mxu0 0.0
    %1346 = vmatpush1.msra.mxu0 0.0
    %1347 = vmatprep.subr.mxu0 0.0
    %1348 = vmatpush1.msra.mxu0 0.0
    %1349 = vmatprep.subr.mxu0 0.0
    %1350 = vmatpush1.msra.mxu0 0.0
    %1351 = vmatprep.subr.mxu0 0.0
    %1352 = vmatpush1.msra.mxu0 0.0
    %1353 = vmatprep.subr.mxu0 0.0
    %1354 = vmatpush1.msra.mxu0 0.0
    %1355 = vmatprep.subr.mxu0 0.0
    %1356 = vmatpush1.msra.mxu0 0.0
    %1357 = vmatprep.subr.mxu0 0.0
    %1358 = vmatpush1.msra.mxu0 0.0
    %1359 = vmatprep.subr.mxu0 0.0
    %1360 = vmatpush1.msra.mxu0 0.0
    %1361 = vmatprep.subr.mxu0 0.0
    %1362 = vmatpush1.msra.mxu0 0.0
    %1363 = vmatprep.subr.mxu0 0.0
    %1364 = vmatpush1.msra.mxu0 0.0
    %1365 = vmatprep.subr.mxu0 0.0
    %1366 = vmatpush1.msra.mxu0 0.0
    %1367 = vmatprep.subr.mxu0 0.0
    %1368 = vmatpush1.msra.mxu0 0.0
    %1369 = vmatprep.subr.mxu0 0.0
    %1370 = vmatpush1.msra.mxu0 0.0
    %1371 = vmatprep.subr.mxu0 0.0
    %1372 = vmatpush1.msra.mxu0 0.0
    %1373 = vmatprep.subr.mxu0 0.0
    %1374 = vmatpush1.msra.mxu0 0.0
    %1375 = vmatprep.subr.mxu0 0.0
    %1376 = vmatpush1.msra.mxu0 0.0
    %1377 = vmatprep.subr.mxu0 0.0
    %1378 = vmatpush1.msra.mxu0 0.0
    %1379 = vmatprep.mubr.f32.mxu0 0.0
    %1380 = vmatmul.mubr.f32.gmra.mrb[0].mxu0 %v1313
    %v1381 = vpop.f32.mrb[0].mxu0
    %v1382 = vadd.f32 0.0, %v1381
    %v1383 = vpop.f32.mrb[0].mxu0
    %v1384 = vadd.f32 0.0, %v1383
    %1385 = vdwg.mxu0
    %1386 = vmatprep.subr.mxu0 0.0
    %1387 = vmatpush1.msra.mxu0 %v93
    %1388 = vmatprep.subr.mxu0 0.0
    %1389 = vmatpush1.msra.mxu0 %v96
    %1390 = vmatprep.subr.mxu0 0.0
    %1391 = vmatpush1.msra.mxu0 %v99
    %1392 = vmatprep.subr.mxu0 0.0
    %1393 = vmatpush1.msra.mxu0 %v102
    %1394 = vmatprep.subr.mxu0 0.0
    %1395 = vmatpush1.msra.mxu0 0.0
    %1396 = vmatprep.subr.mxu0 0.0
    %1397 = vmatpush1.msra.mxu0 0.0
    %1398 = vmatprep.subr.mxu0 0.0
    %1399 = vmatpush1.msra.mxu0 0.0
    %1400 = vmatprep.subr.mxu0 0.0
    %1401 = vmatpush1.msra.mxu0 0.0
    %1402 = vmatprep.subr.mxu0 0.0
    %1403 = vmatpush1.msra.mxu0 0.0
    %1404 = vmatprep.subr.mxu0 0.0
    %1405 = vmatpush1.msra.mxu0 0.0
    %1406 = vmatprep.subr.mxu0 0.0
    %1407 = vmatpush1.msra.mxu0 0.0
    %1408 = vmatprep.subr.mxu0 0.0
    %1409 = vmatpush1.msra.mxu0 0.0
    %1410 = vmatprep.subr.mxu0 0.0
    %1411 = vmatpush1.msra.mxu0 0.0
    %1412 = vmatprep.subr.mxu0 0.0
    %1413 = vmatpush1.msra.mxu0 0.0
    %1414 = vmatprep.subr.mxu0 0.0
    %1415 = vmatpush1.msra.mxu0 0.0
    %1416 = vmatprep.subr.mxu0 0.0
    %1417 = vmatpush1.msra.mxu0 0.0
    %1418 = vmatprep.subr.mxu0 0.0
    %1419 = vmatpush1.msra.mxu0 0.0
    %1420 = vmatprep.subr.mxu0 0.0
    %1421 = vmatpush1.msra.mxu0 0.0
    %1422 = vmatprep.subr.mxu0 0.0
    %1423 = vmatpush1.msra.mxu0 0.0
    %1424 = vmatprep.subr.mxu0 0.0
    %1425 = vmatpush1.msra.mxu0 0.0
    %1426 = vmatprep.subr.mxu0 0.0
    %1427 = vmatpush1.msra.mxu0 0.0
    %1428 = vmatprep.subr.mxu0 0.0
    %1429 = vmatpush1.msra.mxu0 0.0
    %1430 = vmatprep.subr.mxu0 0.0
    %1431 = vmatpush1.msra.mxu0 0.0
    %1432 = vmatprep.subr.mxu0 0.0
    %1433 = vmatpush1.msra.mxu0 0.0
    %1434 = vmatprep.subr.mxu0 0.0
    %1435 = vmatpush1.msra.mxu0 0.0
    %1436 = vmatprep.subr.mxu0 0.0
    %1437 = vmatpush1.msra.mxu0 0.0
    %1438 = vmatprep.subr.mxu0 0.0
    %1439 = vmatpush1.msra.mxu0 0.0
    %1440 = vmatprep.subr.mxu0 0.0
    %1441 = vmatpush1.msra.mxu0 0.0
    %1442 = vmatprep.subr.mxu0 0.0
    %1443 = vmatpush1.msra.mxu0 0.0
    %1444 = vmatprep.subr.mxu0 0.0
    %1445 = vmatpush1.msra.mxu0 0.0
    %1446 = vmatprep.subr.mxu0 0.0
    %1447 = vmatpush1.msra.mxu0 0.0
    %1448 = vmatprep.subr.mxu0 0.0
    %1449 = vmatpush1.msra.mxu0 0.0
    %1450 = vmatprep.mubr.f32.mxu0 0.0
    %1451 = vmatmul.mubr.f32.gmra.mrb[0].mxu0 %v1313
    %v1452 = vpop.f32.mrb[0].mxu0
    %v1453 = vadd.f32 0.0, %v1452
    %v1454 = vpop.f32.mrb[0].mxu0
    %1455 = vdwg.mxu0
    %v1458 = vrot.slane %v1309, 7
    %v1459 = vsel %vm259, %v1458, %v1308
    %v1460 = vsel %vm261, %v1459, 0
    %1462 = vmatprep.subr.mxu0 %v86
    %1463 = vmatpush1.msra.mxu0 %v85
    %1464 = vmatprep.subr.mxu0 %v89
    %1465 = vmatpush1.msra.mxu0 %v88
    %1466 = vmatprep.subr.mxu0 0.0
    %1467 = vmatpush1.msra.mxu0 0.0
    %1468 = vmatprep.subr.mxu0 0.0
    %1469 = vmatpush1.msra.mxu0 0.0
    %1470 = vmatprep.subr.mxu0 0.0
    %1471 = vmatpush1.msra.mxu0 0.0
    %1472 = vmatprep.subr.mxu0 0.0
    %1473 = vmatpush1.msra.mxu0 0.0
    %1474 = vmatprep.subr.mxu0 0.0
    %1475 = vmatpush1.msra.mxu0 0.0
    %1476 = vmatprep.subr.mxu0 0.0
    %1477 = vmatpush1.msra.mxu0 0.0
    %1478 = vmatprep.subr.mxu0 0.0
    %1479 = vmatpush1.msra.mxu0 0.0
    %1480 = vmatprep.subr.mxu0 0.0
    %1481 = vmatpush1.msra.mxu0 0.0
    %1482 = vmatprep.subr.mxu0 0.0
    %1483 = vmatpush1.msra.mxu0 0.0
    %1484 = vmatprep.subr.mxu0 0.0
    %1485 = vmatpush1.msra.mxu0 0.0
    %1486 = vmatprep.subr.mxu0 0.0
    %1487 = vmatpush1.msra.mxu0 0.0
    %1488 = vmatprep.subr.mxu0 0.0
    %1489 = vmatpush1.msra.mxu0 0.0
    %1490 = vmatprep.subr.mxu0 0.0
    %1491 = vmatpush1.msra.mxu0 0.0
    %1492 = vmatprep.subr.mxu0 0.0
    %1493 = vmatpush1.msra.mxu0 0.0
    %1494 = vmatprep.subr.mxu0 0.0
    %1495 = vmatpush1.msra.mxu0 0.0
    %1496 = vmatprep.subr.mxu0 0.0
    %1497 = vmatpush1.msra.mxu0 0.0
    %1498 = vmatprep.subr.mxu0 0.0
    %1499 = vmatpush1.msra.mxu0 0.0
    %1500 = vmatprep.subr.mxu0 0.0
    %1501 = vmatpush1.msra.mxu0 0.0
    %1502 = vmatprep.subr.mxu0 0.0
    %1503 = vmatpush1.msra.mxu0 0.0
    %1504 = vmatprep.subr.mxu0 0.0
    %1505 = vmatpush1.msra.mxu0 0.0
    %1506 = vmatprep.subr.mxu0 0.0
    %1507 = vmatpush1.msra.mxu0 0.0
    %1508 = vmatprep.subr.mxu0 0.0
    %1509 = vmatpush1.msra.mxu0 0.0
    %1510 = vmatprep.subr.mxu0 0.0
    %1511 = vmatpush1.msra.mxu0 0.0
    %1512 = vmatprep.subr.mxu0 0.0
    %1513 = vmatpush1.msra.mxu0 0.0
    %1514 = vmatprep.subr.mxu0 0.0
    %1515 = vmatpush1.msra.mxu0 0.0
    %1516 = vmatprep.subr.mxu0 0.0
    %1517 = vmatpush1.msra.mxu0 0.0
    %1518 = vmatprep.subr.mxu0 0.0
    %1519 = vmatpush1.msra.mxu0 0.0
    %1520 = vmatprep.subr.mxu0 0.0
    %1521 = vmatpush1.msra.mxu0 0.0
    %1522 = vmatprep.subr.mxu0 0.0
    %1523 = vmatpush1.msra.mxu0 0.0
    %1524 = vmatprep.subr.mxu0 0.0
    %1525 = vmatpush1.msra.mxu0 0.0
    %1526 = vmatprep.mubr.f32.mxu0 0.0
    %1527 = vmatmul.mubr.f32.gmra.mrb[0].mxu0 %v1460
    %v1528 = vpop.f32.mrb[0].mxu0
    %v1529 = vadd.f32 %v1382, %v1528
    %v1530 = vpop.f32.mrb[0].mxu0
    %v1531 = vadd.f32 %v1384, %v1530
    %1532 = vdwg.mxu0
    %1533 = vmatprep.subr.mxu0 0.0
    %1534 = vmatpush1.msra.mxu0 %v87
    %1535 = vmatprep.subr.mxu0 0.0
    %1536 = vmatpush1.msra.mxu0 %v90
    %1537 = vmatprep.subr.mxu0 0.0
    %1538 = vmatpush1.msra.mxu0 0.0
    %1539 = vmatprep.subr.mxu0 0.0
    %1540 = vmatpush1.msra.mxu0 0.0
    %1541 = vmatprep.subr.mxu0 0.0
    %1542 = vmatpush1.msra.mxu0 0.0
    %1543 = vmatprep.subr.mxu0 0.0
    %1544 = vmatpush1.msra.mxu0 0.0
    %1545 = vmatprep.subr.mxu0 0.0
    %1546 = vmatpush1.msra.mxu0 0.0
    %1547 = vmatprep.subr.mxu0 0.0
    %1548 = vmatpush1.msra.mxu0 0.0
    %1549 = vmatprep.subr.mxu0 0.0
    %1550 = vmatpush1.msra.mxu0 0.0
    %1551 = vmatprep.subr.mxu0 0.0
    %1552 = vmatpush1.msra.mxu0 0.0
    %1553 = vmatprep.subr.mxu0 0.0
    %1554 = vmatpush1.msra.mxu0 0.0
    %1555 = vmatprep.subr.mxu0 0.0
    %1556 = vmatpush1.msra.mxu0 0.0
    %1557 = vmatprep.subr.mxu0 0.0
    %1558 = vmatpush1.msra.mxu0 0.0
    %1559 = vmatprep.subr.mxu0 0.0
    %1560 = vmatpush1.msra.mxu0 0.0
    %1561 = vmatprep.subr.mxu0 0.0
    %1562 = vmatpush1.msra.mxu0 0.0
    %1563 = vmatprep.subr.mxu0 0.0
    %1564 = vmatpush1.msra.mxu0 0.0
    %1565 = vmatprep.subr.mxu0 0.0
    %1566 = vmatpush1.msra.mxu0 0.0
    %1567 = vmatprep.subr.mxu0 0.0
    %1568 = vmatpush1.msra.mxu0 0.0
    %1569 = vmatprep.subr.mxu0 0.0
    %1570 = vmatpush1.msra.mxu0 0.0
    %1571 = vmatprep.subr.mxu0 0.0
    %1572 = vmatpush1.msra.mxu0 0.0
    %1573 = vmatprep.subr.mxu0 0.0
    %1574 = vmatpush1.msra.mxu0 0.0
    %1575 = vmatprep.subr.mxu0 0.0
    %1576 = vmatpush1.msra.mxu0 0.0
    %1577 = vmatprep.subr.mxu0 0.0
    %1578 = vmatpush1.msra.mxu0 0.0
    %1579 = vmatprep.subr.mxu0 0.0
    %1580 = vmatpush1.msra.mxu0 0.0
    %1581 = vmatprep.subr.mxu0 0.0
    %1582 = vmatpush1.msra.mxu0 0.0
    %1583 = vmatprep.subr.mxu0 0.0
    %1584 = vmatpush1.msra.mxu0 0.0
    %1585 = vmatprep.subr.mxu0 0.0
    %1586 = vmatpush1.msra.mxu0 0.0
    %1587 = vmatprep.subr.mxu0 0.0
    %1588 = vmatpush1.msra.mxu0 0.0
    %1589 = vmatprep.subr.mxu0 0.0
    %1590 = vmatpush1.msra.mxu0 0.0
    %1591 = vmatprep.subr.mxu0 0.0
    %1592 = vmatpush1.msra.mxu0 0.0
    %1593 = vmatprep.subr.mxu0 0.0
    %1594 = vmatpush1.msra.mxu0 0.0
    %1595 = vmatprep.subr.mxu0 0.0
    %1596 = vmatpush1.msra.mxu0 0.0
    %1597 = vmatprep.mubr.f32.mxu0 0.0
    %1598 = vmatmul.mubr.f32.gmra.mrb[0].mxu0 %v1460
    %v1599 = vpop.f32.mrb[0].mxu0
    %v1600 = vadd.f32 %v1453, %v1599
    %v1601 = vpop.f32.mrb[0].mxu0
    %1602 = vdwg.mxu0
    %1604 = vrot.lane.b32.xlu0 %v1290, 32
    %v1605 = vpop.permute.xlu0 %1604
    %v1606 = vsel %vm182, %v1605, 0
    %1608 = vmatprep.subr.mxu0 %v104
    %1609 = vmatpush1.msra.mxu0 %v103
    %1610 = vmatprep.subr.mxu0 %v107
    %1611 = vmatpush1.msra.mxu0 %v106
    %1612 = vmatprep.subr.mxu0 %v110
    %1613 = vmatpush1.msra.mxu0 %v109
    %1614 = vmatprep.subr.mxu0 %v113
    %1615 = vmatpush1.msra.mxu0 %v112
    %1616 = vmatprep.subr.mxu0 0.0
    %1617 = vmatpush1.msra.mxu0 0.0
    %1618 = vmatprep.subr.mxu0 0.0
    %1619 = vmatpush1.msra.mxu0 0.0
    %1620 = vmatprep.subr.mxu0 0.0
    %1621 = vmatpush1.msra.mxu0 0.0
    %1622 = vmatprep.subr.mxu0 0.0
    %1623 = vmatpush1.msra.mxu0 0.0
    %1624 = vmatprep.subr.mxu0 0.0
    %1625 = vmatpush1.msra.mxu0 0.0
    %1626 = vmatprep.subr.mxu0 0.0
    %1627 = vmatpush1.msra.mxu0 0.0
    %1628 = vmatprep.subr.mxu0 0.0
    %1629 = vmatpush1.msra.mxu0 0.0
    %1630 = vmatprep.subr.mxu0 0.0
    %1631 = vmatpush1.msra.mxu0 0.0
    %1632 = vmatprep.subr.mxu0 0.0
    %1633 = vmatpush1.msra.mxu0 0.0
    %1634 = vmatprep.subr.mxu0 0.0
    %1635 = vmatpush1.msra.mxu0 0.0
    %1636 = vmatprep.subr.mxu0 0.0
    %1637 = vmatpush1.msra.mxu0 0.0
    %1638 = vmatprep.subr.mxu0 0.0
    %1639 = vmatpush1.msra.mxu0 0.0
    %1640 = vmatprep.subr.mxu0 0.0
    %1641 = vmatpush1.msra.mxu0 0.0
    %1642 = vmatprep.subr.mxu0 0.0
    %1643 = vmatpush1.msra.mxu0 0.0
    %1644 = vmatprep.subr.mxu0 0.0
    %1645 = vmatpush1.msra.mxu0 0.0
    %1646 = vmatprep.subr.mxu0 0.0
    %1647 = vmatpush1.msra.mxu0 0.0
    %1648 = vmatprep.subr.mxu0 0.0
    %1649 = vmatpush1.msra.mxu0 0.0
    %1650 = vmatprep.subr.mxu0 0.0
    %1651 = vmatpush1.msra.mxu0 0.0
    %1652 = vmatprep.subr.mxu0 0.0
    %1653 = vmatpush1.msra.mxu0 0.0
    %1654 = vmatprep.subr.mxu0 0.0
    %1655 = vmatpush1.msra.mxu0 0.0
    %1656 = vmatprep.subr.mxu0 0.0
    %1657 = vmatpush1.msra.mxu0 0.0
    %1658 = vmatprep.subr.mxu0 0.0
    %1659 = vmatpush1.msra.mxu0 0.0
    %1660 = vmatprep.subr.mxu0 0.0
    %1661 = vmatpush1.msra.mxu0 0.0
    %1662 = vmatprep.subr.mxu0 0.0
    %1663 = vmatpush1.msra.mxu0 0.0
    %1664 = vmatprep.subr.mxu0 0.0
    %1665 = vmatpush1.msra.mxu0 0.0
    %1666 = vmatprep.subr.mxu0 0.0
    %1667 = vmatpush1.msra.mxu0 0.0
    %1668 = vmatprep.subr.mxu0 0.0
    %1669 = vmatpush1.msra.mxu0 0.0
    %1670 = vmatprep.subr.mxu0 0.0
    %1671 = vmatpush1.msra.mxu0 0.0
    %1672 = vmatprep.mubr.f32.mxu0 0.0
    %1673 = vmatmul.mubr.f32.gmra.mrb[0].mxu0 %v1606
    %v1674 = vpop.f32.mrb[0].mxu0
    %v1675 = vadd.f32 0.0, %v1674
    %v1676 = vpop.f32.mrb[0].mxu0
    %v1677 = vadd.f32 0.0, %v1676
    %1678 = vdwg.mxu0
    %1679 = vmatprep.subr.mxu0 0.0
    %1680 = vmatpush1.msra.mxu0 %v105
    %1681 = vmatprep.subr.mxu0 0.0
    %1682 = vmatpush1.msra.mxu0 %v108
    %1683 = vmatprep.subr.mxu0 0.0
    %1684 = vmatpush1.msra.mxu0 %v111
    %1685 = vmatprep.subr.mxu0 0.0
    %1686 = vmatpush1.msra.mxu0 %v114
    %1687 = vmatprep.subr.mxu0 0.0
    %1688 = vmatpush1.msra.mxu0 0.0
    %1689 = vmatprep.subr.mxu0 0.0
    %1690 = vmatpush1.msra.mxu0 0.0
    %1691 = vmatprep.subr.mxu0 0.0
    %1692 = vmatpush1.msra.mxu0 0.0
    %1693 = vmatprep.subr.mxu0 0.0
    %1694 = vmatpush1.msra.mxu0 0.0
    %1695 = vmatprep.subr.mxu0 0.0
    %1696 = vmatpush1.msra.mxu0 0.0
    %1697 = vmatprep.subr.mxu0 0.0
    %1698 = vmatpush1.msra.mxu0 0.0
    %1699 = vmatprep.subr.mxu0 0.0
    %1700 = vmatpush1.msra.mxu0 0.0
    %1701 = vmatprep.subr.mxu0 0.0
    %1702 = vmatpush1.msra.mxu0 0.0
    %1703 = vmatprep.subr.mxu0 0.0
    %1704 = vmatpush1.msra.mxu0 0.0
    %1705 = vmatprep.subr.mxu0 0.0
    %1706 = vmatpush1.msra.mxu0 0.0
    %1707 = vmatprep.subr.mxu0 0.0
    %1708 = vmatpush1.msra.mxu0 0.0
    %1709 = vmatprep.subr.mxu0 0.0
    %1710 = vmatpush1.msra.mxu0 0.0
    %1711 = vmatprep.subr.mxu0 0.0
    %1712 = vmatpush1.msra.mxu0 0.0
    %1713 = vmatprep.subr.mxu0 0.0
    %1714 = vmatpush1.msra.mxu0 0.0
    %1715 = vmatprep.subr.mxu0 0.0
    %1716 = vmatpush1.msra.mxu0 0.0
    %1717 = vmatprep.subr.mxu0 0.0
    %1718 = vmatpush1.msra.mxu0 0.0
    %1719 = vmatprep.subr.mxu0 0.0
    %1720 = vmatpush1.msra.mxu0 0.0
    %1721 = vmatprep.subr.mxu0 0.0
    %1722 = vmatpush1.msra.mxu0 0.0
    %1723 = vmatprep.subr.mxu0 0.0
    %1724 = vmatpush1.msra.mxu0 0.0
    %1725 = vmatprep.subr.mxu0 0.0
    %1726 = vmatpush1.msra.mxu0 0.0
    %1727 = vmatprep.subr.mxu0 0.0
    %1728 = vmatpush1.msra.mxu0 0.0
    %1729 = vmatprep.subr.mxu0 0.0
    %1730 = vmatpush1.msra.mxu0 0.0
    %1731 = vmatprep.subr.mxu0 0.0
    %1732 = vmatpush1.msra.mxu0 0.0
    %1733 = vmatprep.subr.mxu0 0.0
    %1734 = vmatpush1.msra.mxu0 0.0
    %1735 = vmatprep.subr.mxu0 0.0
    %1736 = vmatpush1.msra.mxu0 0.0
    %1737 = vmatprep.subr.mxu0 0.0
    %1738 = vmatpush1.msra.mxu0 0.0
    %1739 = vmatprep.subr.mxu0 0.0
    %1740 = vmatpush1.msra.mxu0 0.0
    %1741 = vmatprep.subr.mxu0 0.0
    %1742 = vmatpush1.msra.mxu0 0.0
    %1743 = vmatprep.mubr.f32.mxu0 0.0
    %1744 = vmatmul.mubr.f32.gmra.mrb[0].mxu0 %v1606
    %v1745 = vpop.f32.mrb[0].mxu0
    %v1746 = vadd.f32 0.0, %v1745
    %v1747 = vpop.f32.mrb[0].mxu0
    %1748 = vdwg.mxu0
    %v1749 = vadd.f32 %v1529, %v1675
    %v1750 = vadd.f32 %v1531, %v1677
    %v1751 = vadd.f32 %v1600, %v1746
    %1753 = vrot.lane.b32.xlu0 %v1307, 32
    %v1754 = vpop.permute.xlu0 %1753
    %v1755 = vsel %vm182, %v1754, 0
    %1757 = vmatprep.subr.mxu0 %v116
    %1758 = vmatpush1.msra.mxu0 %v115
    %1759 = vmatprep.subr.mxu0 %v119
    %1760 = vmatpush1.msra.mxu0 %v118
    %1761 = vmatprep.subr.mxu0 %v122
    %1762 = vmatpush1.msra.mxu0 %v121
    %1763 = vmatprep.subr.mxu0 %v125
    %1764 = vmatpush1.msra.mxu0 %v124
    %1765 = vmatprep.subr.mxu0 0.0
    %1766 = vmatpush1.msra.mxu0 0.0
    %1767 = vmatprep.subr.mxu0 0.0
    %1768 = vmatpush1.msra.mxu0 0.0
    %1769 = vmatprep.subr.mxu0 0.0
    %1770 = vmatpush1.msra.mxu0 0.0
    %1771 = vmatprep.subr.mxu0 0.0
    %1772 = vmatpush1.msra.mxu0 0.0
    %1773 = vmatprep.subr.mxu0 0.0
    %1774 = vmatpush1.msra.mxu0 0.0
    %1775 = vmatprep.subr.mxu0 0.0
    %1776 = vmatpush1.msra.mxu0 0.0
    %1777 = vmatprep.subr.mxu0 0.0
    %1778 = vmatpush1.msra.mxu0 0.0
    %1779 = vmatprep.subr.mxu0 0.0
    %1780 = vmatpush1.msra.mxu0 0.0
    %1781 = vmatprep.subr.mxu0 0.0
    %1782 = vmatpush1.msra.mxu0 0.0
    %1783 = vmatprep.subr.mxu0 0.0
    %1784 = vmatpush1.msra.mxu0 0.0
    %1785 = vmatprep.subr.mxu0 0.0
    %1786 = vmatpush1.msra.mxu0 0.0
    %1787 = vmatprep.subr.mxu0 0.0
    %1788 = vmatpush1.msra.mxu0 0.0
    %1789 = vmatprep.subr.mxu0 0.0
    %1790 = vmatpush1.msra.mxu0 0.0
    %1791 = vmatprep.subr.mxu0 0.0
    %1792 = vmatpush1.msra.mxu0 0.0
    %1793 = vmatprep.subr.mxu0 0.0
    %1794 = vmatpush1.msra.mxu0 0.0
    %1795 = vmatprep.subr.mxu0 0.0
    %1796 = vmatpush1.msra.mxu0 0.0
    %1797 = vmatprep.subr.mxu0 0.0
    %1798 = vmatpush1.msra.mxu0 0.0
    %1799 = vmatprep.subr.mxu0 0.0
    %1800 = vmatpush1.msra.mxu0 0.0
    %1801 = vmatprep.subr.mxu0 0.0
    %1802 = vmatpush1.msra.mxu0 0.0
    %1803 = vmatprep.subr.mxu0 0.0
    %1804 = vmatpush1.msra.mxu0 0.0
    %1805 = vmatprep.subr.mxu0 0.0
    %1806 = vmatpush1.msra.mxu0 0.0
    %1807 = vmatprep.subr.mxu0 0.0
    %1808 = vmatpush1.msra.mxu0 0.0
    %1809 = vmatprep.subr.mxu0 0.0
    %1810 = vmatpush1.msra.mxu0 0.0
    %1811 = vmatprep.subr.mxu0 0.0
    %1812 = vmatpush1.msra.mxu0 0.0
    %1813 = vmatprep.subr.mxu0 0.0
    %1814 = vmatpush1.msra.mxu0 0.0
    %1815 = vmatprep.subr.mxu0 0.0
    %1816 = vmatpush1.msra.mxu0 0.0
    %1817 = vmatprep.subr.mxu0 0.0
    %1818 = vmatpush1.msra.mxu0 0.0
    %1819 = vmatprep.subr.mxu0 0.0
    %1820 = vmatpush1.msra.mxu0 0.0
    %1821 = vmatprep.mubr.f32.mxu0 0.0
    %1822 = vmatmul.mubr.f32.gmra.mrb[0].mxu0 %v1755
    %v1823 = vpop.f32.mrb[0].mxu0
    %v1824 = vadd.f32 0.0, %v1823
    %v1825 = vpop.f32.mrb[0].mxu0
    %v1826 = vadd.f32 0.0, %v1825
    %1827 = vdwg.mxu0
    %1828 = vmatprep.subr.mxu0 0.0
    %1829 = vmatpush1.msra.mxu0 %v117
    %1830 = vmatprep.subr.mxu0 0.0
    %1831 = vmatpush1.msra.mxu0 %v120
    %1832 = vmatprep.subr.mxu0 0.0
    %1833 = vmatpush1.msra.mxu0 %v123
    %1834 = vmatprep.subr.mxu0 0.0
    %1835 = vmatpush1.msra.mxu0 %v126
    %1836 = vmatprep.subr.mxu0 0.0
    %1837 = vmatpush1.msra.mxu0 0.0
    %1838 = vmatprep.subr.mxu0 0.0
    %1839 = vmatpush1.msra.mxu0 0.0
    %1840 = vmatprep.subr.mxu0 0.0
    %1841 = vmatpush1.msra.mxu0 0.0
    %1842 = vmatprep.subr.mxu0 0.0
    %1843 = vmatpush1.msra.mxu0 0.0
    %1844 = vmatprep.subr.mxu0 0.0
    %1845 = vmatpush1.msra.mxu0 0.0
    %1846 = vmatprep.subr.mxu0 0.0
    %1847 = vmatpush1.msra.mxu0 0.0
    %1848 = vmatprep.subr.mxu0 0.0
    %1849 = vmatpush1.msra.mxu0 0.0
    %1850 = vmatprep.subr.mxu0 0.0
    %1851 = vmatpush1.msra.mxu0 0.0
    %1852 = vmatprep.subr.mxu0 0.0
    %1853 = vmatpush1.msra.mxu0 0.0
    %1854 = vmatprep.subr.mxu0 0.0
    %1855 = vmatpush1.msra.mxu0 0.0
    %1856 = vmatprep.subr.mxu0 0.0
    %1857 = vmatpush1.msra.mxu0 0.0
    %1858 = vmatprep.subr.mxu0 0.0
    %1859 = vmatpush1.msra.mxu0 0.0
    %1860 = vmatprep.subr.mxu0 0.0
    %1861 = vmatpush1.msra.mxu0 0.0
    %1862 = vmatprep.subr.mxu0 0.0
    %1863 = vmatpush1.msra.mxu0 0.0
    %1864 = vmatprep.subr.mxu0 0.0
    %1865 = vmatpush1.msra.mxu0 0.0
    %1866 = vmatprep.subr.mxu0 0.0
    %1867 = vmatpush1.msra.mxu0 0.0
    %1868 = vmatprep.subr.mxu0 0.0
    %1869 = vmatpush1.msra.mxu0 0.0
    %1870 = vmatprep.subr.mxu0 0.0
    %1871 = vmatpush1.msra.mxu0 0.0
    %1872 = vmatprep.subr.mxu0 0.0
    %1873 = vmatpush1.msra.mxu0 0.0
    %1874 = vmatprep.subr.mxu0 0.0
    %1875 = vmatpush1.msra.mxu0 0.0
    %1876 = vmatprep.subr.mxu0 0.0
    %1877 = vmatpush1.msra.mxu0 0.0
    %1878 = vmatprep.subr.mxu0 0.0
    %1879 = vmatpush1.msra.mxu0 0.0
    %1880 = vmatprep.subr.mxu0 0.0
    %1881 = vmatpush1.msra.mxu0 0.0
    %1882 = vmatprep.subr.mxu0 0.0
    %1883 = vmatpush1.msra.mxu0 0.0
    %1884 = vmatprep.subr.mxu0 0.0
    %1885 = vmatpush1.msra.mxu0 0.0
    %1886 = vmatprep.subr.mxu0 0.0
    %1887 = vmatpush1.msra.mxu0 0.0
    %1888 = vmatprep.subr.mxu0 0.0
    %1889 = vmatpush1.msra.mxu0 0.0
    %1890 = vmatprep.subr.mxu0 0.0
    %1891 = vmatpush1.msra.mxu0 0.0
    %1892 = vmatprep.mubr.f32.mxu0 0.0
    %1893 = vmatmul.mubr.f32.gmra.mrb[0].mxu0 %v1755
    %v1894 = vpop.f32.mrb[0].mxu0
    %v1895 = vadd.f32 0.0, %v1894
    %v1896 = vpop.f32.mrb[0].mxu0
    %1897 = vdwg.mxu0
    %v1898 = vadd.f32 %v1749, %v1824
    %v1899 = vadd.f32 %v1750, %v1826
    %v1900 = vadd.f32 %v1751, %v1895
    %v1901 = vadd.f32 %v1898, %v552
    %v1902 = vadd.f32 %v1899, %v556
    %v1903 = vadd.f32 %v1900, %v560
    %v1904 = vmul.f32 %v1901, %v177
    %v1905 = vmul.f32 %v1902, %v178
    %v1906 = vmul.f32 %v1903, %v179
    %v1907 = vtanh.pop %v1904
    %v1908 = vtanh.pop %v1905
    %v1909 = vtanh.pop %v1906
    %v1910 = vmul.f32 %v1907, 0.5
    %v1911 = vmul.f32 %v1908, 0.5
    %v1912 = vmul.f32 %v1909, 0.5
    %v1913 = vadd.f32 %v1910, 0.5
    %v1914 = vadd.f32 %v1911, 0.5
    %v1915 = vadd.f32 %v1912, 0.5
    %v1916 = vsel %vm174, %v1907, %v1913
    %v1917 = vsel %vm175, %v1908, %v1914
    %v1918 = vsel %vm176, %v1909, %v1915
    %v1919 = vmul.f32 %v1916, %v1267
    %1921 = vrot.lane.b32.xlu0 %v1916, 64
    %v1922 = vpop.permute.xlu0 %1921
    %v1924 = vmul.f32 %v1916, %v1922
    %1926 = vrot.lane.b32.xlu0 %v1924, 32
    %v1927 = vpop.permute.xlu0 %1926
    %v1929 = vadd.f32 %v1919, %v1927
    %v1930 = vtanh.pop %v1929
    %1932 = vrot.lane.b32.xlu0 %v1930, 64
    %v1933 = vpop.permute.xlu0 %1932
    %v1935 = vmul.f32 %v1916, %v1933
    %v1936 = vmul.f32 %v1917, %v1284
    %1938 = vrot.lane.b32.xlu0 %v1917, 64
    %v1939 = vpop.permute.xlu0 %1938
    %v1941 = vmul.f32 %v1917, %v1939
    %1943 = vrot.lane.b32.xlu0 %v1941, 32
    %v1944 = vpop.permute.xlu0 %1943
    %v1946 = vadd.f32 %v1936, %v1944
    %v1947 = vtanh.pop %v1946
    %1949 = vrot.lane.b32.xlu0 %v1947, 64
    %v1950 = vpop.permute.xlu0 %1949
    %v1952 = vmul.f32 %v1917, %v1950
    %v1953 = vmul.f32 %v1918, %v1301
    %1955 = vrot.lane.b32.xlu0 %v1918, 64
    %v1956 = vpop.permute.xlu0 %1955
    %v1958 = vmul.f32 %v1918, %v1956
    %1960 = vrot.lane.b32.xlu0 %v1958, 32
    %v1961 = vpop.permute.xlu0 %1960
    %v1963 = vadd.f32 %v1953, %v1961
    %v1964 = vtanh.pop %v1963
    %1966 = vrot.lane.b32.xlu0 %v1964, 64
    %v1967 = vpop.permute.xlu0 %1966
    %v1969 = vmul.f32 %v1918, %v1967
    %v1970 = vld [vmem:[#allocation2 + $0x4] sm:$0x1]
    %v1971 = vld [vmem:[#allocation2 + $0xc] sm:$0x1]
    %1973 = vrot.lane.b32.xlu0 %v1935, 32
    %v1974 = vpop.permute.xlu0 %1973
    %v1975 = vsel %vm182, %v1974, 0
    %1977 = vmatprep.subr.mxu0 %v92
    %1978 = vmatpush1.msra.mxu0 %v91
    %1979 = vmatprep.subr.mxu0 %v95
    %1980 = vmatpush1.msra.mxu0 %v94
    %1981 = vmatprep.subr.mxu0 %v98
    %1982 = vmatpush1.msra.mxu0 %v97
    %1983 = vmatprep.subr.mxu0 %v101
    %1984 = vmatpush1.msra.mxu0 %v100
    %1985 = vmatprep.subr.mxu0 0.0
    %1986 = vmatpush1.msra.mxu0 0.0
    %1987 = vmatprep.subr.mxu0 0.0
    %1988 = vmatpush1.msra.mxu0 0.0
    %1989 = vmatprep.subr.mxu0 0.0
    %1990 = vmatpush1.msra.mxu0 0.0
    %1991 = vmatprep.subr.mxu0 0.0
    %1992 = vmatpush1.msra.mxu0 0.0
    %1993 = vmatprep.subr.mxu0 0.0
    %1994 = vmatpush1.msra.mxu0 0.0
    %1995 = vmatprep.subr.mxu0 0.0
    %1996 = vmatpush1.msra.mxu0 0.0
    %1997 = vmatprep.subr.mxu0 0.0
    %1998 = vmatpush1.msra.mxu0 0.0
    %1999 = vmatprep.subr.mxu0 0.0
    %2000 = vmatpush1.msra.mxu0 0.0
    %2001 = vmatprep.subr.mxu0 0.0
    %2002 = vmatpush1.msra.mxu0 0.0
    %2003 = vmatprep.subr.mxu0 0.0
    %2004 = vmatpush1.msra.mxu0 0.0
    %2005 = vmatprep.subr.mxu0 0.0
    %2006 = vmatpush1.msra.mxu0 0.0
    %2007 = vmatprep.subr.mxu0 0.0
    %2008 = vmatpush1.msra.mxu0 0.0
    %2009 = vmatprep.subr.mxu0 0.0
    %2010 = vmatpush1.msra.mxu0 0.0
    %2011 = vmatprep.subr.mxu0 0.0
    %2012 = vmatpush1.msra.mxu0 0.0
    %2013 = vmatprep.subr.mxu0 0.0
    %2014 = vmatpush1.msra.mxu0 0.0
    %2015 = vmatprep.subr.mxu0 0.0
    %2016 = vmatpush1.msra.mxu0 0.0
    %2017 = vmatprep.subr.mxu0 0.0
    %2018 = vmatpush1.msra.mxu0 0.0
    %2019 = vmatprep.subr.mxu0 0.0
    %2020 = vmatpush1.msra.mxu0 0.0
    %2021 = vmatprep.subr.mxu0 0.0
    %2022 = vmatpush1.msra.mxu0 0.0
    %2023 = vmatprep.subr.mxu0 0.0
    %2024 = vmatpush1.msra.mxu0 0.0
    %2025 = vmatprep.subr.mxu0 0.0
    %2026 = vmatpush1.msra.mxu0 0.0
    %2027 = vmatprep.subr.mxu0 0.0
    %2028 = vmatpush1.msra.mxu0 0.0
    %2029 = vmatprep.subr.mxu0 0.0
    %2030 = vmatpush1.msra.mxu0 0.0
    %2031 = vmatprep.subr.mxu0 0.0
    %2032 = vmatpush1.msra.mxu0 0.0
    %2033 = vmatprep.subr.mxu0 0.0
    %2034 = vmatpush1.msra.mxu0 0.0
    %2035 = vmatprep.subr.mxu0 0.0
    %2036 = vmatpush1.msra.mxu0 0.0
    %2037 = vmatprep.subr.mxu0 0.0
    %2038 = vmatpush1.msra.mxu0 0.0
    %2039 = vmatprep.subr.mxu0 0.0
    %2040 = vmatpush1.msra.mxu0 0.0
    %2041 = vmatprep.mubr.f32.mxu0 0.0
    %2042 = vmatmul.mubr.f32.gmra.mrb[0].mxu0 %v1975
    %v2043 = vpop.f32.mrb[0].mxu0
    %v2044 = vadd.f32 0.0, %v2043
    %v2045 = vpop.f32.mrb[0].mxu0
    %v2046 = vadd.f32 0.0, %v2045
    %2047 = vdwg.mxu0
    %2048 = vmatprep.subr.mxu0 0.0
    %2049 = vmatpush1.msra.mxu0 %v93
    %2050 = vmatprep.subr.mxu0 0.0
    %2051 = vmatpush1.msra.mxu0 %v96
    %2052 = vmatprep.subr.mxu0 0.0
    %2053 = vmatpush1.msra.mxu0 %v99
    %2054 = vmatprep.subr.mxu0 0.0
    %2055 = vmatpush1.msra.mxu0 %v102
    %2056 = vmatprep.subr.mxu0 0.0
    %2057 = vmatpush1.msra.mxu0 0.0
    %2058 = vmatprep.subr.mxu0 0.0
    %2059 = vmatpush1.msra.mxu0 0.0
    %2060 = vmatprep.subr.mxu0 0.0
    %2061 = vmatpush1.msra.mxu0 0.0
    %2062 = vmatprep.subr.mxu0 0.0
    %2063 = vmatpush1.msra.mxu0 0.0
    %2064 = vmatprep.subr.mxu0 0.0
    %2065 = vmatpush1.msra.mxu0 0.0
    %2066 = vmatprep.subr.mxu0 0.0
    %2067 = vmatpush1.msra.mxu0 0.0
    %2068 = vmatprep.subr.mxu0 0.0
    %2069 = vmatpush1.msra.mxu0 0.0
    %2070 = vmatprep.subr.mxu0 0.0
    %2071 = vmatpush1.msra.mxu0 0.0
    %2072 = vmatprep.subr.mxu0 0.0
    %2073 = vmatpush1.msra.mxu0 0.0
    %2074 = vmatprep.subr.mxu0 0.0
    %2075 = vmatpush1.msra.mxu0 0.0
    %2076 = vmatprep.subr.mxu0 0.0
    %2077 = vmatpush1.msra.mxu0 0.0
    %2078 = vmatprep.subr.mxu0 0.0
    %2079 = vmatpush1.msra.mxu0 0.0
    %2080 = vmatprep.subr.mxu0 0.0
    %2081 = vmatpush1.msra.mxu0 0.0
    %2082 = vmatprep.subr.mxu0 0.0
    %2083 = vmatpush1.msra.mxu0 0.0
    %2084 = vmatprep.subr.mxu0 0.0
    %2085 = vmatpush1.msra.mxu0 0.0
    %2086 = vmatprep.subr.mxu0 0.0
    %2087 = vmatpush1.msra.mxu0 0.0
    %2088 = vmatprep.subr.mxu0 0.0
    %2089 = vmatpush1.msra.mxu0 0.0
    %2090 = vmatprep.subr.mxu0 0.0
    %2091 = vmatpush1.msra.mxu0 0.0
    %2092 = vmatprep.subr.mxu0 0.0
    %2093 = vmatpush1.msra.mxu0 0.0
    %2094 = vmatprep.subr.mxu0 0.0
    %2095 = vmatpush1.msra.mxu0 0.0
    %2096 = vmatprep.subr.mxu0 0.0
    %2097 = vmatpush1.msra.mxu0 0.0
    %2098 = vmatprep.subr.mxu0 0.0
    %2099 = vmatpush1.msra.mxu0 0.0
    %2100 = vmatprep.subr.mxu0 0.0
    %2101 = vmatpush1.msra.mxu0 0.0
    %2102 = vmatprep.subr.mxu0 0.0
    %2103 = vmatpush1.msra.mxu0 0.0
    %2104 = vmatprep.subr.mxu0 0.0
    %2105 = vmatpush1.msra.mxu0 0.0
    %2106 = vmatprep.subr.mxu0 0.0
    %2107 = vmatpush1.msra.mxu0 0.0
    %2108 = vmatprep.subr.mxu0 0.0
    %2109 = vmatpush1.msra.mxu0 0.0
    %2110 = vmatprep.subr.mxu0 0.0
    %2111 = vmatpush1.msra.mxu0 0.0
    %2112 = vmatprep.mubr.f32.mxu0 0.0
    %2113 = vmatmul.mubr.f32.gmra.mrb[0].mxu0 %v1975
    %v2114 = vpop.f32.mrb[0].mxu0
    %v2115 = vadd.f32 0.0, %v2114
    %v2116 = vpop.f32.mrb[0].mxu0
    %2117 = vdwg.mxu0
    %v2120 = vrot.slane %v1971, 7
    %v2121 = vsel %vm259, %v2120, %v1970
    %v2122 = vsel %vm261, %v2121, 0
    %2124 = vmatprep.subr.mxu0 %v86
    %2125 = vmatpush1.msra.mxu0 %v85
    %2126 = vmatprep.subr.mxu0 %v89
    %2127 = vmatpush1.msra.mxu0 %v88
    %2128 = vmatprep.subr.mxu0 0.0
    %2129 = vmatpush1.msra.mxu0 0.0
    %2130 = vmatprep.subr.mxu0 0.0
    %2131 = vmatpush1.msra.mxu0 0.0
    %2132 = vmatprep.subr.mxu0 0.0
    %2133 = vmatpush1.msra.mxu0 0.0
    %2134 = vmatprep.subr.mxu0 0.0
    %2135 = vmatpush1.msra.mxu0 0.0
    %2136 = vmatprep.subr.mxu0 0.0
    %2137 = vmatpush1.msra.mxu0 0.0
    %2138 = vmatprep.subr.mxu0 0.0
    %2139 = vmatpush1.msra.mxu0 0.0
    %2140 = vmatprep.subr.mxu0 0.0
    %2141 = vmatpush1.msra.mxu0 0.0
    %2142 = vmatprep.subr.mxu0 0.0
    %2143 = vmatpush1.msra.mxu0 0.0
    %2144 = vmatprep.subr.mxu0 0.0
    %2145 = vmatpush1.msra.mxu0 0.0
    %2146 = vmatprep.subr.mxu0 0.0
    %2147 = vmatpush1.msra.mxu0 0.0
    %2148 = vmatprep.subr.mxu0 0.0
    %2149 = vmatpush1.msra.mxu0 0.0
    %2150 = vmatprep.subr.mxu0 0.0
    %2151 = vmatpush1.msra.mxu0 0.0
    %2152 = vmatprep.subr.mxu0 0.0
    %2153 = vmatpush1.msra.mxu0 0.0
    %2154 = vmatprep.subr.mxu0 0.0
    %2155 = vmatpush1.msra.mxu0 0.0
    %2156 = vmatprep.subr.mxu0 0.0
    %2157 = vmatpush1.msra.mxu0 0.0
    %2158 = vmatprep.subr.mxu0 0.0
    %2159 = vmatpush1.msra.mxu0 0.0
    %2160 = vmatprep.subr.mxu0 0.0
    %2161 = vmatpush1.msra.mxu0 0.0
    %2162 = vmatprep.subr.mxu0 0.0
    %2163 = vmatpush1.msra.mxu0 0.0
    %2164 = vmatprep.subr.mxu0 0.0
    %2165 = vmatpush1.msra.mxu0 0.0
    %2166 = vmatprep.subr.mxu0 0.0
    %2167 = vmatpush1.msra.mxu0 0.0
    %2168 = vmatprep.subr.mxu0 0.0
    %2169 = vmatpush1.msra.mxu0 0.0
    %2170 = vmatprep.subr.mxu0 0.0
    %2171 = vmatpush1.msra.mxu0 0.0
    %2172 = vmatprep.subr.mxu0 0.0
    %2173 = vmatpush1.msra.mxu0 0.0
    %2174 = vmatprep.subr.mxu0 0.0
    %2175 = vmatpush1.msra.mxu0 0.0
    %2176 = vmatprep.subr.mxu0 0.0
    %2177 = vmatpush1.msra.mxu0 0.0
    %2178 = vmatprep.subr.mxu0 0.0
    %2179 = vmatpush1.msra.mxu0 0.0
    %2180 = vmatprep.subr.mxu0 0.0
    %2181 = vmatpush1.msra.mxu0 0.0
    %2182 = vmatprep.subr.mxu0 0.0
    %2183 = vmatpush1.msra.mxu0 0.0
    %2184 = vmatprep.subr.mxu0 0.0
    %2185 = vmatpush1.msra.mxu0 0.0
    %2186 = vmatprep.subr.mxu0 0.0
    %2187 = vmatpush1.msra.mxu0 0.0
    %2188 = vmatprep.mubr.f32.mxu0 0.0
    %2189 = vmatmul.mubr.f32.gmra.mrb[0].mxu0 %v2122
    %v2190 = vpop.f32.mrb[0].mxu0
    %v2191 = vadd.f32 %v2044, %v2190
    %v2192 = vpop.f32.mrb[0].mxu0
    %v2193 = vadd.f32 %v2046, %v2192
    %2194 = vdwg.mxu0
    %2195 = vmatprep.subr.mxu0 0.0
    %2196 = vmatpush1.msra.mxu0 %v87
    %2197 = vmatprep.subr.mxu0 0.0
    %2198 = vmatpush1.msra.mxu0 %v90
    %2199 = vmatprep.subr.mxu0 0.0
    %2200 = vmatpush1.msra.mxu0 0.0
    %2201 = vmatprep.subr.mxu0 0.0
    %2202 = vmatpush1.msra.mxu0 0.0
    %2203 = vmatprep.subr.mxu0 0.0
    %2204 = vmatpush1.msra.mxu0 0.0
    %2205 = vmatprep.subr.mxu0 0.0
    %2206 = vmatpush1.msra.mxu0 0.0
    %2207 = vmatprep.subr.mxu0 0.0
    %2208 = vmatpush1.msra.mxu0 0.0
    %2209 = vmatprep.subr.mxu0 0.0
    %2210 = vmatpush1.msra.mxu0 0.0
    %2211 = vmatprep.subr.mxu0 0.0
    %2212 = vmatpush1.msra.mxu0 0.0
    %2213 = vmatprep.subr.mxu0 0.0
    %2214 = vmatpush1.msra.mxu0 0.0
    %2215 = vmatprep.subr.mxu0 0.0
    %2216 = vmatpush1.msra.mxu0 0.0
    %2217 = vmatprep.subr.mxu0 0.0
    %2218 = vmatpush1.msra.mxu0 0.0
    %2219 = vmatprep.subr.mxu0 0.0
    %2220 = vmatpush1.msra.mxu0 0.0
    %2221 = vmatprep.subr.mxu0 0.0
    %2222 = vmatpush1.msra.mxu0 0.0
    %2223 = vmatprep.subr.mxu0 0.0
    %2224 = vmatpush1.msra.mxu0 0.0
    %2225 = vmatprep.subr.mxu0 0.0
    %2226 = vmatpush1.msra.mxu0 0.0
    %2227 = vmatprep.subr.mxu0 0.0
    %2228 = vmatpush1.msra.mxu0 0.0
    %2229 = vmatprep.subr.mxu0 0.0
    %2230 = vmatpush1.msra.mxu0 0.0
    %2231 = vmatprep.subr.mxu0 0.0
    %2232 = vmatpush1.msra.mxu0 0.0
    %2233 = vmatprep.subr.mxu0 0.0
    %2234 = vmatpush1.msra.mxu0 0.0
    %2235 = vmatprep.subr.mxu0 0.0
    %2236 = vmatpush1.msra.mxu0 0.0
    %2237 = vmatprep.subr.mxu0 0.0
    %2238 = vmatpush1.msra.mxu0 0.0
    %2239 = vmatprep.subr.mxu0 0.0
    %2240 = vmatpush1.msra.mxu0 0.0
    %2241 = vmatprep.subr.mxu0 0.0
    %2242 = vmatpush1.msra.mxu0 0.0
    %2243 = vmatprep.subr.mxu0 0.0
    %2244 = vmatpush1.msra.mxu0 0.0
    %2245 = vmatprep.subr.mxu0 0.0
    %2246 = vmatpush1.msra.mxu0 0.0
    %2247 = vmatprep.subr.mxu0 0.0
    %2248 = vmatpush1.msra.mxu0 0.0
    %2249 = vmatprep.subr.mxu0 0.0
    %2250 = vmatpush1.msra.mxu0 0.0
    %2251 = vmatprep.subr.mxu0 0.0
    %2252 = vmatpush1.msra.mxu0 0.0
    %2253 = vmatprep.subr.mxu0 0.0
    %2254 = vmatpush1.msra.mxu0 0.0
    %2255 = vmatprep.subr.mxu0 0.0
    %2256 = vmatpush1.msra.mxu0 0.0
    %2257 = vmatprep.subr.mxu0 0.0
    %2258 = vmatpush1.msra.mxu0 0.0
    %2259 = vmatprep.mubr.f32.mxu0 0.0
    %2260 = vmatmul.mubr.f32.gmra.mrb[0].mxu0 %v2122
    %v2261 = vpop.f32.mrb[0].mxu0
    %v2262 = vadd.f32 %v2115, %v2261
    %v2263 = vpop.f32.mrb[0].mxu0
    %2264 = vdwg.mxu0
    %2266 = vrot.lane.b32.xlu0 %v1952, 32
    %v2267 = vpop.permute.xlu0 %2266
    %v2268 = vsel %vm182, %v2267, 0
    %2270 = vmatprep.subr.mxu0 %v104
    %2271 = vmatpush1.msra.mxu0 %v103
    %2272 = vmatprep.subr.mxu0 %v107
    %2273 = vmatpush1.msra.mxu0 %v106
    %2274 = vmatprep.subr.mxu0 %v110
    %2275 = vmatpush1.msra.mxu0 %v109
    %2276 = vmatprep.subr.mxu0 %v113
    %2277 = vmatpush1.msra.mxu0 %v112
    %2278 = vmatprep.subr.mxu0 0.0
    %2279 = vmatpush1.msra.mxu0 0.0
    %2280 = vmatprep.subr.mxu0 0.0
    %2281 = vmatpush1.msra.mxu0 0.0
    %2282 = vmatprep.subr.mxu0 0.0
    %2283 = vmatpush1.msra.mxu0 0.0
    %2284 = vmatprep.subr.mxu0 0.0
    %2285 = vmatpush1.msra.mxu0 0.0
    %2286 = vmatprep.subr.mxu0 0.0
    %2287 = vmatpush1.msra.mxu0 0.0
    %2288 = vmatprep.subr.mxu0 0.0
    %2289 = vmatpush1.msra.mxu0 0.0
    %2290 = vmatprep.subr.mxu0 0.0
    %2291 = vmatpush1.msra.mxu0 0.0
    %2292 = vmatprep.subr.mxu0 0.0
    %2293 = vmatpush1.msra.mxu0 0.0
    %2294 = vmatprep.subr.mxu0 0.0
    %2295 = vmatpush1.msra.mxu0 0.0
    %2296 = vmatprep.subr.mxu0 0.0
    %2297 = vmatpush1.msra.mxu0 0.0
    %2298 = vmatprep.subr.mxu0 0.0
    %2299 = vmatpush1.msra.mxu0 0.0
    %2300 = vmatprep.subr.mxu0 0.0
    %2301 = vmatpush1.msra.mxu0 0.0
    %2302 = vmatprep.subr.mxu0 0.0
    %2303 = vmatpush1.msra.mxu0 0.0
    %2304 = vmatprep.subr.mxu0 0.0
    %2305 = vmatpush1.msra.mxu0 0.0
    %2306 = vmatprep.subr.mxu0 0.0
    %2307 = vmatpush1.msra.mxu0 0.0
    %2308 = vmatprep.subr.mxu0 0.0
    %2309 = vmatpush1.msra.mxu0 0.0
    %2310 = vmatprep.subr.mxu0 0.0
    %2311 = vmatpush1.msra.mxu0 0.0
    %2312 = vmatprep.subr.mxu0 0.0
    %2313 = vmatpush1.msra.mxu0 0.0
    %2314 = vmatprep.subr.mxu0 0.0
    %2315 = vmatpush1.msra.mxu0 0.0
    %2316 = vmatprep.subr.mxu0 0.0
    %2317 = vmatpush1.msra.mxu0 0.0
    %2318 = vmatprep.subr.mxu0 0.0
    %2319 = vmatpush1.msra.mxu0 0.0
    %2320 = vmatprep.subr.mxu0 0.0
    %2321 = vmatpush1.msra.mxu0 0.0
    %2322 = vmatprep.subr.mxu0 0.0
    %2323 = vmatpush1.msra.mxu0 0.0
    %2324 = vmatprep.subr.mxu0 0.0
    %2325 = vmatpush1.msra.mxu0 0.0
    %2326 = vmatprep.subr.mxu0 0.0
    %2327 = vmatpush1.msra.mxu0 0.0
    %2328 = vmatprep.subr.mxu0 0.0
    %2329 = vmatpush1.msra.mxu0 0.0
    %2330 = vmatprep.subr.mxu0 0.0
    %2331 = vmatpush1.msra.mxu0 0.0
    %2332 = vmatprep.subr.mxu0 0.0
    %2333 = vmatpush1.msra.mxu0 0.0
    %2334 = vmatprep.mubr.f32.mxu0 0.0
    %2335 = vmatmul.mubr.f32.gmra.mrb[0].mxu0 %v2268
    %v2336 = vpop.f32.mrb[0].mxu0
    %v2337 = vadd.f32 0.0, %v2336
    %v2338 = vpop.f32.mrb[0].mxu0
    %v2339 = vadd.f32 0.0, %v2338
    %2340 = vdwg.mxu0
    %2341 = vmatprep.subr.mxu0 0.0
    %2342 = vmatpush1.msra.mxu0 %v105
    %2343 = vmatprep.subr.mxu0 0.0
    %2344 = vmatpush1.msra.mxu0 %v108
    %2345 = vmatprep.subr.mxu0 0.0
    %2346 = vmatpush1.msra.mxu0 %v111
    %2347 = vmatprep.subr.mxu0 0.0
    %2348 = vmatpush1.msra.mxu0 %v114
    %2349 = vmatprep.subr.mxu0 0.0
    %2350 = vmatpush1.msra.mxu0 0.0
    %2351 = vmatprep.subr.mxu0 0.0
    %2352 = vmatpush1.msra.mxu0 0.0
    %2353 = vmatprep.subr.mxu0 0.0
    %2354 = vmatpush1.msra.mxu0 0.0
    %2355 = vmatprep.subr.mxu0 0.0
    %2356 = vmatpush1.msra.mxu0 0.0
    %2357 = vmatprep.subr.mxu0 0.0
    %2358 = vmatpush1.msra.mxu0 0.0
    %2359 = vmatprep.subr.mxu0 0.0
    %2360 = vmatpush1.msra.mxu0 0.0
    %2361 = vmatprep.subr.mxu0 0.0
    %2362 = vmatpush1.msra.mxu0 0.0
    %2363 = vmatprep.subr.mxu0 0.0
    %2364 = vmatpush1.msra.mxu0 0.0
    %2365 = vmatprep.subr.mxu0 0.0
    %2366 = vmatpush1.msra.mxu0 0.0
    %2367 = vmatprep.subr.mxu0 0.0
    %2368 = vmatpush1.msra.mxu0 0.0
    %2369 = vmatprep.subr.mxu0 0.0
    %2370 = vmatpush1.msra.mxu0 0.0
    %2371 = vmatprep.subr.mxu0 0.0
    %2372 = vmatpush1.msra.mxu0 0.0
    %2373 = vmatprep.subr.mxu0 0.0
    %2374 = vmatpush1.msra.mxu0 0.0
    %2375 = vmatprep.subr.mxu0 0.0
    %2376 = vmatpush1.msra.mxu0 0.0
    %2377 = vmatprep.subr.mxu0 0.0
    %2378 = vmatpush1.msra.mxu0 0.0
    %2379 = vmatprep.subr.mxu0 0.0
    %2380 = vmatpush1.msra.mxu0 0.0
    %2381 = vmatprep.subr.mxu0 0.0
    %2382 = vmatpush1.msra.mxu0 0.0
    %2383 = vmatprep.subr.mxu0 0.0
    %2384 = vmatpush1.msra.mxu0 0.0
    %2385 = vmatprep.subr.mxu0 0.0
    %2386 = vmatpush1.msra.mxu0 0.0
    %2387 = vmatprep.subr.mxu0 0.0
    %2388 = vmatpush1.msra.mxu0 0.0
    %2389 = vmatprep.subr.mxu0 0.0
    %2390 = vmatpush1.msra.mxu0 0.0
    %2391 = vmatprep.subr.mxu0 0.0
    %2392 = vmatpush1.msra.mxu0 0.0
    %2393 = vmatprep.subr.mxu0 0.0
    %2394 = vmatpush1.msra.mxu0 0.0
    %2395 = vmatprep.subr.mxu0 0.0
    %2396 = vmatpush1.msra.mxu0 0.0
    %2397 = vmatprep.subr.mxu0 0.0
    %2398 = vmatpush1.msra.mxu0 0.0
    %2399 = vmatprep.subr.mxu0 0.0
    %2400 = vmatpush1.msra.mxu0 0.0
    %2401 = vmatprep.subr.mxu0 0.0
    %2402 = vmatpush1.msra.mxu0 0.0
    %2403 = vmatprep.subr.mxu0 0.0
    %2404 = vmatpush1.msra.mxu0 0.0
    %2405 = vmatprep.mubr.f32.mxu0 0.0
    %2406 = vmatmul.mubr.f32.gmra.mrb[0].mxu0 %v2268
    %v2407 = vpop.f32.mrb[0].mxu0
    %v2408 = vadd.f32 0.0, %v2407
    %v2409 = vpop.f32.mrb[0].mxu0
    %2410 = vdwg.mxu0
    %v2411 = vadd.f32 %v2191, %v2337
    %v2412 = vadd.f32 %v2193, %v2339
    %v2413 = vadd.f32 %v2262, %v2408
    %2415 = vrot.lane.b32.xlu0 %v1969, 32
    %v2416 = vpop.permute.xlu0 %2415
    %v2417 = vsel %vm182, %v2416, 0
    %2419 = vmatprep.subr.mxu0 %v116
    %2420 = vmatpush1.msra.mxu0 %v115
    %2421 = vmatprep.subr.mxu0 %v119
    %2422 = vmatpush1.msra.mxu0 %v118
    %2423 = vmatprep.subr.mxu0 %v122
    %2424 = vmatpush1.msra.mxu0 %v121
    %2425 = vmatprep.subr.mxu0 %v125
    %2426 = vmatpush1.msra.mxu0 %v124
    %2427 = vmatprep.subr.mxu0 0.0
    %2428 = vmatpush1.msra.mxu0 0.0
    %2429 = vmatprep.subr.mxu0 0.0
    %2430 = vmatpush1.msra.mxu0 0.0
    %2431 = vmatprep.subr.mxu0 0.0
    %2432 = vmatpush1.msra.mxu0 0.0
    %2433 = vmatprep.subr.mxu0 0.0
    %2434 = vmatpush1.msra.mxu0 0.0
    %2435 = vmatprep.subr.mxu0 0.0
    %2436 = vmatpush1.msra.mxu0 0.0
    %2437 = vmatprep.subr.mxu0 0.0
    %2438 = vmatpush1.msra.mxu0 0.0
    %2439 = vmatprep.subr.mxu0 0.0
    %2440 = vmatpush1.msra.mxu0 0.0
    %2441 = vmatprep.subr.mxu0 0.0
    %2442 = vmatpush1.msra.mxu0 0.0
    %2443 = vmatprep.subr.mxu0 0.0
    %2444 = vmatpush1.msra.mxu0 0.0
    %2445 = vmatprep.subr.mxu0 0.0
    %2446 = vmatpush1.msra.mxu0 0.0
    %2447 = vmatprep.subr.mxu0 0.0
    %2448 = vmatpush1.msra.mxu0 0.0
    %2449 = vmatprep.subr.mxu0 0.0
    %2450 = vmatpush1.msra.mxu0 0.0
    %2451 = vmatprep.subr.mxu0 0.0
    %2452 = vmatpush1.msra.mxu0 0.0
    %2453 = vmatprep.subr.mxu0 0.0
    %2454 = vmatpush1.msra.mxu0 0.0
    %2455 = vmatprep.subr.mxu0 0.0
    %2456 = vmatpush1.msra.mxu0 0.0
    %2457 = vmatprep.subr.mxu0 0.0
    %2458 = vmatpush1.msra.mxu0 0.0
    %2459 = vmatprep.subr.mxu0 0.0
    %2460 = vmatpush1.msra.mxu0 0.0
    %2461 = vmatprep.subr.mxu0 0.0
    %2462 = vmatpush1.msra.mxu0 0.0
    %2463 = vmatprep.subr.mxu0 0.0
    %2464 = vmatpush1.msra.mxu0 0.0
    %2465 = vmatprep.subr.mxu0 0.0
    %2466 = vmatpush1.msra.mxu0 0.0
    %2467 = vmatprep.subr.mxu0 0.0
    %2468 = vmatpush1.msra.mxu0 0.0
    %2469 = vmatprep.subr.mxu0 0.0
    %2470 = vmatpush1.msra.mxu0 0.0
    %2471 = vmatprep.subr.mxu0 0.0
    %2472 = vmatpush1.msra.mxu0 0.0
    %2473 = vmatprep.subr.mxu0 0.0
    %2474 = vmatpush1.msra.mxu0 0.0
    %2475 = vmatprep.subr.mxu0 0.0
    %2476 = vmatpush1.msra.mxu0 0.0
    %2477 = vmatprep.subr.mxu0 0.0
    %2478 = vmatpush1.msra.mxu0 0.0
    %2479 = vmatprep.subr.mxu0 0.0
    %2480 = vmatpush1.msra.mxu0 0.0
    %2481 = vmatprep.subr.mxu0 0.0
    %2482 = vmatpush1.msra.mxu0 0.0
    %2483 = vmatprep.mubr.f32.mxu0 0.0
    %2484 = vmatmul.mubr.f32.gmra.mrb[0].mxu0 %v2417
    %v2485 = vpop.f32.mrb[0].mxu0
    %v2486 = vadd.f32 0.0, %v2485
    %v2487 = vpop.f32.mrb[0].mxu0
    %v2488 = vadd.f32 0.0, %v2487
    %2489 = vdwg.mxu0
    %2490 = vmatprep.subr.mxu0 0.0
    %2491 = vmatpush1.msra.mxu0 %v117
    %2492 = vmatprep.subr.mxu0 0.0
    %2493 = vmatpush1.msra.mxu0 %v120
    %2494 = vmatprep.subr.mxu0 0.0
    %2495 = vmatpush1.msra.mxu0 %v123
    %2496 = vmatprep.subr.mxu0 0.0
    %2497 = vmatpush1.msra.mxu0 %v126
    %2498 = vmatprep.subr.mxu0 0.0
    %2499 = vmatpush1.msra.mxu0 0.0
    %2500 = vmatprep.subr.mxu0 0.0
    %2501 = vmatpush1.msra.mxu0 0.0
    %2502 = vmatprep.subr.mxu0 0.0
    %2503 = vmatpush1.msra.mxu0 0.0
    %2504 = vmatprep.subr.mxu0 0.0
    %2505 = vmatpush1.msra.mxu0 0.0
    %2506 = vmatprep.subr.mxu0 0.0
    %2507 = vmatpush1.msra.mxu0 0.0
    %2508 = vmatprep.subr.mxu0 0.0
    %2509 = vmatpush1.msra.mxu0 0.0
    %2510 = vmatprep.subr.mxu0 0.0
    %2511 = vmatpush1.msra.mxu0 0.0
    %2512 = vmatprep.subr.mxu0 0.0
    %2513 = vmatpush1.msra.mxu0 0.0
    %2514 = vmatprep.subr.mxu0 0.0
    %2515 = vmatpush1.msra.mxu0 0.0
    %2516 = vmatprep.subr.mxu0 0.0
    %2517 = vmatpush1.msra.mxu0 0.0
    %2518 = vmatprep.subr.mxu0 0.0
    %2519 = vmatpush1.msra.mxu0 0.0
    %2520 = vmatprep.subr.mxu0 0.0
    %2521 = vmatpush1.msra.mxu0 0.0
    %2522 = vmatprep.subr.mxu0 0.0
    %2523 = vmatpush1.msra.mxu0 0.0
    %2524 = vmatprep.subr.mxu0 0.0
    %2525 = vmatpush1.msra.mxu0 0.0
    %2526 = vmatprep.subr.mxu0 0.0
    %2527 = vmatpush1.msra.mxu0 0.0
    %2528 = vmatprep.subr.mxu0 0.0
    %2529 = vmatpush1.msra.mxu0 0.0
    %2530 = vmatprep.subr.mxu0 0.0
    %2531 = vmatpush1.msra.mxu0 0.0
    %2532 = vmatprep.subr.mxu0 0.0
    %2533 = vmatpush1.msra.mxu0 0.0
    %2534 = vmatprep.subr.mxu0 0.0
    %2535 = vmatpush1.msra.mxu0 0.0
    %2536 = vmatprep.subr.mxu0 0.0
    %2537 = vmatpush1.msra.mxu0 0.0
    %2538 = vmatprep.subr.mxu0 0.0
    %2539 = vmatpush1.msra.mxu0 0.0
    %2540 = vmatprep.subr.mxu0 0.0
    %2541 = vmatpush1.msra.mxu0 0.0
    %2542 = vmatprep.subr.mxu0 0.0
    %2543 = vmatpush1.msra.mxu0 0.0
    %2544 = vmatprep.subr.mxu0 0.0
    %2545 = vmatpush1.msra.mxu0 0.0
    %2546 = vmatprep.subr.mxu0 0.0
    %2547 = vmatpush1.msra.mxu0 0.0
    %2548 = vmatprep.subr.mxu0 0.0
    %2549 = vmatpush1.msra.mxu0 0.0
    %2550 = vmatprep.subr.mxu0 0.0
    %2551 = vmatpush1.msra.mxu0 0.0
    %2552 = vmatprep.subr.mxu0 0.0
    %2553 = vmatpush1.msra.mxu0 0.0
    %2554 = vmatprep.mubr.f32.mxu0 0.0
    %2555 = vmatmul.mubr.f32.gmra.mrb[0].mxu0 %v2417
    %v2556 = vpop.f32.mrb[0].mxu0
    %v2557 = vadd.f32 0.0, %v2556
    %v2558 = vpop.f32.mrb[0].mxu0
    %2559 = vdwg.mxu0
    %v2560 = vadd.f32 %v2411, %v2486
    %v2561 = vadd.f32 %v2412, %v2488
    %v2562 = vadd.f32 %v2413, %v2557
    %v2563 = vadd.f32 %v2560, %v552
    %v2564 = vadd.f32 %v2561, %v556
    %v2565 = vadd.f32 %v2562, %v560
    %v2566 = vmul.f32 %v2563, %v177
    %v2567 = vmul.f32 %v2564, %v178
    %v2568 = vmul.f32 %v2565, %v179
    %v2569 = vtanh.pop %v2566
    %v2570 = vtanh.pop %v2567
    %v2571 = vtanh.pop %v2568
    %v2572 = vmul.f32 %v2569, 0.5
    %v2573 = vmul.f32 %v2570, 0.5
    %v2574 = vmul.f32 %v2571, 0.5
    %v2575 = vadd.f32 %v2572, 0.5
    %v2576 = vadd.f32 %v2573, 0.5
    %v2577 = vadd.f32 %v2574, 0.5
    %v2578 = vsel %vm174, %v2569, %v2575
    %v2579 = vsel %vm175, %v2570, %v2576
    %v2580 = vsel %vm176, %v2571, %v2577
    %v2581 = vmul.f32 %v2578, %v1929
    %2583 = vrot.lane.b32.xlu0 %v2578, 64
    %v2584 = vpop.permute.xlu0 %2583
    %v2586 = vmul.f32 %v2578, %v2584
    %2588 = vrot.lane.b32.xlu0 %v2586, 32
    %v2589 = vpop.permute.xlu0 %2588
    %v2591 = vadd.f32 %v2581, %v2589
    %v2592 = vtanh.pop %v2591
    %2594 = vrot.lane.b32.xlu0 %v2592, 64
    %v2595 = vpop.permute.xlu0 %2594
    %v2597 = vmul.f32 %v2578, %v2595
    %v2598 = vmul.f32 %v2579, %v1946
    %2600 = vrot.lane.b32.xlu0 %v2579, 64
    %v2601 = vpop.permute.xlu0 %2600
    %v2603 = vmul.f32 %v2579, %v2601
    %2605 = vrot.lane.b32.xlu0 %v2603, 32
    %v2606 = vpop.permute.xlu0 %2605
    %v2608 = vadd.f32 %v2598, %v2606
    %v2609 = vtanh.pop %v2608
    %2611 = vrot.lane.b32.xlu0 %v2609, 64
    %v2612 = vpop.permute.xlu0 %2611
    %v2614 = vmul.f32 %v2579, %v2612
    %v2615 = vmul.f32 %v2580, %v1963
    %2617 = vrot.lane.b32.xlu0 %v2580, 64
    %v2618 = vpop.permute.xlu0 %2617
    %v2620 = vmul.f32 %v2580, %v2618
    %2622 = vrot.lane.b32.xlu0 %v2620, 32
    %v2623 = vpop.permute.xlu0 %2622
    %v2625 = vadd.f32 %v2615, %v2623
    %v2626 = vtanh.pop %v2625
    %2628 = vrot.lane.b32.xlu0 %v2626, 64
    %v2629 = vpop.permute.xlu0 %2628
    %v2631 = vmul.f32 %v2580, %v2629
    %v2632 = vld [vmem:[#allocation2 + $0x5] sm:$0x1]
    %v2633 = vld [vmem:[#allocation2 + $0xd] sm:$0x1]
    %2635 = vrot.lane.b32.xlu0 %v2597, 32
    %v2636 = vpop.permute.xlu0 %2635
    %v2637 = vsel %vm182, %v2636, 0
    %2639 = vmatprep.subr.mxu0 %v92
    %2640 = vmatpush1.msra.mxu0 %v91
    %2641 = vmatprep.subr.mxu0 %v95
    %2642 = vmatpush1.msra.mxu0 %v94
    %2643 = vmatprep.subr.mxu0 %v98
    %2644 = vmatpush1.msra.mxu0 %v97
    %2645 = vmatprep.subr.mxu0 %v101
    %2646 = vmatpush1.msra.mxu0 %v100
    %2647 = vmatprep.subr.mxu0 0.0
    %2648 = vmatpush1.msra.mxu0 0.0
    %2649 = vmatprep.subr.mxu0 0.0
    %2650 = vmatpush1.msra.mxu0 0.0
    %2651 = vmatprep.subr.mxu0 0.0
    %2652 = vmatpush1.msra.mxu0 0.0
    %2653 = vmatprep.subr.mxu0 0.0
    %2654 = vmatpush1.msra.mxu0 0.0
    %2655 = vmatprep.subr.mxu0 0.0
    %2656 = vmatpush1.msra.mxu0 0.0
    %2657 = vmatprep.subr.mxu0 0.0
    %2658 = vmatpush1.msra.mxu0 0.0
    %2659 = vmatprep.subr.mxu0 0.0
    %2660 = vmatpush1.msra.mxu0 0.0
    %2661 = vmatprep.subr.mxu0 0.0
    %2662 = vmatpush1.msra.mxu0 0.0
    %2663 = vmatprep.subr.mxu0 0.0
    %2664 = vmatpush1.msra.mxu0 0.0
    %2665 = vmatprep.subr.mxu0 0.0
    %2666 = vmatpush1.msra.mxu0 0.0
    %2667 = vmatprep.subr.mxu0 0.0
    %2668 = vmatpush1.msra.mxu0 0.0
    %2669 = vmatprep.subr.mxu0 0.0
    %2670 = vmatpush1.msra.mxu0 0.0
    %2671 = vmatprep.subr.mxu0 0.0
    %2672 = vmatpush1.msra.mxu0 0.0
    %2673 = vmatprep.subr.mxu0 0.0
    %2674 = vmatpush1.msra.mxu0 0.0
    %2675 = vmatprep.subr.mxu0 0.0
    %2676 = vmatpush1.msra.mxu0 0.0
    %2677 = vmatprep.subr.mxu0 0.0
    %2678 = vmatpush1.msra.mxu0 0.0
    %2679 = vmatprep.subr.mxu0 0.0
    %2680 = vmatpush1.msra.mxu0 0.0
    %2681 = vmatprep.subr.mxu0 0.0
    %2682 = vmatpush1.msra.mxu0 0.0
    %2683 = vmatprep.subr.mxu0 0.0
    %2684 = vmatpush1.msra.mxu0 0.0
    %2685 = vmatprep.subr.mxu0 0.0
    %2686 = vmatpush1.msra.mxu0 0.0
    %2687 = vmatprep.subr.mxu0 0.0
    %2688 = vmatpush1.msra.mxu0 0.0
    %2689 = vmatprep.subr.mxu0 0.0
    %2690 = vmatpush1.msra.mxu0 0.0
    %2691 = vmatprep.subr.mxu0 0.0
    %2692 = vmatpush1.msra.mxu0 0.0
    %2693 = vmatprep.subr.mxu0 0.0
    %2694 = vmatpush1.msra.mxu0 0.0
    %2695 = vmatprep.subr.mxu0 0.0
    %2696 = vmatpush1.msra.mxu0 0.0
    %2697 = vmatprep.subr.mxu0 0.0
    %2698 = vmatpush1.msra.mxu0 0.0
    %2699 = vmatprep.subr.mxu0 0.0
    %2700 = vmatpush1.msra.mxu0 0.0
    %2701 = vmatprep.subr.mxu0 0.0
    %2702 = vmatpush1.msra.mxu0 0.0
    %2703 = vmatprep.mubr.f32.mxu0 0.0
    %2704 = vmatmul.mubr.f32.gmra.mrb[0].mxu0 %v2637
    %v2705 = vpop.f32.mrb[0].mxu0
    %v2706 = vadd.f32 0.0, %v2705
    %v2707 = vpop.f32.mrb[0].mxu0
    %v2708 = vadd.f32 0.0, %v2707
    %2709 = vdwg.mxu0
    %2710 = vmatprep.subr.mxu0 0.0
    %2711 = vmatpush1.msra.mxu0 %v93
    %2712 = vmatprep.subr.mxu0 0.0
    %2713 = vmatpush1.msra.mxu0 %v96
    %2714 = vmatprep.subr.mxu0 0.0
    %2715 = vmatpush1.msra.mxu0 %v99
    %2716 = vmatprep.subr.mxu0 0.0
    %2717 = vmatpush1.msra.mxu0 %v102
    %2718 = vmatprep.subr.mxu0 0.0
    %2719 = vmatpush1.msra.mxu0 0.0
    %2720 = vmatprep.subr.mxu0 0.0
    %2721 = vmatpush1.msra.mxu0 0.0
    %2722 = vmatprep.subr.mxu0 0.0
    %2723 = vmatpush1.msra.mxu0 0.0
    %2724 = vmatprep.subr.mxu0 0.0
    %2725 = vmatpush1.msra.mxu0 0.0
    %2726 = vmatprep.subr.mxu0 0.0
    %2727 = vmatpush1.msra.mxu0 0.0
    %2728 = vmatprep.subr.mxu0 0.0
    %2729 = vmatpush1.msra.mxu0 0.0
    %2730 = vmatprep.subr.mxu0 0.0
    %2731 = vmatpush1.msra.mxu0 0.0
    %2732 = vmatprep.subr.mxu0 0.0
    %2733 = vmatpush1.msra.mxu0 0.0
    %2734 = vmatprep.subr.mxu0 0.0
    %2735 = vmatpush1.msra.mxu0 0.0
    %2736 = vmatprep.subr.mxu0 0.0
    %2737 = vmatpush1.msra.mxu0 0.0
    %2738 = vmatprep.subr.mxu0 0.0
    %2739 = vmatpush1.msra.mxu0 0.0
    %2740 = vmatprep.subr.mxu0 0.0
    %2741 = vmatpush1.msra.mxu0 0.0
    %2742 = vmatprep.subr.mxu0 0.0
    %2743 = vmatpush1.msra.mxu0 0.0
    %2744 = vmatprep.subr.mxu0 0.0
    %2745 = vmatpush1.msra.mxu0 0.0
    %2746 = vmatprep.subr.mxu0 0.0
    %2747 = vmatpush1.msra.mxu0 0.0
    %2748 = vmatprep.subr.mxu0 0.0
    %2749 = vmatpush1.msra.mxu0 0.0
    %2750 = vmatprep.subr.mxu0 0.0
    %2751 = vmatpush1.msra.mxu0 0.0
    %2752 = vmatprep.subr.mxu0 0.0
    %2753 = vmatpush1.msra.mxu0 0.0
    %2754 = vmatprep.subr.mxu0 0.0
    %2755 = vmatpush1.msra.mxu0 0.0
    %2756 = vmatprep.subr.mxu0 0.0
    %2757 = vmatpush1.msra.mxu0 0.0
    %2758 = vmatprep.subr.mxu0 0.0
    %2759 = vmatpush1.msra.mxu0 0.0
    %2760 = vmatprep.subr.mxu0 0.0
    %2761 = vmatpush1.msra.mxu0 0.0
    %2762 = vmatprep.subr.mxu0 0.0
    %2763 = vmatpush1.msra.mxu0 0.0
    %2764 = vmatprep.subr.mxu0 0.0
    %2765 = vmatpush1.msra.mxu0 0.0
    %2766 = vmatprep.subr.mxu0 0.0
    %2767 = vmatpush1.msra.mxu0 0.0
    %2768 = vmatprep.subr.mxu0 0.0
    %2769 = vmatpush1.msra.mxu0 0.0
    %2770 = vmatprep.subr.mxu0 0.0
    %2771 = vmatpush1.msra.mxu0 0.0
    %2772 = vmatprep.subr.mxu0 0.0
    %2773 = vmatpush1.msra.mxu0 0.0
    %2774 = vmatprep.mubr.f32.mxu0 0.0
    %2775 = vmatmul.mubr.f32.gmra.mrb[0].mxu0 %v2637
    %v2776 = vpop.f32.mrb[0].mxu0
    %v2777 = vadd.f32 0.0, %v2776
    %v2778 = vpop.f32.mrb[0].mxu0
    %2779 = vdwg.mxu0
    %v2782 = vrot.slane %v2633, 7
    %v2783 = vsel %vm259, %v2782, %v2632
    %v2784 = vsel %vm261, %v2783, 0
    %2786 = vmatprep.subr.mxu0 %v86
    %2787 = vmatpush1.msra.mxu0 %v85
    %2788 = vmatprep.subr.mxu0 %v89
    %2789 = vmatpush1.msra.mxu0 %v88
    %2790 = vmatprep.subr.mxu0 0.0
    %2791 = vmatpush1.msra.mxu0 0.0
    %2792 = vmatprep.subr.mxu0 0.0
    %2793 = vmatpush1.msra.mxu0 0.0
    %2794 = vmatprep.subr.mxu0 0.0
    %2795 = vmatpush1.msra.mxu0 0.0
    %2796 = vmatprep.subr.mxu0 0.0
    %2797 = vmatpush1.msra.mxu0 0.0
    %2798 = vmatprep.subr.mxu0 0.0
    %2799 = vmatpush1.msra.mxu0 0.0
    %2800 = vmatprep.subr.mxu0 0.0
    %2801 = vmatpush1.msra.mxu0 0.0
    %2802 = vmatprep.subr.mxu0 0.0
    %2803 = vmatpush1.msra.mxu0 0.0
    %2804 = vmatprep.subr.mxu0 0.0
    %2805 = vmatpush1.msra.mxu0 0.0
    %2806 = vmatprep.subr.mxu0 0.0
    %2807 = vmatpush1.msra.mxu0 0.0
    %2808 = vmatprep.subr.mxu0 0.0
    %2809 = vmatpush1.msra.mxu0 0.0
    %2810 = vmatprep.subr.mxu0 0.0
    %2811 = vmatpush1.msra.mxu0 0.0
    %2812 = vmatprep.subr.mxu0 0.0
    %2813 = vmatpush1.msra.mxu0 0.0
    %2814 = vmatprep.subr.mxu0 0.0
    %2815 = vmatpush1.msra.mxu0 0.0
    %2816 = vmatprep.subr.mxu0 0.0
    %2817 = vmatpush1.msra.mxu0 0.0
    %2818 = vmatprep.subr.mxu0 0.0
    %2819 = vmatpush1.msra.mxu0 0.0
    %2820 = vmatprep.subr.mxu0 0.0
    %2821 = vmatpush1.msra.mxu0 0.0
    %2822 = vmatprep.subr.mxu0 0.0
    %2823 = vmatpush1.msra.mxu0 0.0
    %2824 = vmatprep.subr.mxu0 0.0
    %2825 = vmatpush1.msra.mxu0 0.0
    %2826 = vmatprep.subr.mxu0 0.0
    %2827 = vmatpush1.msra.mxu0 0.0
    %2828 = vmatprep.subr.mxu0 0.0
    %2829 = vmatpush1.msra.mxu0 0.0
    %2830 = vmatprep.subr.mxu0 0.0
    %2831 = vmatpush1.msra.mxu0 0.0
    %2832 = vmatprep.subr.mxu0 0.0
    %2833 = vmatpush1.msra.mxu0 0.0
    %2834 = vmatprep.subr.mxu0 0.0
    %2835 = vmatpush1.msra.mxu0 0.0
    %2836 = vmatprep.subr.mxu0 0.0
    %2837 = vmatpush1.msra.mxu0 0.0
    %2838 = vmatprep.subr.mxu0 0.0
    %2839 = vmatpush1.msra.mxu0 0.0
    %2840 = vmatprep.subr.mxu0 0.0
    %2841 = vmatpush1.msra.mxu0 0.0
    %2842 = vmatprep.subr.mxu0 0.0
    %2843 = vmatpush1.msra.mxu0 0.0
    %2844 = vmatprep.subr.mxu0 0.0
    %2845 = vmatpush1.msra.mxu0 0.0
    %2846 = vmatprep.subr.mxu0 0.0
    %2847 = vmatpush1.msra.mxu0 0.0
    %2848 = vmatprep.subr.mxu0 0.0
    %2849 = vmatpush1.msra.mxu0 0.0
    %2850 = vmatprep.mubr.f32.mxu0 0.0
    %2851 = vmatmul.mubr.f32.gmra.mrb[0].mxu0 %v2784
    %v2852 = vpop.f32.mrb[0].mxu0
    %v2853 = vadd.f32 %v2706, %v2852
    %v2854 = vpop.f32.mrb[0].mxu0
    %v2855 = vadd.f32 %v2708, %v2854
    %2856 = vdwg.mxu0
    %2857 = vmatprep.subr.mxu0 0.0
    %2858 = vmatpush1.msra.mxu0 %v87
    %2859 = vmatprep.subr.mxu0 0.0
    %2860 = vmatpush1.msra.mxu0 %v90
    %2861 = vmatprep.subr.mxu0 0.0
    %2862 = vmatpush1.msra.mxu0 0.0
    %2863 = vmatprep.subr.mxu0 0.0
    %2864 = vmatpush1.msra.mxu0 0.0
    %2865 = vmatprep.subr.mxu0 0.0
    %2866 = vmatpush1.msra.mxu0 0.0
    %2867 = vmatprep.subr.mxu0 0.0
    %2868 = vmatpush1.msra.mxu0 0.0
    %2869 = vmatprep.subr.mxu0 0.0
    %2870 = vmatpush1.msra.mxu0 0.0
    %2871 = vmatprep.subr.mxu0 0.0
    %2872 = vmatpush1.msra.mxu0 0.0
    %2873 = vmatprep.subr.mxu0 0.0
    %2874 = vmatpush1.msra.mxu0 0.0
    %2875 = vmatprep.subr.mxu0 0.0
    %2876 = vmatpush1.msra.mxu0 0.0
    %2877 = vmatprep.subr.mxu0 0.0
    %2878 = vmatpush1.msra.mxu0 0.0
    %2879 = vmatprep.subr.mxu0 0.0
    %2880 = vmatpush1.msra.mxu0 0.0
    %2881 = vmatprep.subr.mxu0 0.0
    %2882 = vmatpush1.msra.mxu0 0.0
    %2883 = vmatprep.subr.mxu0 0.0
    %2884 = vmatpush1.msra.mxu0 0.0
    %2885 = vmatprep.subr.mxu0 0.0
    %2886 = vmatpush1.msra.mxu0 0.0
    %2887 = vmatprep.subr.mxu0 0.0
    %2888 = vmatpush1.msra.mxu0 0.0
    %2889 = vmatprep.subr.mxu0 0.0
    %2890 = vmatpush1.msra.mxu0 0.0
    %2891 = vmatprep.subr.mxu0 0.0
    %2892 = vmatpush1.msra.mxu0 0.0
    %2893 = vmatprep.subr.mxu0 0.0
    %2894 = vmatpush1.msra.mxu0 0.0
    %2895 = vmatprep.subr.mxu0 0.0
    %2896 = vmatpush1.msra.mxu0 0.0
    %2897 = vmatprep.subr.mxu0 0.0
    %2898 = vmatpush1.msra.mxu0 0.0
    %2899 = vmatprep.subr.mxu0 0.0
    %2900 = vmatpush1.msra.mxu0 0.0
    %2901 = vmatprep.subr.mxu0 0.0
    %2902 = vmatpush1.msra.mxu0 0.0
    %2903 = vmatprep.subr.mxu0 0.0
    %2904 = vmatpush1.msra.mxu0 0.0
    %2905 = vmatprep.subr.mxu0 0.0
    %2906 = vmatpush1.msra.mxu0 0.0
    %2907 = vmatprep.subr.mxu0 0.0
    %2908 = vmatpush1.msra.mxu0 0.0
    %2909 = vmatprep.subr.mxu0 0.0
    %2910 = vmatpush1.msra.mxu0 0.0
    %2911 = vmatprep.subr.mxu0 0.0
    %2912 = vmatpush1.msra.mxu0 0.0
    %2913 = vmatprep.subr.mxu0 0.0
    %2914 = vmatpush1.msra.mxu0 0.0
    %2915 = vmatprep.subr.mxu0 0.0
    %2916 = vmatpush1.msra.mxu0 0.0
    %2917 = vmatprep.subr.mxu0 0.0
    %2918 = vmatpush1.msra.mxu0 0.0
    %2919 = vmatprep.subr.mxu0 0.0
    %2920 = vmatpush1.msra.mxu0 0.0
    %2921 = vmatprep.mubr.f32.mxu0 0.0
    %2922 = vmatmul.mubr.f32.gmra.mrb[0].mxu0 %v2784
    %v2923 = vpop.f32.mrb[0].mxu0
    %v2924 = vadd.f32 %v2777, %v2923
    %v2925 = vpop.f32.mrb[0].mxu0
    %2926 = vdwg.mxu0
    %2928 = vrot.lane.b32.xlu0 %v2614, 32
    %v2929 = vpop.permute.xlu0 %2928
    %v2930 = vsel %vm182, %v2929, 0
    %2932 = vmatprep.subr.mxu0 %v104
    %2933 = vmatpush1.msra.mxu0 %v103
    %2934 = vmatprep.subr.mxu0 %v107
    %2935 = vmatpush1.msra.mxu0 %v106
    %2936 = vmatprep.subr.mxu0 %v110
    %2937 = vmatpush1.msra.mxu0 %v109
    %2938 = vmatprep.subr.mxu0 %v113
    %2939 = vmatpush1.msra.mxu0 %v112
    %2940 = vmatprep.subr.mxu0 0.0
    %2941 = vmatpush1.msra.mxu0 0.0
    %2942 = vmatprep.subr.mxu0 0.0
    %2943 = vmatpush1.msra.mxu0 0.0
    %2944 = vmatprep.subr.mxu0 0.0
    %2945 = vmatpush1.msra.mxu0 0.0
    %2946 = vmatprep.subr.mxu0 0.0
    %2947 = vmatpush1.msra.mxu0 0.0
    %2948 = vmatprep.subr.mxu0 0.0
    %2949 = vmatpush1.msra.mxu0 0.0
    %2950 = vmatprep.subr.mxu0 0.0
    %2951 = vmatpush1.msra.mxu0 0.0
    %2952 = vmatprep.subr.mxu0 0.0
    %2953 = vmatpush1.msra.mxu0 0.0
    %2954 = vmatprep.subr.mxu0 0.0
    %2955 = vmatpush1.msra.mxu0 0.0
    %2956 = vmatprep.subr.mxu0 0.0
    %2957 = vmatpush1.msra.mxu0 0.0
    %2958 = vmatprep.subr.mxu0 0.0
    %2959 = vmatpush1.msra.mxu0 0.0
    %2960 = vmatprep.subr.mxu0 0.0
    %2961 = vmatpush1.msra.mxu0 0.0
    %2962 = vmatprep.subr.mxu0 0.0
    %2963 = vmatpush1.msra.mxu0 0.0
    %2964 = vmatprep.subr.mxu0 0.0
    %2965 = vmatpush1.msra.mxu0 0.0
    %2966 = vmatprep.subr.mxu0 0.0
    %2967 = vmatpush1.msra.mxu0 0.0
    %2968 = vmatprep.subr.mxu0 0.0
    %2969 = vmatpush1.msra.mxu0 0.0
    %2970 = vmatprep.subr.mxu0 0.0
    %2971 = vmatpush1.msra.mxu0 0.0
    %2972 = vmatprep.subr.mxu0 0.0
    %2973 = vmatpush1.msra.mxu0 0.0
    %2974 = vmatprep.subr.mxu0 0.0
    %2975 = vmatpush1.msra.mxu0 0.0
    %2976 = vmatprep.subr.mxu0 0.0
    %2977 = vmatpush1.msra.mxu0 0.0
    %2978 = vmatprep.subr.mxu0 0.0
    %2979 = vmatpush1.msra.mxu0 0.0
    %2980 = vmatprep.subr.mxu0 0.0
    %2981 = vmatpush1.msra.mxu0 0.0
    %2982 = vmatprep.subr.mxu0 0.0
    %2983 = vmatpush1.msra.mxu0 0.0
    %2984 = vmatprep.subr.mxu0 0.0
    %2985 = vmatpush1.msra.mxu0 0.0
    %2986 = vmatprep.subr.mxu0 0.0
    %2987 = vmatpush1.msra.mxu0 0.0
    %2988 = vmatprep.subr.mxu0 0.0
    %2989 = vmatpush1.msra.mxu0 0.0
    %2990 = vmatprep.subr.mxu0 0.0
    %2991 = vmatpush1.msra.mxu0 0.0
    %2992 = vmatprep.subr.mxu0 0.0
    %2993 = vmatpush1.msra.mxu0 0.0
    %2994 = vmatprep.subr.mxu0 0.0
    %2995 = vmatpush1.msra.mxu0 0.0
    %2996 = vmatprep.mubr.f32.mxu0 0.0
    %2997 = vmatmul.mubr.f32.gmra.mrb[0].mxu0 %v2930
    %v2998 = vpop.f32.mrb[0].mxu0
    %v2999 = vadd.f32 0.0, %v2998
    %v3000 = vpop.f32.mrb[0].mxu0
    %v3001 = vadd.f32 0.0, %v3000
    %3002 = vdwg.mxu0
    %3003 = vmatprep.subr.mxu0 0.0
    %3004 = vmatpush1.msra.mxu0 %v105
    %3005 = vmatprep.subr.mxu0 0.0
    %3006 = vmatpush1.msra.mxu0 %v108
    %3007 = vmatprep.subr.mxu0 0.0
    %3008 = vmatpush1.msra.mxu0 %v111
    %3009 = vmatprep.subr.mxu0 0.0
    %3010 = vmatpush1.msra.mxu0 %v114
    %3011 = vmatprep.subr.mxu0 0.0
    %3012 = vmatpush1.msra.mxu0 0.0
    %3013 = vmatprep.subr.mxu0 0.0
    %3014 = vmatpush1.msra.mxu0 0.0
    %3015 = vmatprep.subr.mxu0 0.0
    %3016 = vmatpush1.msra.mxu0 0.0
    %3017 = vmatprep.subr.mxu0 0.0
    %3018 = vmatpush1.msra.mxu0 0.0
    %3019 = vmatprep.subr.mxu0 0.0
    %3020 = vmatpush1.msra.mxu0 0.0
    %3021 = vmatprep.subr.mxu0 0.0
    %3022 = vmatpush1.msra.mxu0 0.0
    %3023 = vmatprep.subr.mxu0 0.0
    %3024 = vmatpush1.msra.mxu0 0.0
    %3025 = vmatprep.subr.mxu0 0.0
    %3026 = vmatpush1.msra.mxu0 0.0
    %3027 = vmatprep.subr.mxu0 0.0
    %3028 = vmatpush1.msra.mxu0 0.0
    %3029 = vmatprep.subr.mxu0 0.0
    %3030 = vmatpush1.msra.mxu0 0.0
    %3031 = vmatprep.subr.mxu0 0.0
    %3032 = vmatpush1.msra.mxu0 0.0
    %3033 = vmatprep.subr.mxu0 0.0
    %3034 = vmatpush1.msra.mxu0 0.0
    %3035 = vmatprep.subr.mxu0 0.0
    %3036 = vmatpush1.msra.mxu0 0.0
    %3037 = vmatprep.subr.mxu0 0.0
    %3038 = vmatpush1.msra.mxu0 0.0
    %3039 = vmatprep.subr.mxu0 0.0
    %3040 = vmatpush1.msra.mxu0 0.0
    %3041 = vmatprep.subr.mxu0 0.0
    %3042 = vmatpush1.msra.mxu0 0.0
    %3043 = vmatprep.subr.mxu0 0.0
    %3044 = vmatpush1.msra.mxu0 0.0
    %3045 = vmatprep.subr.mxu0 0.0
    %3046 = vmatpush1.msra.mxu0 0.0
    %3047 = vmatprep.subr.mxu0 0.0
    %3048 = vmatpush1.msra.mxu0 0.0
    %3049 = vmatprep.subr.mxu0 0.0
    %3050 = vmatpush1.msra.mxu0 0.0
    %3051 = vmatprep.subr.mxu0 0.0
    %3052 = vmatpush1.msra.mxu0 0.0
    %3053 = vmatprep.subr.mxu0 0.0
    %3054 = vmatpush1.msra.mxu0 0.0
    %3055 = vmatprep.subr.mxu0 0.0
    %3056 = vmatpush1.msra.mxu0 0.0
    %3057 = vmatprep.subr.mxu0 0.0
    %3058 = vmatpush1.msra.mxu0 0.0
    %3059 = vmatprep.subr.mxu0 0.0
    %3060 = vmatpush1.msra.mxu0 0.0
    %3061 = vmatprep.subr.mxu0 0.0
    %3062 = vmatpush1.msra.mxu0 0.0
    %3063 = vmatprep.subr.mxu0 0.0
    %3064 = vmatpush1.msra.mxu0 0.0
    %3065 = vmatprep.subr.mxu0 0.0
    %3066 = vmatpush1.msra.mxu0 0.0
    %3067 = vmatprep.mubr.f32.mxu0 0.0
    %3068 = vmatmul.mubr.f32.gmra.mrb[0].mxu0 %v2930
    %v3069 = vpop.f32.mrb[0].mxu0
    %v3070 = vadd.f32 0.0, %v3069
    %v3071 = vpop.f32.mrb[0].mxu0
    %3072 = vdwg.mxu0
    %v3073 = vadd.f32 %v2853, %v2999
    %v3074 = vadd.f32 %v2855, %v3001
    %v3075 = vadd.f32 %v2924, %v3070
    %3077 = vrot.lane.b32.xlu0 %v2631, 32
    %v3078 = vpop.permute.xlu0 %3077
    %v3079 = vsel %vm182, %v3078, 0
    %3081 = vmatprep.subr.mxu0 %v116
    %3082 = vmatpush1.msra.mxu0 %v115
    %3083 = vmatprep.subr.mxu0 %v119
    %3084 = vmatpush1.msra.mxu0 %v118
    %3085 = vmatprep.subr.mxu0 %v122
    %3086 = vmatpush1.msra.mxu0 %v121
    %3087 = vmatprep.subr.mxu0 %v125
    %3088 = vmatpush1.msra.mxu0 %v124
    %3089 = vmatprep.subr.mxu0 0.0
    %3090 = vmatpush1.msra.mxu0 0.0
    %3091 = vmatprep.subr.mxu0 0.0
    %3092 = vmatpush1.msra.mxu0 0.0
    %3093 = vmatprep.subr.mxu0 0.0
    %3094 = vmatpush1.msra.mxu0 0.0
    %3095 = vmatprep.subr.mxu0 0.0
    %3096 = vmatpush1.msra.mxu0 0.0
    %3097 = vmatprep.subr.mxu0 0.0
    %3098 = vmatpush1.msra.mxu0 0.0
    %3099 = vmatprep.subr.mxu0 0.0
    %3100 = vmatpush1.msra.mxu0 0.0
    %3101 = vmatprep.subr.mxu0 0.0
    %3102 = vmatpush1.msra.mxu0 0.0
    %3103 = vmatprep.subr.mxu0 0.0
    %3104 = vmatpush1.msra.mxu0 0.0
    %3105 = vmatprep.subr.mxu0 0.0
    %3106 = vmatpush1.msra.mxu0 0.0
    %3107 = vmatprep.subr.mxu0 0.0
    %3108 = vmatpush1.msra.mxu0 0.0
    %3109 = vmatprep.subr.mxu0 0.0
    %3110 = vmatpush1.msra.mxu0 0.0
    %3111 = vmatprep.subr.mxu0 0.0
    %3112 = vmatpush1.msra.mxu0 0.0
    %3113 = vmatprep.subr.mxu0 0.0
    %3114 = vmatpush1.msra.mxu0 0.0
    %3115 = vmatprep.subr.mxu0 0.0
    %3116 = vmatpush1.msra.mxu0 0.0
    %3117 = vmatprep.subr.mxu0 0.0
    %3118 = vmatpush1.msra.mxu0 0.0
    %3119 = vmatprep.subr.mxu0 0.0
    %3120 = vmatpush1.msra.mxu0 0.0
    %3121 = vmatprep.subr.mxu0 0.0
    %3122 = vmatpush1.msra.mxu0 0.0
    %3123 = vmatprep.subr.mxu0 0.0
    %3124 = vmatpush1.msra.mxu0 0.0
    %3125 = vmatprep.subr.mxu0 0.0
    %3126 = vmatpush1.msra.mxu0 0.0
    %3127 = vmatprep.subr.mxu0 0.0
    %3128 = vmatpush1.msra.mxu0 0.0
    %3129 = vmatprep.subr.mxu0 0.0
    %3130 = vmatpush1.msra.mxu0 0.0
    %3131 = vmatprep.subr.mxu0 0.0
    %3132 = vmatpush1.msra.mxu0 0.0
    %3133 = vmatprep.subr.mxu0 0.0
    %3134 = vmatpush1.msra.mxu0 0.0
    %3135 = vmatprep.subr.mxu0 0.0
    %3136 = vmatpush1.msra.mxu0 0.0
    %3137 = vmatprep.subr.mxu0 0.0
    %3138 = vmatpush1.msra.mxu0 0.0
    %3139 = vmatprep.subr.mxu0 0.0
    %3140 = vmatpush1.msra.mxu0 0.0
    %3141 = vmatprep.subr.mxu0 0.0
    %3142 = vmatpush1.msra.mxu0 0.0
    %3143 = vmatprep.subr.mxu0 0.0
    %3144 = vmatpush1.msra.mxu0 0.0
    %3145 = vmatprep.mubr.f32.mxu0 0.0
    %3146 = vmatmul.mubr.f32.gmra.mrb[0].mxu0 %v3079
    %v3147 = vpop.f32.mrb[0].mxu0
    %v3148 = vadd.f32 0.0, %v3147
    %v3149 = vpop.f32.mrb[0].mxu0
    %v3150 = vadd.f32 0.0, %v3149
    %3151 = vdwg.mxu0
    %3152 = vmatprep.subr.mxu0 0.0
    %3153 = vmatpush1.msra.mxu0 %v117
    %3154 = vmatprep.subr.mxu0 0.0
    %3155 = vmatpush1.msra.mxu0 %v120
    %3156 = vmatprep.subr.mxu0 0.0
    %3157 = vmatpush1.msra.mxu0 %v123
    %3158 = vmatprep.subr.mxu0 0.0
    %3159 = vmatpush1.msra.mxu0 %v126
    %3160 = vmatprep.subr.mxu0 0.0
    %3161 = vmatpush1.msra.mxu0 0.0
    %3162 = vmatprep.subr.mxu0 0.0
    %3163 = vmatpush1.msra.mxu0 0.0
    %3164 = vmatprep.subr.mxu0 0.0
    %3165 = vmatpush1.msra.mxu0 0.0
    %3166 = vmatprep.subr.mxu0 0.0
    %3167 = vmatpush1.msra.mxu0 0.0
    %3168 = vmatprep.subr.mxu0 0.0
    %3169 = vmatpush1.msra.mxu0 0.0
    %3170 = vmatprep.subr.mxu0 0.0
    %3171 = vmatpush1.msra.mxu0 0.0
    %3172 = vmatprep.subr.mxu0 0.0
    %3173 = vmatpush1.msra.mxu0 0.0
    %3174 = vmatprep.subr.mxu0 0.0
    %3175 = vmatpush1.msra.mxu0 0.0
    %3176 = vmatprep.subr.mxu0 0.0
    %3177 = vmatpush1.msra.mxu0 0.0
    %3178 = vmatprep.subr.mxu0 0.0
    %3179 = vmatpush1.msra.mxu0 0.0
    %3180 = vmatprep.subr.mxu0 0.0
    %3181 = vmatpush1.msra.mxu0 0.0
    %3182 = vmatprep.subr.mxu0 0.0
    %3183 = vmatpush1.msra.mxu0 0.0
    %3184 = vmatprep.subr.mxu0 0.0
    %3185 = vmatpush1.msra.mxu0 0.0
    %3186 = vmatprep.subr.mxu0 0.0
    %3187 = vmatpush1.msra.mxu0 0.0
    %3188 = vmatprep.subr.mxu0 0.0
    %3189 = vmatpush1.msra.mxu0 0.0
    %3190 = vmatprep.subr.mxu0 0.0
    %3191 = vmatpush1.msra.mxu0 0.0
    %3192 = vmatprep.subr.mxu0 0.0
    %3193 = vmatpush1.msra.mxu0 0.0
    %3194 = vmatprep.subr.mxu0 0.0
    %3195 = vmatpush1.msra.mxu0 0.0
    %3196 = vmatprep.subr.mxu0 0.0
    %3197 = vmatpush1.msra.mxu0 0.0
    %3198 = vmatprep.subr.mxu0 0.0
    %3199 = vmatpush1.msra.mxu0 0.0
    %3200 = vmatprep.subr.mxu0 0.0
    %3201 = vmatpush1.msra.mxu0 0.0
    %3202 = vmatprep.subr.mxu0 0.0
    %3203 = vmatpush1.msra.mxu0 0.0
    %3204 = vmatprep.subr.mxu0 0.0
    %3205 = vmatpush1.msra.mxu0 0.0
    %3206 = vmatprep.subr.mxu0 0.0
    %3207 = vmatpush1.msra.mxu0 0.0
    %3208 = vmatprep.subr.mxu0 0.0
    %3209 = vmatpush1.msra.mxu0 0.0
    %3210 = vmatprep.subr.mxu0 0.0
    %3211 = vmatpush1.msra.mxu0 0.0
    %3212 = vmatprep.subr.mxu0 0.0
    %3213 = vmatpush1.msra.mxu0 0.0
    %3214 = vmatprep.subr.mxu0 0.0
    %3215 = vmatpush1.msra.mxu0 0.0
    %3216 = vmatprep.mubr.f32.mxu0 0.0
    %3217 = vmatmul.mubr.f32.gmra.mrb[0].mxu0 %v3079
    %v3218 = vpop.f32.mrb[0].mxu0
    %v3219 = vadd.f32 0.0, %v3218
    %v3220 = vpop.f32.mrb[0].mxu0
    %3221 = vdwg.mxu0
    %v3222 = vadd.f32 %v3073, %v3148
    %v3223 = vadd.f32 %v3074, %v3150
    %v3224 = vadd.f32 %v3075, %v3219
    %v3225 = vadd.f32 %v3222, %v552
    %v3226 = vadd.f32 %v3223, %v556
    %v3227 = vadd.f32 %v3224, %v560
    %v3228 = vmul.f32 %v3225, %v177
    %v3229 = vmul.f32 %v3226, %v178
    %v3230 = vmul.f32 %v3227, %v179
    %v3231 = vtanh.pop %v3228
    %v3232 = vtanh.pop %v3229
    %v3233 = vtanh.pop %v3230
    %v3234 = vmul.f32 %v3231, 0.5
    %v3235 = vmul.f32 %v3232, 0.5
    %v3236 = vmul.f32 %v3233, 0.5
    %v3237 = vadd.f32 %v3234, 0.5
    %v3238 = vadd.f32 %v3235, 0.5
    %v3239 = vadd.f32 %v3236, 0.5
    %v3240 = vsel %vm174, %v3231, %v3237
    %v3241 = vsel %vm175, %v3232, %v3238
    %v3242 = vsel %vm176, %v3233, %v3239
    %v3243 = vmul.f32 %v3240, %v2591
    %3245 = vrot.lane.b32.xlu0 %v3240, 64
    %v3246 = vpop.permute.xlu0 %3245
    %v3248 = vmul.f32 %v3240, %v3246
    %3250 = vrot.lane.b32.xlu0 %v3248, 32
    %v3251 = vpop.permute.xlu0 %3250
    %v3253 = vadd.f32 %v3243, %v3251
    %v3254 = vtanh.pop %v3253
    %3256 = vrot.lane.b32.xlu0 %v3254, 64
    %v3257 = vpop.permute.xlu0 %3256
    %v3259 = vmul.f32 %v3240, %v3257
    %v3260 = vmul.f32 %v3241, %v2608
    %3262 = vrot.lane.b32.xlu0 %v3241, 64
    %v3263 = vpop.permute.xlu0 %3262
    %v3265 = vmul.f32 %v3241, %v3263
    %3267 = vrot.lane.b32.xlu0 %v3265, 32
    %v3268 = vpop.permute.xlu0 %3267
    %v3270 = vadd.f32 %v3260, %v3268
    %v3271 = vtanh.pop %v3270
    %3273 = vrot.lane.b32.xlu0 %v3271, 64
    %v3274 = vpop.permute.xlu0 %3273
    %v3276 = vmul.f32 %v3241, %v3274
    %v3277 = vmul.f32 %v3242, %v2625
    %3279 = vrot.lane.b32.xlu0 %v3242, 64
    %v3280 = vpop.permute.xlu0 %3279
    %v3282 = vmul.f32 %v3242, %v3280
    %3284 = vrot.lane.b32.xlu0 %v3282, 32
    %v3285 = vpop.permute.xlu0 %3284
    %v3287 = vadd.f32 %v3277, %v3285
    %v3288 = vtanh.pop %v3287
    %3290 = vrot.lane.b32.xlu0 %v3288, 64
    %v3291 = vpop.permute.xlu0 %3290
    %v3293 = vmul.f32 %v3242, %v3291
    %v3294 = vld [vmem:[#allocation2 + $0x6] sm:$0x1]
    %v3295 = vld [vmem:[#allocation2 + $0xe] sm:$0x1]
    %3297 = vrot.lane.b32.xlu0 %v3259, 32
    %v3298 = vpop.permute.xlu0 %3297
    %v3299 = vsel %vm182, %v3298, 0
    %3301 = vmatprep.subr.mxu0 %v92
    %3302 = vmatpush1.msra.mxu0 %v91
    %3303 = vmatprep.subr.mxu0 %v95
    %3304 = vmatpush1.msra.mxu0 %v94
    %3305 = vmatprep.subr.mxu0 %v98
    %3306 = vmatpush1.msra.mxu0 %v97
    %3307 = vmatprep.subr.mxu0 %v101
    %3308 = vmatpush1.msra.mxu0 %v100
    %3309 = vmatprep.subr.mxu0 0.0
    %3310 = vmatpush1.msra.mxu0 0.0
    %3311 = vmatprep.subr.mxu0 0.0
    %3312 = vmatpush1.msra.mxu0 0.0
    %3313 = vmatprep.subr.mxu0 0.0
    %3314 = vmatpush1.msra.mxu0 0.0
    %3315 = vmatprep.subr.mxu0 0.0
    %3316 = vmatpush1.msra.mxu0 0.0
    %3317 = vmatprep.subr.mxu0 0.0
    %3318 = vmatpush1.msra.mxu0 0.0
    %3319 = vmatprep.subr.mxu0 0.0
    %3320 = vmatpush1.msra.mxu0 0.0
    %3321 = vmatprep.subr.mxu0 0.0
    %3322 = vmatpush1.msra.mxu0 0.0
    %3323 = vmatprep.subr.mxu0 0.0
    %3324 = vmatpush1.msra.mxu0 0.0
    %3325 = vmatprep.subr.mxu0 0.0
    %3326 = vmatpush1.msra.mxu0 0.0
    %3327 = vmatprep.subr.mxu0 0.0
    %3328 = vmatpush1.msra.mxu0 0.0
    %3329 = vmatprep.subr.mxu0 0.0
    %3330 = vmatpush1.msra.mxu0 0.0
    %3331 = vmatprep.subr.mxu0 0.0
    %3332 = vmatpush1.msra.mxu0 0.0
    %3333 = vmatprep.subr.mxu0 0.0
    %3334 = vmatpush1.msra.mxu0 0.0
    %3335 = vmatprep.subr.mxu0 0.0
    %3336 = vmatpush1.msra.mxu0 0.0
    %3337 = vmatprep.subr.mxu0 0.0
    %3338 = vmatpush1.msra.mxu0 0.0
    %3339 = vmatprep.subr.mxu0 0.0
    %3340 = vmatpush1.msra.mxu0 0.0
    %3341 = vmatprep.subr.mxu0 0.0
    %3342 = vmatpush1.msra.mxu0 0.0
    %3343 = vmatprep.subr.mxu0 0.0
    %3344 = vmatpush1.msra.mxu0 0.0
    %3345 = vmatprep.subr.mxu0 0.0
    %3346 = vmatpush1.msra.mxu0 0.0
    %3347 = vmatprep.subr.mxu0 0.0
    %3348 = vmatpush1.msra.mxu0 0.0
    %3349 = vmatprep.subr.mxu0 0.0
    %3350 = vmatpush1.msra.mxu0 0.0
    %3351 = vmatprep.subr.mxu0 0.0
    %3352 = vmatpush1.msra.mxu0 0.0
    %3353 = vmatprep.subr.mxu0 0.0
    %3354 = vmatpush1.msra.mxu0 0.0
    %3355 = vmatprep.subr.mxu0 0.0
    %3356 = vmatpush1.msra.mxu0 0.0
    %3357 = vmatprep.subr.mxu0 0.0
    %3358 = vmatpush1.msra.mxu0 0.0
    %3359 = vmatprep.subr.mxu0 0.0
    %3360 = vmatpush1.msra.mxu0 0.0
    %3361 = vmatprep.subr.mxu0 0.0
    %3362 = vmatpush1.msra.mxu0 0.0
    %3363 = vmatprep.subr.mxu0 0.0
    %3364 = vmatpush1.msra.mxu0 0.0
    %3365 = vmatprep.mubr.f32.mxu0 0.0
    %3366 = vmatmul.mubr.f32.gmra.mrb[0].mxu0 %v3299
    %v3367 = vpop.f32.mrb[0].mxu0
    %v3368 = vadd.f32 0.0, %v3367
    %v3369 = vpop.f32.mrb[0].mxu0
    %v3370 = vadd.f32 0.0, %v3369
    %3371 = vdwg.mxu0
    %3372 = vmatprep.subr.mxu0 0.0
    %3373 = vmatpush1.msra.mxu0 %v93
    %3374 = vmatprep.subr.mxu0 0.0
    %3375 = vmatpush1.msra.mxu0 %v96
    %3376 = vmatprep.subr.mxu0 0.0
    %3377 = vmatpush1.msra.mxu0 %v99
    %3378 = vmatprep.subr.mxu0 0.0
    %3379 = vmatpush1.msra.mxu0 %v102
    %3380 = vmatprep.subr.mxu0 0.0
    %3381 = vmatpush1.msra.mxu0 0.0
    %3382 = vmatprep.subr.mxu0 0.0
    %3383 = vmatpush1.msra.mxu0 0.0
    %3384 = vmatprep.subr.mxu0 0.0
    %3385 = vmatpush1.msra.mxu0 0.0
    %3386 = vmatprep.subr.mxu0 0.0
    %3387 = vmatpush1.msra.mxu0 0.0
    %3388 = vmatprep.subr.mxu0 0.0
    %3389 = vmatpush1.msra.mxu0 0.0
    %3390 = vmatprep.subr.mxu0 0.0
    %3391 = vmatpush1.msra.mxu0 0.0
    %3392 = vmatprep.subr.mxu0 0.0
    %3393 = vmatpush1.msra.mxu0 0.0
    %3394 = vmatprep.subr.mxu0 0.0
    %3395 = vmatpush1.msra.mxu0 0.0
    %3396 = vmatprep.subr.mxu0 0.0
    %3397 = vmatpush1.msra.mxu0 0.0
    %3398 = vmatprep.subr.mxu0 0.0
    %3399 = vmatpush1.msra.mxu0 0.0
    %3400 = vmatprep.subr.mxu0 0.0
    %3401 = vmatpush1.msra.mxu0 0.0
    %3402 = vmatprep.subr.mxu0 0.0
    %3403 = vmatpush1.msra.mxu0 0.0
    %3404 = vmatprep.subr.mxu0 0.0
    %3405 = vmatpush1.msra.mxu0 0.0
    %3406 = vmatprep.subr.mxu0 0.0
    %3407 = vmatpush1.msra.mxu0 0.0
    %3408 = vmatprep.subr.mxu0 0.0
    %3409 = vmatpush1.msra.mxu0 0.0
    %3410 = vmatprep.subr.mxu0 0.0
    %3411 = vmatpush1.msra.mxu0 0.0
    %3412 = vmatprep.subr.mxu0 0.0
    %3413 = vmatpush1.msra.mxu0 0.0
    %3414 = vmatprep.subr.mxu0 0.0
    %3415 = vmatpush1.msra.mxu0 0.0
    %3416 = vmatprep.subr.mxu0 0.0
    %3417 = vmatpush1.msra.mxu0 0.0
    %3418 = vmatprep.subr.mxu0 0.0
    %3419 = vmatpush1.msra.mxu0 0.0
    %3420 = vmatprep.subr.mxu0 0.0
    %3421 = vmatpush1.msra.mxu0 0.0
    %3422 = vmatprep.subr.mxu0 0.0
    %3423 = vmatpush1.msra.mxu0 0.0
    %3424 = vmatprep.subr.mxu0 0.0
    %3425 = vmatpush1.msra.mxu0 0.0
    %3426 = vmatprep.subr.mxu0 0.0
    %3427 = vmatpush1.msra.mxu0 0.0
    %3428 = vmatprep.subr.mxu0 0.0
    %3429 = vmatpush1.msra.mxu0 0.0
    %3430 = vmatprep.subr.mxu0 0.0
    %3431 = vmatpush1.msra.mxu0 0.0
    %3432 = vmatprep.subr.mxu0 0.0
    %3433 = vmatpush1.msra.mxu0 0.0
    %3434 = vmatprep.subr.mxu0 0.0
    %3435 = vmatpush1.msra.mxu0 0.0
    %3436 = vmatprep.mubr.f32.mxu0 0.0
    %3437 = vmatmul.mubr.f32.gmra.mrb[0].mxu0 %v3299
    %v3438 = vpop.f32.mrb[0].mxu0
    %v3439 = vadd.f32 0.0, %v3438
    %v3440 = vpop.f32.mrb[0].mxu0
    %3441 = vdwg.mxu0
    %v3444 = vrot.slane %v3295, 7
    %v3445 = vsel %vm259, %v3444, %v3294
    %v3446 = vsel %vm261, %v3445, 0
    %3448 = vmatprep.subr.mxu0 %v86
    %3449 = vmatpush1.msra.mxu0 %v85
    %3450 = vmatprep.subr.mxu0 %v89
    %3451 = vmatpush1.msra.mxu0 %v88
    %3452 = vmatprep.subr.mxu0 0.0
    %3453 = vmatpush1.msra.mxu0 0.0
    %3454 = vmatprep.subr.mxu0 0.0
    %3455 = vmatpush1.msra.mxu0 0.0
    %3456 = vmatprep.subr.mxu0 0.0
    %3457 = vmatpush1.msra.mxu0 0.0
    %3458 = vmatprep.subr.mxu0 0.0
    %3459 = vmatpush1.msra.mxu0 0.0
    %3460 = vmatprep.subr.mxu0 0.0
    %3461 = vmatpush1.msra.mxu0 0.0
    %3462 = vmatprep.subr.mxu0 0.0
    %3463 = vmatpush1.msra.mxu0 0.0
    %3464 = vmatprep.subr.mxu0 0.0
    %3465 = vmatpush1.msra.mxu0 0.0
    %3466 = vmatprep.subr.mxu0 0.0
    %3467 = vmatpush1.msra.mxu0 0.0
    %3468 = vmatprep.subr.mxu0 0.0
    %3469 = vmatpush1.msra.mxu0 0.0
    %3470 = vmatprep.subr.mxu0 0.0
    %3471 = vmatpush1.msra.mxu0 0.0
    %3472 = vmatprep.subr.mxu0 0.0
    %3473 = vmatpush1.msra.mxu0 0.0
    %3474 = vmatprep.subr.mxu0 0.0
    %3475 = vmatpush1.msra.mxu0 0.0
    %3476 = vmatprep.subr.mxu0 0.0
    %3477 = vmatpush1.msra.mxu0 0.0
    %3478 = vmatprep.subr.mxu0 0.0
    %3479 = vmatpush1.msra.mxu0 0.0
    %3480 = vmatprep.subr.mxu0 0.0
    %3481 = vmatpush1.msra.mxu0 0.0
    %3482 = vmatprep.subr.mxu0 0.0
    %3483 = vmatpush1.msra.mxu0 0.0
    %3484 = vmatprep.subr.mxu0 0.0
    %3485 = vmatpush1.msra.mxu0 0.0
    %3486 = vmatprep.subr.mxu0 0.0
    %3487 = vmatpush1.msra.mxu0 0.0
    %3488 = vmatprep.subr.mxu0 0.0
    %3489 = vmatpush1.msra.mxu0 0.0
    %3490 = vmatprep.subr.mxu0 0.0
    %3491 = vmatpush1.msra.mxu0 0.0
    %3492 = vmatprep.subr.mxu0 0.0
    %3493 = vmatpush1.msra.mxu0 0.0
    %3494 = vmatprep.subr.mxu0 0.0
    %3495 = vmatpush1.msra.mxu0 0.0
    %3496 = vmatprep.subr.mxu0 0.0
    %3497 = vmatpush1.msra.mxu0 0.0
    %3498 = vmatprep.subr.mxu0 0.0
    %3499 = vmatpush1.msra.mxu0 0.0
    %3500 = vmatprep.subr.mxu0 0.0
    %3501 = vmatpush1.msra.mxu0 0.0
    %3502 = vmatprep.subr.mxu0 0.0
    %3503 = vmatpush1.msra.mxu0 0.0
    %3504 = vmatprep.subr.mxu0 0.0
    %3505 = vmatpush1.msra.mxu0 0.0
    %3506 = vmatprep.subr.mxu0 0.0
    %3507 = vmatpush1.msra.mxu0 0.0
    %3508 = vmatprep.subr.mxu0 0.0
    %3509 = vmatpush1.msra.mxu0 0.0
    %3510 = vmatprep.subr.mxu0 0.0
    %3511 = vmatpush1.msra.mxu0 0.0
    %3512 = vmatprep.mubr.f32.mxu0 0.0
    %3513 = vmatmul.mubr.f32.gmra.mrb[0].mxu0 %v3446
    %v3514 = vpop.f32.mrb[0].mxu0
    %v3515 = vadd.f32 %v3368, %v3514
    %v3516 = vpop.f32.mrb[0].mxu0
    %v3517 = vadd.f32 %v3370, %v3516
    %3518 = vdwg.mxu0
    %3519 = vmatprep.subr.mxu0 0.0
    %3520 = vmatpush1.msra.mxu0 %v87
    %3521 = vmatprep.subr.mxu0 0.0
    %3522 = vmatpush1.msra.mxu0 %v90
    %3523 = vmatprep.subr.mxu0 0.0
    %3524 = vmatpush1.msra.mxu0 0.0
    %3525 = vmatprep.subr.mxu0 0.0
    %3526 = vmatpush1.msra.mxu0 0.0
    %3527 = vmatprep.subr.mxu0 0.0
    %3528 = vmatpush1.msra.mxu0 0.0
    %3529 = vmatprep.subr.mxu0 0.0
    %3530 = vmatpush1.msra.mxu0 0.0
    %3531 = vmatprep.subr.mxu0 0.0
    %3532 = vmatpush1.msra.mxu0 0.0
    %3533 = vmatprep.subr.mxu0 0.0
    %3534 = vmatpush1.msra.mxu0 0.0
    %3535 = vmatprep.subr.mxu0 0.0
    %3536 = vmatpush1.msra.mxu0 0.0
    %3537 = vmatprep.subr.mxu0 0.0
    %3538 = vmatpush1.msra.mxu0 0.0
    %3539 = vmatprep.subr.mxu0 0.0
    %3540 = vmatpush1.msra.mxu0 0.0
    %3541 = vmatprep.subr.mxu0 0.0
    %3542 = vmatpush1.msra.mxu0 0.0
    %3543 = vmatprep.subr.mxu0 0.0
    %3544 = vmatpush1.msra.mxu0 0.0
    %3545 = vmatprep.subr.mxu0 0.0
    %3546 = vmatpush1.msra.mxu0 0.0
    %3547 = vmatprep.subr.mxu0 0.0
    %3548 = vmatpush1.msra.mxu0 0.0
    %3549 = vmatprep.subr.mxu0 0.0
    %3550 = vmatpush1.msra.mxu0 0.0
    %3551 = vmatprep.subr.mxu0 0.0
    %3552 = vmatpush1.msra.mxu0 0.0
    %3553 = vmatprep.subr.mxu0 0.0
    %3554 = vmatpush1.msra.mxu0 0.0
    %3555 = vmatprep.subr.mxu0 0.0
    %3556 = vmatpush1.msra.mxu0 0.0
    %3557 = vmatprep.subr.mxu0 0.0
    %3558 = vmatpush1.msra.mxu0 0.0
    %3559 = vmatprep.subr.mxu0 0.0
    %3560 = vmatpush1.msra.mxu0 0.0
    %3561 = vmatprep.subr.mxu0 0.0
    %3562 = vmatpush1.msra.mxu0 0.0
    %3563 = vmatprep.subr.mxu0 0.0
    %3564 = vmatpush1.msra.mxu0 0.0
    %3565 = vmatprep.subr.mxu0 0.0
    %3566 = vmatpush1.msra.mxu0 0.0
    %3567 = vmatprep.subr.mxu0 0.0
    %3568 = vmatpush1.msra.mxu0 0.0
    %3569 = vmatprep.subr.mxu0 0.0
    %3570 = vmatpush1.msra.mxu0 0.0
    %3571 = vmatprep.subr.mxu0 0.0
    %3572 = vmatpush1.msra.mxu0 0.0
    %3573 = vmatprep.subr.mxu0 0.0
    %3574 = vmatpush1.msra.mxu0 0.0
    %3575 = vmatprep.subr.mxu0 0.0
    %3576 = vmatpush1.msra.mxu0 0.0
    %3577 = vmatprep.subr.mxu0 0.0
    %3578 = vmatpush1.msra.mxu0 0.0
    %3579 = vmatprep.subr.mxu0 0.0
    %3580 = vmatpush1.msra.mxu0 0.0
    %3581 = vmatprep.subr.mxu0 0.0
    %3582 = vmatpush1.msra.mxu0 0.0
    %3583 = vmatprep.mubr.f32.mxu0 0.0
    %3584 = vmatmul.mubr.f32.gmra.mrb[0].mxu0 %v3446
    %v3585 = vpop.f32.mrb[0].mxu0
    %v3586 = vadd.f32 %v3439, %v3585
    %v3587 = vpop.f32.mrb[0].mxu0
    %3588 = vdwg.mxu0
    %3590 = vrot.lane.b32.xlu0 %v3276, 32
    %v3591 = vpop.permute.xlu0 %3590
    %v3592 = vsel %vm182, %v3591, 0
    %3594 = vmatprep.subr.mxu0 %v104
    %3595 = vmatpush1.msra.mxu0 %v103
    %3596 = vmatprep.subr.mxu0 %v107
    %3597 = vmatpush1.msra.mxu0 %v106
    %3598 = vmatprep.subr.mxu0 %v110
    %3599 = vmatpush1.msra.mxu0 %v109
    %3600 = vmatprep.subr.mxu0 %v113
    %3601 = vmatpush1.msra.mxu0 %v112
    %3602 = vmatprep.subr.mxu0 0.0
    %3603 = vmatpush1.msra.mxu0 0.0
    %3604 = vmatprep.subr.mxu0 0.0
    %3605 = vmatpush1.msra.mxu0 0.0
    %3606 = vmatprep.subr.mxu0 0.0
    %3607 = vmatpush1.msra.mxu0 0.0
    %3608 = vmatprep.subr.mxu0 0.0
    %3609 = vmatpush1.msra.mxu0 0.0
    %3610 = vmatprep.subr.mxu0 0.0
    %3611 = vmatpush1.msra.mxu0 0.0
    %3612 = vmatprep.subr.mxu0 0.0
    %3613 = vmatpush1.msra.mxu0 0.0
    %3614 = vmatprep.subr.mxu0 0.0
    %3615 = vmatpush1.msra.mxu0 0.0
    %3616 = vmatprep.subr.mxu0 0.0
    %3617 = vmatpush1.msra.mxu0 0.0
    %3618 = vmatprep.subr.mxu0 0.0
    %3619 = vmatpush1.msra.mxu0 0.0
    %3620 = vmatprep.subr.mxu0 0.0
    %3621 = vmatpush1.msra.mxu0 0.0
    %3622 = vmatprep.subr.mxu0 0.0
    %3623 = vmatpush1.msra.mxu0 0.0
    %3624 = vmatprep.subr.mxu0 0.0
    %3625 = vmatpush1.msra.mxu0 0.0
    %3626 = vmatprep.subr.mxu0 0.0
    %3627 = vmatpush1.msra.mxu0 0.0
    %3628 = vmatprep.subr.mxu0 0.0
    %3629 = vmatpush1.msra.mxu0 0.0
    %3630 = vmatprep.subr.mxu0 0.0
    %3631 = vmatpush1.msra.mxu0 0.0
    %3632 = vmatprep.subr.mxu0 0.0
    %3633 = vmatpush1.msra.mxu0 0.0
    %3634 = vmatprep.subr.mxu0 0.0
    %3635 = vmatpush1.msra.mxu0 0.0
    %3636 = vmatprep.subr.mxu0 0.0
    %3637 = vmatpush1.msra.mxu0 0.0
    %3638 = vmatprep.subr.mxu0 0.0
    %3639 = vmatpush1.msra.mxu0 0.0
    %3640 = vmatprep.subr.mxu0 0.0
    %3641 = vmatpush1.msra.mxu0 0.0
    %3642 = vmatprep.subr.mxu0 0.0
    %3643 = vmatpush1.msra.mxu0 0.0
    %3644 = vmatprep.subr.mxu0 0.0
    %3645 = vmatpush1.msra.mxu0 0.0
    %3646 = vmatprep.subr.mxu0 0.0
    %3647 = vmatpush1.msra.mxu0 0.0
    %3648 = vmatprep.subr.mxu0 0.0
    %3649 = vmatpush1.msra.mxu0 0.0
    %3650 = vmatprep.subr.mxu0 0.0
    %3651 = vmatpush1.msra.mxu0 0.0
    %3652 = vmatprep.subr.mxu0 0.0
    %3653 = vmatpush1.msra.mxu0 0.0
    %3654 = vmatprep.subr.mxu0 0.0
    %3655 = vmatpush1.msra.mxu0 0.0
    %3656 = vmatprep.subr.mxu0 0.0
    %3657 = vmatpush1.msra.mxu0 0.0
    %3658 = vmatprep.mubr.f32.mxu0 0.0
    %3659 = vmatmul.mubr.f32.gmra.mrb[0].mxu0 %v3592
    %v3660 = vpop.f32.mrb[0].mxu0
    %v3661 = vadd.f32 0.0, %v3660
    %v3662 = vpop.f32.mrb[0].mxu0
    %v3663 = vadd.f32 0.0, %v3662
    %3664 = vdwg.mxu0
    %3665 = vmatprep.subr.mxu0 0.0
    %3666 = vmatpush1.msra.mxu0 %v105
    %3667 = vmatprep.subr.mxu0 0.0
    %3668 = vmatpush1.msra.mxu0 %v108
    %3669 = vmatprep.subr.mxu0 0.0
    %3670 = vmatpush1.msra.mxu0 %v111
    %3671 = vmatprep.subr.mxu0 0.0
    %3672 = vmatpush1.msra.mxu0 %v114
    %3673 = vmatprep.subr.mxu0 0.0
    %3674 = vmatpush1.msra.mxu0 0.0
    %3675 = vmatprep.subr.mxu0 0.0
    %3676 = vmatpush1.msra.mxu0 0.0
    %3677 = vmatprep.subr.mxu0 0.0
    %3678 = vmatpush1.msra.mxu0 0.0
    %3679 = vmatprep.subr.mxu0 0.0
    %3680 = vmatpush1.msra.mxu0 0.0
    %3681 = vmatprep.subr.mxu0 0.0
    %3682 = vmatpush1.msra.mxu0 0.0
    %3683 = vmatprep.subr.mxu0 0.0
    %3684 = vmatpush1.msra.mxu0 0.0
    %3685 = vmatprep.subr.mxu0 0.0
    %3686 = vmatpush1.msra.mxu0 0.0
    %3687 = vmatprep.subr.mxu0 0.0
    %3688 = vmatpush1.msra.mxu0 0.0
    %3689 = vmatprep.subr.mxu0 0.0
    %3690 = vmatpush1.msra.mxu0 0.0
    %3691 = vmatprep.subr.mxu0 0.0
    %3692 = vmatpush1.msra.mxu0 0.0
    %3693 = vmatprep.subr.mxu0 0.0
    %3694 = vmatpush1.msra.mxu0 0.0
    %3695 = vmatprep.subr.mxu0 0.0
    %3696 = vmatpush1.msra.mxu0 0.0
    %3697 = vmatprep.subr.mxu0 0.0
    %3698 = vmatpush1.msra.mxu0 0.0
    %3699 = vmatprep.subr.mxu0 0.0
    %3700 = vmatpush1.msra.mxu0 0.0
    %3701 = vmatprep.subr.mxu0 0.0
    %3702 = vmatpush1.msra.mxu0 0.0
    %3703 = vmatprep.subr.mxu0 0.0
    %3704 = vmatpush1.msra.mxu0 0.0
    %3705 = vmatprep.subr.mxu0 0.0
    %3706 = vmatpush1.msra.mxu0 0.0
    %3707 = vmatprep.subr.mxu0 0.0
    %3708 = vmatpush1.msra.mxu0 0.0
    %3709 = vmatprep.subr.mxu0 0.0
    %3710 = vmatpush1.msra.mxu0 0.0
    %3711 = vmatprep.subr.mxu0 0.0
    %3712 = vmatpush1.msra.mxu0 0.0
    %3713 = vmatprep.subr.mxu0 0.0
    %3714 = vmatpush1.msra.mxu0 0.0
    %3715 = vmatprep.subr.mxu0 0.0
    %3716 = vmatpush1.msra.mxu0 0.0
    %3717 = vmatprep.subr.mxu0 0.0
    %3718 = vmatpush1.msra.mxu0 0.0
    %3719 = vmatprep.subr.mxu0 0.0
    %3720 = vmatpush1.msra.mxu0 0.0
    %3721 = vmatprep.subr.mxu0 0.0
    %3722 = vmatpush1.msra.mxu0 0.0
    %3723 = vmatprep.subr.mxu0 0.0
    %3724 = vmatpush1.msra.mxu0 0.0
    %3725 = vmatprep.subr.mxu0 0.0
    %3726 = vmatpush1.msra.mxu0 0.0
    %3727 = vmatprep.subr.mxu0 0.0
    %3728 = vmatpush1.msra.mxu0 0.0
    %3729 = vmatprep.mubr.f32.mxu0 0.0
    %3730 = vmatmul.mubr.f32.gmra.mrb[0].mxu0 %v3592
    %v3731 = vpop.f32.mrb[0].mxu0
    %v3732 = vadd.f32 0.0, %v3731
    %v3733 = vpop.f32.mrb[0].mxu0
    %3734 = vdwg.mxu0
    %v3735 = vadd.f32 %v3515, %v3661
    %v3736 = vadd.f32 %v3517, %v3663
    %v3737 = vadd.f32 %v3586, %v3732
    %3739 = vrot.lane.b32.xlu0 %v3293, 32
    %v3740 = vpop.permute.xlu0 %3739
    %v3741 = vsel %vm182, %v3740, 0
    %3743 = vmatprep.subr.mxu0 %v116
    %3744 = vmatpush1.msra.mxu0 %v115
    %3745 = vmatprep.subr.mxu0 %v119
    %3746 = vmatpush1.msra.mxu0 %v118
    %3747 = vmatprep.subr.mxu0 %v122
    %3748 = vmatpush1.msra.mxu0 %v121
    %3749 = vmatprep.subr.mxu0 %v125
    %3750 = vmatpush1.msra.mxu0 %v124
    %3751 = vmatprep.subr.mxu0 0.0
    %3752 = vmatpush1.msra.mxu0 0.0
    %3753 = vmatprep.subr.mxu0 0.0
    %3754 = vmatpush1.msra.mxu0 0.0
    %3755 = vmatprep.subr.mxu0 0.0
    %3756 = vmatpush1.msra.mxu0 0.0
    %3757 = vmatprep.subr.mxu0 0.0
    %3758 = vmatpush1.msra.mxu0 0.0
    %3759 = vmatprep.subr.mxu0 0.0
    %3760 = vmatpush1.msra.mxu0 0.0
    %3761 = vmatprep.subr.mxu0 0.0
    %3762 = vmatpush1.msra.mxu0 0.0
    %3763 = vmatprep.subr.mxu0 0.0
    %3764 = vmatpush1.msra.mxu0 0.0
    %3765 = vmatprep.subr.mxu0 0.0
    %3766 = vmatpush1.msra.mxu0 0.0
    %3767 = vmatprep.subr.mxu0 0.0
    %3768 = vmatpush1.msra.mxu0 0.0
    %3769 = vmatprep.subr.mxu0 0.0
    %3770 = vmatpush1.msra.mxu0 0.0
    %3771 = vmatprep.subr.mxu0 0.0
    %3772 = vmatpush1.msra.mxu0 0.0
    %3773 = vmatprep.subr.mxu0 0.0
    %3774 = vmatpush1.msra.mxu0 0.0
    %3775 = vmatprep.subr.mxu0 0.0
    %3776 = vmatpush1.msra.mxu0 0.0
    %3777 = vmatprep.subr.mxu0 0.0
    %3778 = vmatpush1.msra.mxu0 0.0
    %3779 = vmatprep.subr.mxu0 0.0
    %3780 = vmatpush1.msra.mxu0 0.0
    %3781 = vmatprep.subr.mxu0 0.0
    %3782 = vmatpush1.msra.mxu0 0.0
    %3783 = vmatprep.subr.mxu0 0.0
    %3784 = vmatpush1.msra.mxu0 0.0
    %3785 = vmatprep.subr.mxu0 0.0
    %3786 = vmatpush1.msra.mxu0 0.0
    %3787 = vmatprep.subr.mxu0 0.0
    %3788 = vmatpush1.msra.mxu0 0.0
    %3789 = vmatprep.subr.mxu0 0.0
    %3790 = vmatpush1.msra.mxu0 0.0
    %3791 = vmatprep.subr.mxu0 0.0
    %3792 = vmatpush1.msra.mxu0 0.0
    %3793 = vmatprep.subr.mxu0 0.0
    %3794 = vmatpush1.msra.mxu0 0.0
    %3795 = vmatprep.subr.mxu0 0.0
    %3796 = vmatpush1.msra.mxu0 0.0
    %3797 = vmatprep.subr.mxu0 0.0
    %3798 = vmatpush1.msra.mxu0 0.0
    %3799 = vmatprep.subr.mxu0 0.0
    %3800 = vmatpush1.msra.mxu0 0.0
    %3801 = vmatprep.subr.mxu0 0.0
    %3802 = vmatpush1.msra.mxu0 0.0
    %3803 = vmatprep.subr.mxu0 0.0
    %3804 = vmatpush1.msra.mxu0 0.0
    %3805 = vmatprep.subr.mxu0 0.0
    %3806 = vmatpush1.msra.mxu0 0.0
    %3807 = vmatprep.mubr.f32.mxu0 0.0
    %3808 = vmatmul.mubr.f32.gmra.mrb[0].mxu0 %v3741
    %v3809 = vpop.f32.mrb[0].mxu0
    %v3810 = vadd.f32 0.0, %v3809
    %v3811 = vpop.f32.mrb[0].mxu0
    %v3812 = vadd.f32 0.0, %v3811
    %3813 = vdwg.mxu0
    %3814 = vmatprep.subr.mxu0 0.0
    %3815 = vmatpush1.msra.mxu0 %v117
    %3816 = vmatprep.subr.mxu0 0.0
    %3817 = vmatpush1.msra.mxu0 %v120
    %3818 = vmatprep.subr.mxu0 0.0
    %3819 = vmatpush1.msra.mxu0 %v123
    %3820 = vmatprep.subr.mxu0 0.0
    %3821 = vmatpush1.msra.mxu0 %v126
    %3822 = vmatprep.subr.mxu0 0.0
    %3823 = vmatpush1.msra.mxu0 0.0
    %3824 = vmatprep.subr.mxu0 0.0
    %3825 = vmatpush1.msra.mxu0 0.0
    %3826 = vmatprep.subr.mxu0 0.0
    %3827 = vmatpush1.msra.mxu0 0.0
    %3828 = vmatprep.subr.mxu0 0.0
    %3829 = vmatpush1.msra.mxu0 0.0
    %3830 = vmatprep.subr.mxu0 0.0
    %3831 = vmatpush1.msra.mxu0 0.0
    %3832 = vmatprep.subr.mxu0 0.0
    %3833 = vmatpush1.msra.mxu0 0.0
    %3834 = vmatprep.subr.mxu0 0.0
    %3835 = vmatpush1.msra.mxu0 0.0
    %3836 = vmatprep.subr.mxu0 0.0
    %3837 = vmatpush1.msra.mxu0 0.0
    %3838 = vmatprep.subr.mxu0 0.0
    %3839 = vmatpush1.msra.mxu0 0.0
    %3840 = vmatprep.subr.mxu0 0.0
    %3841 = vmatpush1.msra.mxu0 0.0
    %3842 = vmatprep.subr.mxu0 0.0
    %3843 = vmatpush1.msra.mxu0 0.0
    %3844 = vmatprep.subr.mxu0 0.0
    %3845 = vmatpush1.msra.mxu0 0.0
    %3846 = vmatprep.subr.mxu0 0.0
    %3847 = vmatpush1.msra.mxu0 0.0
    %3848 = vmatprep.subr.mxu0 0.0
    %3849 = vmatpush1.msra.mxu0 0.0
    %3850 = vmatprep.subr.mxu0 0.0
    %3851 = vmatpush1.msra.mxu0 0.0
    %3852 = vmatprep.subr.mxu0 0.0
    %3853 = vmatpush1.msra.mxu0 0.0
    %3854 = vmatprep.subr.mxu0 0.0
    %3855 = vmatpush1.msra.mxu0 0.0
    %3856 = vmatprep.subr.mxu0 0.0
    %3857 = vmatpush1.msra.mxu0 0.0
    %3858 = vmatprep.subr.mxu0 0.0
    %3859 = vmatpush1.msra.mxu0 0.0
    %3860 = vmatprep.subr.mxu0 0.0
    %3861 = vmatpush1.msra.mxu0 0.0
    %3862 = vmatprep.subr.mxu0 0.0
    %3863 = vmatpush1.msra.mxu0 0.0
    %3864 = vmatprep.subr.mxu0 0.0
    %3865 = vmatpush1.msra.mxu0 0.0
    %3866 = vmatprep.subr.mxu0 0.0
    %3867 = vmatpush1.msra.mxu0 0.0
    %3868 = vmatprep.subr.mxu0 0.0
    %3869 = vmatpush1.msra.mxu0 0.0
    %3870 = vmatprep.subr.mxu0 0.0
    %3871 = vmatpush1.msra.mxu0 0.0
    %3872 = vmatprep.subr.mxu0 0.0
    %3873 = vmatpush1.msra.mxu0 0.0
    %3874 = vmatprep.subr.mxu0 0.0
    %3875 = vmatpush1.msra.mxu0 0.0
    %3876 = vmatprep.subr.mxu0 0.0
    %3877 = vmatpush1.msra.mxu0 0.0
    %3878 = vmatprep.mubr.f32.mxu0 0.0
    %3879 = vmatmul.mubr.f32.gmra.mrb[0].mxu0 %v3741
    %v3880 = vpop.f32.mrb[0].mxu0
    %v3881 = vadd.f32 0.0, %v3880
    %v3882 = vpop.f32.mrb[0].mxu0
    %3883 = vdwg.mxu0
    %v3884 = vadd.f32 %v3735, %v3810
    %v3885 = vadd.f32 %v3736, %v3812
    %v3886 = vadd.f32 %v3737, %v3881
    %v3887 = vadd.f32 %v3884, %v552
    %v3888 = vadd.f32 %v3885, %v556
    %v3889 = vadd.f32 %v3886, %v560
    %v3890 = vmul.f32 %v3887, %v177
    %v3891 = vmul.f32 %v3888, %v178
    %v3892 = vmul.f32 %v3889, %v179
    %v3893 = vtanh.pop %v3890
    %v3894 = vtanh.pop %v3891
    %v3895 = vtanh.pop %v3892
    %v3896 = vmul.f32 %v3893, 0.5
    %v3897 = vmul.f32 %v3894, 0.5
    %v3898 = vmul.f32 %v3895, 0.5
    %v3899 = vadd.f32 %v3896, 0.5
    %v3900 = vadd.f32 %v3897, 0.5
    %v3901 = vadd.f32 %v3898, 0.5
    %v3902 = vsel %vm174, %v3893, %v3899
    %v3903 = vsel %vm175, %v3894, %v3900
    %v3904 = vsel %vm176, %v3895, %v3901
    %v3905 = vmul.f32 %v3902, %v3253
    %3907 = vrot.lane.b32.xlu0 %v3902, 64
    %v3908 = vpop.permute.xlu0 %3907
    %v3910 = vmul.f32 %v3902, %v3908
    %3912 = vrot.lane.b32.xlu0 %v3910, 32
    %v3913 = vpop.permute.xlu0 %3912
    %v3915 = vadd.f32 %v3905, %v3913
    %v3916 = vtanh.pop %v3915
    %3918 = vrot.lane.b32.xlu0 %v3916, 64
    %v3919 = vpop.permute.xlu0 %3918
    %v3921 = vmul.f32 %v3902, %v3919
    %v3922 = vmul.f32 %v3903, %v3270
    %3924 = vrot.lane.b32.xlu0 %v3903, 64
    %v3925 = vpop.permute.xlu0 %3924
    %v3927 = vmul.f32 %v3903, %v3925
    %3929 = vrot.lane.b32.xlu0 %v3927, 32
    %v3930 = vpop.permute.xlu0 %3929
    %v3932 = vadd.f32 %v3922, %v3930
    %v3933 = vtanh.pop %v3932
    %3935 = vrot.lane.b32.xlu0 %v3933, 64
    %v3936 = vpop.permute.xlu0 %3935
    %v3938 = vmul.f32 %v3903, %v3936
    %v3939 = vmul.f32 %v3904, %v3287
    %3941 = vrot.lane.b32.xlu0 %v3904, 64
    %v3942 = vpop.permute.xlu0 %3941
    %v3944 = vmul.f32 %v3904, %v3942
    %3946 = vrot.lane.b32.xlu0 %v3944, 32
    %v3947 = vpop.permute.xlu0 %3946
    %v3949 = vadd.f32 %v3939, %v3947
    %v3950 = vtanh.pop %v3949
    %3952 = vrot.lane.b32.xlu0 %v3950, 64
    %v3953 = vpop.permute.xlu0 %3952
    %v3955 = vmul.f32 %v3904, %v3953
    %v3956 = vld [vmem:[#allocation2 + $0x7] sm:$0x1]
    %v3957 = vld [vmem:[#allocation2 + $0xf] sm:$0x1]
    %3959 = vrot.lane.b32.xlu0 %v3921, 32
    %v3960 = vpop.permute.xlu0 %3959
    %v3961 = vsel %vm182, %v3960, 0
    %3963 = vmatprep.subr.mxu0 %v92
    %3964 = vmatpush1.msra.mxu0 %v91
    %3965 = vmatprep.subr.mxu0 %v95
    %3966 = vmatpush1.msra.mxu0 %v94
    %3967 = vmatprep.subr.mxu0 %v98
    %3968 = vmatpush1.msra.mxu0 %v97
    %3969 = vmatprep.subr.mxu0 %v101
    %3970 = vmatpush1.msra.mxu0 %v100
    %3971 = vmatprep.subr.mxu0 0.0
    %3972 = vmatpush1.msra.mxu0 0.0
    %3973 = vmatprep.subr.mxu0 0.0
    %3974 = vmatpush1.msra.mxu0 0.0
    %3975 = vmatprep.subr.mxu0 0.0
    %3976 = vmatpush1.msra.mxu0 0.0
    %3977 = vmatprep.subr.mxu0 0.0
    %3978 = vmatpush1.msra.mxu0 0.0
    %3979 = vmatprep.subr.mxu0 0.0
    %3980 = vmatpush1.msra.mxu0 0.0
    %3981 = vmatprep.subr.mxu0 0.0
    %3982 = vmatpush1.msra.mxu0 0.0
    %3983 = vmatprep.subr.mxu0 0.0
    %3984 = vmatpush1.msra.mxu0 0.0
    %3985 = vmatprep.subr.mxu0 0.0
    %3986 = vmatpush1.msra.mxu0 0.0
    %3987 = vmatprep.subr.mxu0 0.0
    %3988 = vmatpush1.msra.mxu0 0.0
    %3989 = vmatprep.subr.mxu0 0.0
    %3990 = vmatpush1.msra.mxu0 0.0
    %3991 = vmatprep.subr.mxu0 0.0
    %3992 = vmatpush1.msra.mxu0 0.0
    %3993 = vmatprep.subr.mxu0 0.0
    %3994 = vmatpush1.msra.mxu0 0.0
    %3995 = vmatprep.subr.mxu0 0.0
    %3996 = vmatpush1.msra.mxu0 0.0
    %3997 = vmatprep.subr.mxu0 0.0
    %3998 = vmatpush1.msra.mxu0 0.0
    %3999 = vmatprep.subr.mxu0 0.0
    %4000 = vmatpush1.msra.mxu0 0.0
    %4001 = vmatprep.subr.mxu0 0.0
    %4002 = vmatpush1.msra.mxu0 0.0
    %4003 = vmatprep.subr.mxu0 0.0
    %4004 = vmatpush1.msra.mxu0 0.0
    %4005 = vmatprep.subr.mxu0 0.0
    %4006 = vmatpush1.msra.mxu0 0.0
    %4007 = vmatprep.subr.mxu0 0.0
    %4008 = vmatpush1.msra.mxu0 0.0
    %4009 = vmatprep.subr.mxu0 0.0
    %4010 = vmatpush1.msra.mxu0 0.0
    %4011 = vmatprep.subr.mxu0 0.0
    %4012 = vmatpush1.msra.mxu0 0.0
    %4013 = vmatprep.subr.mxu0 0.0
    %4014 = vmatpush1.msra.mxu0 0.0
    %4015 = vmatprep.subr.mxu0 0.0
    %4016 = vmatpush1.msra.mxu0 0.0
    %4017 = vmatprep.subr.mxu0 0.0
    %4018 = vmatpush1.msra.mxu0 0.0
    %4019 = vmatprep.subr.mxu0 0.0
    %4020 = vmatpush1.msra.mxu0 0.0
    %4021 = vmatprep.subr.mxu0 0.0
    %4022 = vmatpush1.msra.mxu0 0.0
    %4023 = vmatprep.subr.mxu0 0.0
    %4024 = vmatpush1.msra.mxu0 0.0
    %4025 = vmatprep.subr.mxu0 0.0
    %4026 = vmatpush1.msra.mxu0 0.0
    %4027 = vmatprep.mubr.f32.mxu0 0.0
    %4028 = vmatmul.mubr.f32.gmra.mrb[0].mxu0 %v3961
    %v4029 = vpop.f32.mrb[0].mxu0
    %v4030 = vadd.f32 0.0, %v4029
    %v4031 = vpop.f32.mrb[0].mxu0
    %v4032 = vadd.f32 0.0, %v4031
    %4033 = vdwg.mxu0
    %4034 = vmatprep.subr.mxu0 0.0
    %4035 = vmatpush1.msra.mxu0 %v93
    %4036 = vmatprep.subr.mxu0 0.0
    %4037 = vmatpush1.msra.mxu0 %v96
    %4038 = vmatprep.subr.mxu0 0.0
    %4039 = vmatpush1.msra.mxu0 %v99
    %4040 = vmatprep.subr.mxu0 0.0
    %4041 = vmatpush1.msra.mxu0 %v102
    %4042 = vmatprep.subr.mxu0 0.0
    %4043 = vmatpush1.msra.mxu0 0.0
    %4044 = vmatprep.subr.mxu0 0.0
    %4045 = vmatpush1.msra.mxu0 0.0
    %4046 = vmatprep.subr.mxu0 0.0
    %4047 = vmatpush1.msra.mxu0 0.0
    %4048 = vmatprep.subr.mxu0 0.0
    %4049 = vmatpush1.msra.mxu0 0.0
    %4050 = vmatprep.subr.mxu0 0.0
    %4051 = vmatpush1.msra.mxu0 0.0
    %4052 = vmatprep.subr.mxu0 0.0
    %4053 = vmatpush1.msra.mxu0 0.0
    %4054 = vmatprep.subr.mxu0 0.0
    %4055 = vmatpush1.msra.mxu0 0.0
    %4056 = vmatprep.subr.mxu0 0.0
    %4057 = vmatpush1.msra.mxu0 0.0
    %4058 = vmatprep.subr.mxu0 0.0
    %4059 = vmatpush1.msra.mxu0 0.0
    %4060 = vmatprep.subr.mxu0 0.0
    %4061 = vmatpush1.msra.mxu0 0.0
    %4062 = vmatprep.subr.mxu0 0.0
    %4063 = vmatpush1.msra.mxu0 0.0
    %4064 = vmatprep.subr.mxu0 0.0
    %4065 = vmatpush1.msra.mxu0 0.0
    %4066 = vmatprep.subr.mxu0 0.0
    %4067 = vmatpush1.msra.mxu0 0.0
    %4068 = vmatprep.subr.mxu0 0.0
    %4069 = vmatpush1.msra.mxu0 0.0
    %4070 = vmatprep.subr.mxu0 0.0
    %4071 = vmatpush1.msra.mxu0 0.0
    %4072 = vmatprep.subr.mxu0 0.0
    %4073 = vmatpush1.msra.mxu0 0.0
    %4074 = vmatprep.subr.mxu0 0.0
    %4075 = vmatpush1.msra.mxu0 0.0
    %4076 = vmatprep.subr.mxu0 0.0
    %4077 = vmatpush1.msra.mxu0 0.0
    %4078 = vmatprep.subr.mxu0 0.0
    %4079 = vmatpush1.msra.mxu0 0.0
    %4080 = vmatprep.subr.mxu0 0.0
    %4081 = vmatpush1.msra.mxu0 0.0
    %4082 = vmatprep.subr.mxu0 0.0
    %4083 = vmatpush1.msra.mxu0 0.0
    %4084 = vmatprep.subr.mxu0 0.0
    %4085 = vmatpush1.msra.mxu0 0.0
    %4086 = vmatprep.subr.mxu0 0.0
    %4087 = vmatpush1.msra.mxu0 0.0
    %4088 = vmatprep.subr.mxu0 0.0
    %4089 = vmatpush1.msra.mxu0 0.0
    %4090 = vmatprep.subr.mxu0 0.0
    %4091 = vmatpush1.msra.mxu0 0.0
    %4092 = vmatprep.subr.mxu0 0.0
    %4093 = vmatpush1.msra.mxu0 0.0
    %4094 = vmatprep.subr.mxu0 0.0
    %4095 = vmatpush1.msra.mxu0 0.0
    %4096 = vmatprep.subr.mxu0 0.0
    %4097 = vmatpush1.msra.mxu0 0.0
    %4098 = vmatprep.mubr.f32.mxu0 0.0
    %4099 = vmatmul.mubr.f32.gmra.mrb[0].mxu0 %v3961
    %v4100 = vpop.f32.mrb[0].mxu0
    %v4101 = vadd.f32 0.0, %v4100
    %v4102 = vpop.f32.mrb[0].mxu0
    %4103 = vdwg.mxu0
    %v4106 = vrot.slane %v3957, 7
    %v4107 = vsel %vm259, %v4106, %v3956
    %v4108 = vsel %vm261, %v4107, 0
    %4110 = vmatprep.subr.mxu0 %v86
    %4111 = vmatpush1.msra.mxu0 %v85
    %4112 = vmatprep.subr.mxu0 %v89
    %4113 = vmatpush1.msra.mxu0 %v88
    %4114 = vmatprep.subr.mxu0 0.0
    %4115 = vmatpush1.msra.mxu0 0.0
    %4116 = vmatprep.subr.mxu0 0.0
    %4117 = vmatpush1.msra.mxu0 0.0
    %4118 = vmatprep.subr.mxu0 0.0
    %4119 = vmatpush1.msra.mxu0 0.0
    %4120 = vmatprep.subr.mxu0 0.0
    %4121 = vmatpush1.msra.mxu0 0.0
    %4122 = vmatprep.subr.mxu0 0.0
    %4123 = vmatpush1.msra.mxu0 0.0
    %4124 = vmatprep.subr.mxu0 0.0
    %4125 = vmatpush1.msra.mxu0 0.0
    %4126 = vmatprep.subr.mxu0 0.0
    %4127 = vmatpush1.msra.mxu0 0.0
    %4128 = vmatprep.subr.mxu0 0.0
    %4129 = vmatpush1.msra.mxu0 0.0
    %4130 = vmatprep.subr.mxu0 0.0
    %4131 = vmatpush1.msra.mxu0 0.0
    %4132 = vmatprep.subr.mxu0 0.0
    %4133 = vmatpush1.msra.mxu0 0.0
    %4134 = vmatprep.subr.mxu0 0.0
    %4135 = vmatpush1.msra.mxu0 0.0
    %4136 = vmatprep.subr.mxu0 0.0
    %4137 = vmatpush1.msra.mxu0 0.0
    %4138 = vmatprep.subr.mxu0 0.0
    %4139 = vmatpush1.msra.mxu0 0.0
    %4140 = vmatprep.subr.mxu0 0.0
    %4141 = vmatpush1.msra.mxu0 0.0
    %4142 = vmatprep.subr.mxu0 0.0
    %4143 = vmatpush1.msra.mxu0 0.0
    %4144 = vmatprep.subr.mxu0 0.0
    %4145 = vmatpush1.msra.mxu0 0.0
    %4146 = vmatprep.subr.mxu0 0.0
    %4147 = vmatpush1.msra.mxu0 0.0
    %4148 = vmatprep.subr.mxu0 0.0
    %4149 = vmatpush1.msra.mxu0 0.0
    %4150 = vmatprep.subr.mxu0 0.0
    %4151 = vmatpush1.msra.mxu0 0.0
    %4152 = vmatprep.subr.mxu0 0.0
    %4153 = vmatpush1.msra.mxu0 0.0
    %4154 = vmatprep.subr.mxu0 0.0
    %4155 = vmatpush1.msra.mxu0 0.0
    %4156 = vmatprep.subr.mxu0 0.0
    %4157 = vmatpush1.msra.mxu0 0.0
    %4158 = vmatprep.subr.mxu0 0.0
    %4159 = vmatpush1.msra.mxu0 0.0
    %4160 = vmatprep.subr.mxu0 0.0
    %4161 = vmatpush1.msra.mxu0 0.0
    %4162 = vmatprep.subr.mxu0 0.0
    %4163 = vmatpush1.msra.mxu0 0.0
    %4164 = vmatprep.subr.mxu0 0.0
    %4165 = vmatpush1.msra.mxu0 0.0
    %4166 = vmatprep.subr.mxu0 0.0
    %4167 = vmatpush1.msra.mxu0 0.0
    %4168 = vmatprep.subr.mxu0 0.0
    %4169 = vmatpush1.msra.mxu0 0.0
    %4170 = vmatprep.subr.mxu0 0.0
    %4171 = vmatpush1.msra.mxu0 0.0
    %4172 = vmatprep.subr.mxu0 0.0
    %4173 = vmatpush1.msra.mxu0 0.0
    %4174 = vmatprep.mubr.f32.mxu0 0.0
    %4175 = vmatmul.mubr.f32.gmra.mrb[0].mxu0 %v4108
    %v4176 = vpop.f32.mrb[0].mxu0
    %v4177 = vadd.f32 %v4030, %v4176
    %v4178 = vpop.f32.mrb[0].mxu0
    %v4179 = vadd.f32 %v4032, %v4178
    %4180 = vdwg.mxu0
    %4181 = vmatprep.subr.mxu0 0.0
    %4182 = vmatpush1.msra.mxu0 %v87
    %4183 = vmatprep.subr.mxu0 0.0
    %4184 = vmatpush1.msra.mxu0 %v90
    %4185 = vmatprep.subr.mxu0 0.0
    %4186 = vmatpush1.msra.mxu0 0.0
    %4187 = vmatprep.subr.mxu0 0.0
    %4188 = vmatpush1.msra.mxu0 0.0
    %4189 = vmatprep.subr.mxu0 0.0
    %4190 = vmatpush1.msra.mxu0 0.0
    %4191 = vmatprep.subr.mxu0 0.0
    %4192 = vmatpush1.msra.mxu0 0.0
    %4193 = vmatprep.subr.mxu0 0.0
    %4194 = vmatpush1.msra.mxu0 0.0
    %4195 = vmatprep.subr.mxu0 0.0
    %4196 = vmatpush1.msra.mxu0 0.0
    %4197 = vmatprep.subr.mxu0 0.0
    %4198 = vmatpush1.msra.mxu0 0.0
    %4199 = vmatprep.subr.mxu0 0.0
    %4200 = vmatpush1.msra.mxu0 0.0
    %4201 = vmatprep.subr.mxu0 0.0
    %4202 = vmatpush1.msra.mxu0 0.0
    %4203 = vmatprep.subr.mxu0 0.0
    %4204 = vmatpush1.msra.mxu0 0.0
    %4205 = vmatprep.subr.mxu0 0.0
    %4206 = vmatpush1.msra.mxu0 0.0
    %4207 = vmatprep.subr.mxu0 0.0
    %4208 = vmatpush1.msra.mxu0 0.0
    %4209 = vmatprep.subr.mxu0 0.0
    %4210 = vmatpush1.msra.mxu0 0.0
    %4211 = vmatprep.subr.mxu0 0.0
    %4212 = vmatpush1.msra.mxu0 0.0
    %4213 = vmatprep.subr.mxu0 0.0
    %4214 = vmatpush1.msra.mxu0 0.0
    %4215 = vmatprep.subr.mxu0 0.0
    %4216 = vmatpush1.msra.mxu0 0.0
    %4217 = vmatprep.subr.mxu0 0.0
    %4218 = vmatpush1.msra.mxu0 0.0
    %4219 = vmatprep.subr.mxu0 0.0
    %4220 = vmatpush1.msra.mxu0 0.0
    %4221 = vmatprep.subr.mxu0 0.0
    %4222 = vmatpush1.msra.mxu0 0.0
    %4223 = vmatprep.subr.mxu0 0.0
    %4224 = vmatpush1.msra.mxu0 0.0
    %4225 = vmatprep.subr.mxu0 0.0
    %4226 = vmatpush1.msra.mxu0 0.0
    %4227 = vmatprep.subr.mxu0 0.0
    %4228 = vmatpush1.msra.mxu0 0.0
    %4229 = vmatprep.subr.mxu0 0.0
    %4230 = vmatpush1.msra.mxu0 0.0
    %4231 = vmatprep.subr.mxu0 0.0
    %4232 = vmatpush1.msra.mxu0 0.0
    %4233 = vmatprep.subr.mxu0 0.0
    %4234 = vmatpush1.msra.mxu0 0.0
    %4235 = vmatprep.subr.mxu0 0.0
    %4236 = vmatpush1.msra.mxu0 0.0
    %4237 = vmatprep.subr.mxu0 0.0
    %4238 = vmatpush1.msra.mxu0 0.0
    %4239 = vmatprep.subr.mxu0 0.0
    %4240 = vmatpush1.msra.mxu0 0.0
    %4241 = vmatprep.subr.mxu0 0.0
    %4242 = vmatpush1.msra.mxu0 0.0
    %4243 = vmatprep.subr.mxu0 0.0
    %4244 = vmatpush1.msra.mxu0 0.0
    %4245 = vmatprep.mubr.f32.mxu0 0.0
    %4246 = vmatmul.mubr.f32.gmra.mrb[0].mxu0 %v4108
    %v4247 = vpop.f32.mrb[0].mxu0
    %v4248 = vadd.f32 %v4101, %v4247
    %v4249 = vpop.f32.mrb[0].mxu0
    %4250 = vdwg.mxu0
    %4252 = vrot.lane.b32.xlu0 %v3938, 32
    %v4253 = vpop.permute.xlu0 %4252
    %v4254 = vsel %vm182, %v4253, 0
    %4256 = vmatprep.subr.mxu0 %v104
    %4257 = vmatpush1.msra.mxu0 %v103
    %4258 = vmatprep.subr.mxu0 %v107
    %4259 = vmatpush1.msra.mxu0 %v106
    %4260 = vmatprep.subr.mxu0 %v110
    %4261 = vmatpush1.msra.mxu0 %v109
    %4262 = vmatprep.subr.mxu0 %v113
    %4263 = vmatpush1.msra.mxu0 %v112
    %4264 = vmatprep.subr.mxu0 0.0
    %4265 = vmatpush1.msra.mxu0 0.0
    %4266 = vmatprep.subr.mxu0 0.0
    %4267 = vmatpush1.msra.mxu0 0.0
    %4268 = vmatprep.subr.mxu0 0.0
    %4269 = vmatpush1.msra.mxu0 0.0
    %4270 = vmatprep.subr.mxu0 0.0
    %4271 = vmatpush1.msra.mxu0 0.0
    %4272 = vmatprep.subr.mxu0 0.0
    %4273 = vmatpush1.msra.mxu0 0.0
    %4274 = vmatprep.subr.mxu0 0.0
    %4275 = vmatpush1.msra.mxu0 0.0
    %4276 = vmatprep.subr.mxu0 0.0
    %4277 = vmatpush1.msra.mxu0 0.0
    %4278 = vmatprep.subr.mxu0 0.0
    %4279 = vmatpush1.msra.mxu0 0.0
    %4280 = vmatprep.subr.mxu0 0.0
    %4281 = vmatpush1.msra.mxu0 0.0
    %4282 = vmatprep.subr.mxu0 0.0
    %4283 = vmatpush1.msra.mxu0 0.0
    %4284 = vmatprep.subr.mxu0 0.0
    %4285 = vmatpush1.msra.mxu0 0.0
    %4286 = vmatprep.subr.mxu0 0.0
    %4287 = vmatpush1.msra.mxu0 0.0
    %4288 = vmatprep.subr.mxu0 0.0
    %4289 = vmatpush1.msra.mxu0 0.0
    %4290 = vmatprep.subr.mxu0 0.0
    %4291 = vmatpush1.msra.mxu0 0.0
    %4292 = vmatprep.subr.mxu0 0.0
    %4293 = vmatpush1.msra.mxu0 0.0
    %4294 = vmatprep.subr.mxu0 0.0
    %4295 = vmatpush1.msra.mxu0 0.0
    %4296 = vmatprep.subr.mxu0 0.0
    %4297 = vmatpush1.msra.mxu0 0.0
    %4298 = vmatprep.subr.mxu0 0.0
    %4299 = vmatpush1.msra.mxu0 0.0
    %4300 = vmatprep.subr.mxu0 0.0
    %4301 = vmatpush1.msra.mxu0 0.0
    %4302 = vmatprep.subr.mxu0 0.0
    %4303 = vmatpush1.msra.mxu0 0.0
    %4304 = vmatprep.subr.mxu0 0.0
    %4305 = vmatpush1.msra.mxu0 0.0
    %4306 = vmatprep.subr.mxu0 0.0
    %4307 = vmatpush1.msra.mxu0 0.0
    %4308 = vmatprep.subr.mxu0 0.0
    %4309 = vmatpush1.msra.mxu0 0.0
    %4310 = vmatprep.subr.mxu0 0.0
    %4311 = vmatpush1.msra.mxu0 0.0
    %4312 = vmatprep.subr.mxu0 0.0
    %4313 = vmatpush1.msra.mxu0 0.0
    %4314 = vmatprep.subr.mxu0 0.0
    %4315 = vmatpush1.msra.mxu0 0.0
    %4316 = vmatprep.subr.mxu0 0.0
    %4317 = vmatpush1.msra.mxu0 0.0
    %4318 = vmatprep.subr.mxu0 0.0
    %4319 = vmatpush1.msra.mxu0 0.0
    %4320 = vmatprep.mubr.f32.mxu0 0.0
    %4321 = vmatmul.mubr.f32.gmra.mrb[0].mxu0 %v4254
    %v4322 = vpop.f32.mrb[0].mxu0
    %v4323 = vadd.f32 0.0, %v4322
    %v4324 = vpop.f32.mrb[0].mxu0
    %v4325 = vadd.f32 0.0, %v4324
    %4326 = vdwg.mxu0
    %4327 = vmatprep.subr.mxu0 0.0
    %4328 = vmatpush1.msra.mxu0 %v105
    %4329 = vmatprep.subr.mxu0 0.0
    %4330 = vmatpush1.msra.mxu0 %v108
    %4331 = vmatprep.subr.mxu0 0.0
    %4332 = vmatpush1.msra.mxu0 %v111
    %4333 = vmatprep.subr.mxu0 0.0
    %4334 = vmatpush1.msra.mxu0 %v114
    %4335 = vmatprep.subr.mxu0 0.0
    %4336 = vmatpush1.msra.mxu0 0.0
    %4337 = vmatprep.subr.mxu0 0.0
    %4338 = vmatpush1.msra.mxu0 0.0
    %4339 = vmatprep.subr.mxu0 0.0
    %4340 = vmatpush1.msra.mxu0 0.0
    %4341 = vmatprep.subr.mxu0 0.0
    %4342 = vmatpush1.msra.mxu0 0.0
    %4343 = vmatprep.subr.mxu0 0.0
    %4344 = vmatpush1.msra.mxu0 0.0
    %4345 = vmatprep.subr.mxu0 0.0
    %4346 = vmatpush1.msra.mxu0 0.0
    %4347 = vmatprep.subr.mxu0 0.0
    %4348 = vmatpush1.msra.mxu0 0.0
    %4349 = vmatprep.subr.mxu0 0.0
    %4350 = vmatpush1.msra.mxu0 0.0
    %4351 = vmatprep.subr.mxu0 0.0
    %4352 = vmatpush1.msra.mxu0 0.0
    %4353 = vmatprep.subr.mxu0 0.0
    %4354 = vmatpush1.msra.mxu0 0.0
    %4355 = vmatprep.subr.mxu0 0.0
    %4356 = vmatpush1.msra.mxu0 0.0
    %4357 = vmatprep.subr.mxu0 0.0
    %4358 = vmatpush1.msra.mxu0 0.0
    %4359 = vmatprep.subr.mxu0 0.0
    %4360 = vmatpush1.msra.mxu0 0.0
    %4361 = vmatprep.subr.mxu0 0.0
    %4362 = vmatpush1.msra.mxu0 0.0
    %4363 = vmatprep.subr.mxu0 0.0
    %4364 = vmatpush1.msra.mxu0 0.0
    %4365 = vmatprep.subr.mxu0 0.0
    %4366 = vmatpush1.msra.mxu0 0.0
    %4367 = vmatprep.subr.mxu0 0.0
    %4368 = vmatpush1.msra.mxu0 0.0
    %4369 = vmatprep.subr.mxu0 0.0
    %4370 = vmatpush1.msra.mxu0 0.0
    %4371 = vmatprep.subr.mxu0 0.0
    %4372 = vmatpush1.msra.mxu0 0.0
    %4373 = vmatprep.subr.mxu0 0.0
    %4374 = vmatpush1.msra.mxu0 0.0
    %4375 = vmatprep.subr.mxu0 0.0
    %4376 = vmatpush1.msra.mxu0 0.0
    %4377 = vmatprep.subr.mxu0 0.0
    %4378 = vmatpush1.msra.mxu0 0.0
    %4379 = vmatprep.subr.mxu0 0.0
    %4380 = vmatpush1.msra.mxu0 0.0
    %4381 = vmatprep.subr.mxu0 0.0
    %4382 = vmatpush1.msra.mxu0 0.0
    %4383 = vmatprep.subr.mxu0 0.0
    %4384 = vmatpush1.msra.mxu0 0.0
    %4385 = vmatprep.subr.mxu0 0.0
    %4386 = vmatpush1.msra.mxu0 0.0
    %4387 = vmatprep.subr.mxu0 0.0
    %4388 = vmatpush1.msra.mxu0 0.0
    %4389 = vmatprep.subr.mxu0 0.0
    %4390 = vmatpush1.msra.mxu0 0.0
    %4391 = vmatprep.mubr.f32.mxu0 0.0
    %4392 = vmatmul.mubr.f32.gmra.mrb[0].mxu0 %v4254
    %v4393 = vpop.f32.mrb[0].mxu0
    %v4394 = vadd.f32 0.0, %v4393
    %v4395 = vpop.f32.mrb[0].mxu0
    %4396 = vdwg.mxu0
    %v4397 = vadd.f32 %v4177, %v4323
    %v4398 = vadd.f32 %v4179, %v4325
    %v4399 = vadd.f32 %v4248, %v4394
    %4401 = vrot.lane.b32.xlu0 %v3955, 32
    %v4402 = vpop.permute.xlu0 %4401
    %v4403 = vsel %vm182, %v4402, 0
    %4405 = vmatprep.subr.mxu0 %v116
    %4406 = vmatpush1.msra.mxu0 %v115
    %4407 = vmatprep.subr.mxu0 %v119
    %4408 = vmatpush1.msra.mxu0 %v118
    %4409 = vmatprep.subr.mxu0 %v122
    %4410 = vmatpush1.msra.mxu0 %v121
    %4411 = vmatprep.subr.mxu0 %v125
    %4412 = vmatpush1.msra.mxu0 %v124
    %4413 = vmatprep.subr.mxu0 0.0
    %4414 = vmatpush1.msra.mxu0 0.0
    %4415 = vmatprep.subr.mxu0 0.0
    %4416 = vmatpush1.msra.mxu0 0.0
    %4417 = vmatprep.subr.mxu0 0.0
    %4418 = vmatpush1.msra.mxu0 0.0
    %4419 = vmatprep.subr.mxu0 0.0
    %4420 = vmatpush1.msra.mxu0 0.0
    %4421 = vmatprep.subr.mxu0 0.0
    %4422 = vmatpush1.msra.mxu0 0.0
    %4423 = vmatprep.subr.mxu0 0.0
    %4424 = vmatpush1.msra.mxu0 0.0
    %4425 = vmatprep.subr.mxu0 0.0
    %4426 = vmatpush1.msra.mxu0 0.0
    %4427 = vmatprep.subr.mxu0 0.0
    %4428 = vmatpush1.msra.mxu0 0.0
    %4429 = vmatprep.subr.mxu0 0.0
    %4430 = vmatpush1.msra.mxu0 0.0
    %4431 = vmatprep.subr.mxu0 0.0
    %4432 = vmatpush1.msra.mxu0 0.0
    %4433 = vmatprep.subr.mxu0 0.0
    %4434 = vmatpush1.msra.mxu0 0.0
    %4435 = vmatprep.subr.mxu0 0.0
    %4436 = vmatpush1.msra.mxu0 0.0
    %4437 = vmatprep.subr.mxu0 0.0
    %4438 = vmatpush1.msra.mxu0 0.0
    %4439 = vmatprep.subr.mxu0 0.0
    %4440 = vmatpush1.msra.mxu0 0.0
    %4441 = vmatprep.subr.mxu0 0.0
    %4442 = vmatpush1.msra.mxu0 0.0
    %4443 = vmatprep.subr.mxu0 0.0
    %4444 = vmatpush1.msra.mxu0 0.0
    %4445 = vmatprep.subr.mxu0 0.0
    %4446 = vmatpush1.msra.mxu0 0.0
    %4447 = vmatprep.subr.mxu0 0.0
    %4448 = vmatpush1.msra.mxu0 0.0
    %4449 = vmatprep.subr.mxu0 0.0
    %4450 = vmatpush1.msra.mxu0 0.0
    %4451 = vmatprep.subr.mxu0 0.0
    %4452 = vmatpush1.msra.mxu0 0.0
    %4453 = vmatprep.subr.mxu0 0.0
    %4454 = vmatpush1.msra.mxu0 0.0
    %4455 = vmatprep.subr.mxu0 0.0
    %4456 = vmatpush1.msra.mxu0 0.0
    %4457 = vmatprep.subr.mxu0 0.0
    %4458 = vmatpush1.msra.mxu0 0.0
    %4459 = vmatprep.subr.mxu0 0.0
    %4460 = vmatpush1.msra.mxu0 0.0
    %4461 = vmatprep.subr.mxu0 0.0
    %4462 = vmatpush1.msra.mxu0 0.0
    %4463 = vmatprep.subr.mxu0 0.0
    %4464 = vmatpush1.msra.mxu0 0.0
    %4465 = vmatprep.subr.mxu0 0.0
    %4466 = vmatpush1.msra.mxu0 0.0
    %4467 = vmatprep.subr.mxu0 0.0
    %4468 = vmatpush1.msra.mxu0 0.0
    %4469 = vmatprep.mubr.f32.mxu0 0.0
    %4470 = vmatmul.mubr.f32.gmra.mrb[0].mxu0 %v4403
    %v4471 = vpop.f32.mrb[0].mxu0
    %v4472 = vadd.f32 0.0, %v4471
    %v4473 = vpop.f32.mrb[0].mxu0
    %v4474 = vadd.f32 0.0, %v4473
    %4475 = vdwg.mxu0
    %4476 = vmatprep.subr.mxu0 0.0
    %4477 = vmatpush1.msra.mxu0 %v117
    %4478 = vmatprep.subr.mxu0 0.0
    %4479 = vmatpush1.msra.mxu0 %v120
    %4480 = vmatprep.subr.mxu0 0.0
    %4481 = vmatpush1.msra.mxu0 %v123
    %4482 = vmatprep.subr.mxu0 0.0
    %4483 = vmatpush1.msra.mxu0 %v126
    %4484 = vmatprep.subr.mxu0 0.0
    %4485 = vmatpush1.msra.mxu0 0.0
    %4486 = vmatprep.subr.mxu0 0.0
    %4487 = vmatpush1.msra.mxu0 0.0
    %4488 = vmatprep.subr.mxu0 0.0
    %4489 = vmatpush1.msra.mxu0 0.0
    %4490 = vmatprep.subr.mxu0 0.0
    %4491 = vmatpush1.msra.mxu0 0.0
    %4492 = vmatprep.subr.mxu0 0.0
    %4493 = vmatpush1.msra.mxu0 0.0
    %4494 = vmatprep.subr.mxu0 0.0
    %4495 = vmatpush1.msra.mxu0 0.0
    %4496 = vmatprep.subr.mxu0 0.0
    %4497 = vmatpush1.msra.mxu0 0.0
    %4498 = vmatprep.subr.mxu0 0.0
    %4499 = vmatpush1.msra.mxu0 0.0
    %4500 = vmatprep.subr.mxu0 0.0
    %4501 = vmatpush1.msra.mxu0 0.0
    %4502 = vmatprep.subr.mxu0 0.0
    %4503 = vmatpush1.msra.mxu0 0.0
    %4504 = vmatprep.subr.mxu0 0.0
    %4505 = vmatpush1.msra.mxu0 0.0
    %4506 = vmatprep.subr.mxu0 0.0
    %4507 = vmatpush1.msra.mxu0 0.0
    %4508 = vmatprep.subr.mxu0 0.0
    %4509 = vmatpush1.msra.mxu0 0.0
    %4510 = vmatprep.subr.mxu0 0.0
    %4511 = vmatpush1.msra.mxu0 0.0
    %4512 = vmatprep.subr.mxu0 0.0
    %4513 = vmatpush1.msra.mxu0 0.0
    %4514 = vmatprep.subr.mxu0 0.0
    %4515 = vmatpush1.msra.mxu0 0.0
    %4516 = vmatprep.subr.mxu0 0.0
    %4517 = vmatpush1.msra.mxu0 0.0
    %4518 = vmatprep.subr.mxu0 0.0
    %4519 = vmatpush1.msra.mxu0 0.0
    %4520 = vmatprep.subr.mxu0 0.0
    %4521 = vmatpush1.msra.mxu0 0.0
    %4522 = vmatprep.subr.mxu0 0.0
    %4523 = vmatpush1.msra.mxu0 0.0
    %4524 = vmatprep.subr.mxu0 0.0
    %4525 = vmatpush1.msra.mxu0 0.0
    %4526 = vmatprep.subr.mxu0 0.0
    %4527 = vmatpush1.msra.mxu0 0.0
    %4528 = vmatprep.subr.mxu0 0.0
    %4529 = vmatpush1.msra.mxu0 0.0
    %4530 = vmatprep.subr.mxu0 0.0
    %4531 = vmatpush1.msra.mxu0 0.0
    %4532 = vmatprep.subr.mxu0 0.0
    %4533 = vmatpush1.msra.mxu0 0.0
    %4534 = vmatprep.subr.mxu0 0.0
    %4535 = vmatpush1.msra.mxu0 0.0
    %4536 = vmatprep.subr.mxu0 0.0
    %4537 = vmatpush1.msra.mxu0 0.0
    %4538 = vmatprep.subr.mxu0 0.0
    %4539 = vmatpush1.msra.mxu0 0.0
    %4540 = vmatprep.mubr.f32.mxu0 0.0
    %4541 = vmatmul.mubr.f32.gmra.mrb[0].mxu0 %v4403
    %v4542 = vpop.f32.mrb[0].mxu0
    %v4543 = vadd.f32 0.0, %v4542
    %v4544 = vpop.f32.mrb[0].mxu0
    %4545 = vdwg.mxu0
    %v4546 = vadd.f32 %v4397, %v4472
    %v4547 = vadd.f32 %v4398, %v4474
    %v4548 = vadd.f32 %v4399, %v4543
    %v4549 = vadd.f32 %v4546, %v552
    %v4550 = vadd.f32 %v4547, %v556
    %v4551 = vadd.f32 %v4548, %v560
    %v4552 = vmul.f32 %v4549, %v177
    %v4553 = vmul.f32 %v4550, %v178
    %v4554 = vmul.f32 %v4551, %v179
    %v4555 = vtanh.pop %v4552
    %v4556 = vtanh.pop %v4553
    %v4557 = vtanh.pop %v4554
    %v4558 = vmul.f32 %v4555, 0.5
    %v4559 = vmul.f32 %v4556, 0.5
    %v4560 = vmul.f32 %v4557, 0.5
    %v4561 = vadd.f32 %v4558, 0.5
    %v4562 = vadd.f32 %v4559, 0.5
    %v4563 = vadd.f32 %v4560, 0.5
    %v4564 = vsel %vm174, %v4555, %v4561
    %v4565 = vsel %vm175, %v4556, %v4562
    %v4566 = vsel %vm176, %v4557, %v4563
    %v4567 = vmul.f32 %v4564, %v3915
    %4569 = vrot.lane.b32.xlu0 %v4564, 64
    %v4570 = vpop.permute.xlu0 %4569
    %v4572 = vmul.f32 %v4564, %v4570
    %4574 = vrot.lane.b32.xlu0 %v4572, 32
    %v4575 = vpop.permute.xlu0 %4574
    %v4577 = vadd.f32 %v4567, %v4575
    %v4578 = vtanh.pop %v4577
    %4580 = vrot.lane.b32.xlu0 %v4578, 64
    %v4581 = vpop.permute.xlu0 %4580
    %v4583 = vmul.f32 %v4564, %v4581
    %v4584 = vmul.f32 %v4565, %v3932
    %4586 = vrot.lane.b32.xlu0 %v4565, 64
    %v4587 = vpop.permute.xlu0 %4586
    %v4589 = vmul.f32 %v4565, %v4587
    %4591 = vrot.lane.b32.xlu0 %v4589, 32
    %v4592 = vpop.permute.xlu0 %4591
    %v4594 = vadd.f32 %v4584, %v4592
    %v4595 = vtanh.pop %v4594
    %4597 = vrot.lane.b32.xlu0 %v4595, 64
    %v4598 = vpop.permute.xlu0 %4597
    %v4600 = vmul.f32 %v4565, %v4598
    %v4601 = vmul.f32 %v4566, %v3949
    %4603 = vrot.lane.b32.xlu0 %v4566, 64
    %v4604 = vpop.permute.xlu0 %4603
    %v4606 = vmul.f32 %v4566, %v4604
    %4608 = vrot.lane.b32.xlu0 %v4606, 32
    %v4609 = vpop.permute.xlu0 %4608
    %v4611 = vadd.f32 %v4601, %v4609
    %v4612 = vtanh.pop %v4611
    %4614 = vrot.lane.b32.xlu0 %v4612, 64
    %v4615 = vpop.permute.xlu0 %4614
    %v4617 = vmul.f32 %v4566, %v4615
    %4619 = vrot.lane.b32.xlu0 %v4583, 32
    %v4620 = vpop.permute.xlu0 %4619
    %v4621 = vsel %vm182, %v4620, 0
    %4623 = vmatprep.subr.mxu0 %v92
    %4624 = vmatpush1.msra.mxu0 %v91
    %4625 = vmatprep.subr.mxu0 %v95
    %4626 = vmatpush1.msra.mxu0 %v94
    %4627 = vmatprep.subr.mxu0 %v98
    %4628 = vmatpush1.msra.mxu0 %v97
    %4629 = vmatprep.subr.mxu0 %v101
    %4630 = vmatpush1.msra.mxu0 %v100
    %4631 = vmatprep.subr.mxu0 0.0
    %4632 = vmatpush1.msra.mxu0 0.0
    %4633 = vmatprep.subr.mxu0 0.0
    %4634 = vmatpush1.msra.mxu0 0.0
    %4635 = vmatprep.subr.mxu0 0.0
    %4636 = vmatpush1.msra.mxu0 0.0
    %4637 = vmatprep.subr.mxu0 0.0
    %4638 = vmatpush1.msra.mxu0 0.0
    %4639 = vmatprep.subr.mxu0 0.0
    %4640 = vmatpush1.msra.mxu0 0.0
    %4641 = vmatprep.subr.mxu0 0.0
    %4642 = vmatpush1.msra.mxu0 0.0
    %4643 = vmatprep.subr.mxu0 0.0
    %4644 = vmatpush1.msra.mxu0 0.0
    %4645 = vmatprep.subr.mxu0 0.0
    %4646 = vmatpush1.msra.mxu0 0.0
    %4647 = vmatprep.subr.mxu0 0.0
    %4648 = vmatpush1.msra.mxu0 0.0
    %4649 = vmatprep.subr.mxu0 0.0
    %4650 = vmatpush1.msra.mxu0 0.0
    %4651 = vmatprep.subr.mxu0 0.0
    %4652 = vmatpush1.msra.mxu0 0.0
    %4653 = vmatprep.subr.mxu0 0.0
    %4654 = vmatpush1.msra.mxu0 0.0
    %4655 = vmatprep.subr.mxu0 0.0
    %4656 = vmatpush1.msra.mxu0 0.0
    %4657 = vmatprep.subr.mxu0 0.0
    %4658 = vmatpush1.msra.mxu0 0.0
    %4659 = vmatprep.subr.mxu0 0.0
    %4660 = vmatpush1.msra.mxu0 0.0
    %4661 = vmatprep.subr.mxu0 0.0
    %4662 = vmatpush1.msra.mxu0 0.0
    %4663 = vmatprep.subr.mxu0 0.0
    %4664 = vmatpush1.msra.mxu0 0.0
    %4665 = vmatprep.subr.mxu0 0.0
    %4666 = vmatpush1.msra.mxu0 0.0
    %4667 = vmatprep.subr.mxu0 0.0
    %4668 = vmatpush1.msra.mxu0 0.0
    %4669 = vmatprep.subr.mxu0 0.0
    %4670 = vmatpush1.msra.mxu0 0.0
    %4671 = vmatprep.subr.mxu0 0.0
    %4672 = vmatpush1.msra.mxu0 0.0
    %4673 = vmatprep.subr.mxu0 0.0
    %4674 = vmatpush1.msra.mxu0 0.0
    %4675 = vmatprep.subr.mxu0 0.0
    %4676 = vmatpush1.msra.mxu0 0.0
    %4677 = vmatprep.subr.mxu0 0.0
    %4678 = vmatpush1.msra.mxu0 0.0
    %4679 = vmatprep.subr.mxu0 0.0
    %4680 = vmatpush1.msra.mxu0 0.0
    %4681 = vmatprep.subr.mxu0 0.0
    %4682 = vmatpush1.msra.mxu0 0.0
    %4683 = vmatprep.subr.mxu0 0.0
    %4684 = vmatpush1.msra.mxu0 0.0
    %4685 = vmatprep.subr.mxu0 0.0
    %4686 = vmatpush1.msra.mxu0 0.0
    %4687 = vmatprep.mubr.f32.mxu0 0.0
    %4688 = vmatmul.mubr.f32.gmra.mrb[0].mxu0 %v4621
    %v4689 = vpop.f32.mrb[0].mxu0
    %v4690 = vpop.f32.mrb[0].mxu0
    %v4691 = vadd.f32 0.0, %v4690
    %4692 = vdwg.mxu0
    %4693 = vmatprep.subr.mxu0 0.0
    %4694 = vmatpush1.msra.mxu0 %v93
    %4695 = vmatprep.subr.mxu0 0.0
    %4696 = vmatpush1.msra.mxu0 %v96
    %4697 = vmatprep.subr.mxu0 0.0
    %4698 = vmatpush1.msra.mxu0 %v99
    %4699 = vmatprep.subr.mxu0 0.0
    %4700 = vmatpush1.msra.mxu0 %v102
    %4701 = vmatprep.subr.mxu0 0.0
    %4702 = vmatpush1.msra.mxu0 0.0
    %4703 = vmatprep.subr.mxu0 0.0
    %4704 = vmatpush1.msra.mxu0 0.0
    %4705 = vmatprep.subr.mxu0 0.0
    %4706 = vmatpush1.msra.mxu0 0.0
    %4707 = vmatprep.subr.mxu0 0.0
    %4708 = vmatpush1.msra.mxu0 0.0
    %4709 = vmatprep.subr.mxu0 0.0
    %4710 = vmatpush1.msra.mxu0 0.0
    %4711 = vmatprep.subr.mxu0 0.0
    %4712 = vmatpush1.msra.mxu0 0.0
    %4713 = vmatprep.subr.mxu0 0.0
    %4714 = vmatpush1.msra.mxu0 0.0
    %4715 = vmatprep.subr.mxu0 0.0
    %4716 = vmatpush1.msra.mxu0 0.0
    %4717 = vmatprep.subr.mxu0 0.0
    %4718 = vmatpush1.msra.mxu0 0.0
    %4719 = vmatprep.subr.mxu0 0.0
    %4720 = vmatpush1.msra.mxu0 0.0
    %4721 = vmatprep.subr.mxu0 0.0
    %4722 = vmatpush1.msra.mxu0 0.0
    %4723 = vmatprep.subr.mxu0 0.0
    %4724 = vmatpush1.msra.mxu0 0.0
    %4725 = vmatprep.subr.mxu0 0.0
    %4726 = vmatpush1.msra.mxu0 0.0
    %4727 = vmatprep.subr.mxu0 0.0
    %4728 = vmatpush1.msra.mxu0 0.0
    %4729 = vmatprep.subr.mxu0 0.0
    %4730 = vmatpush1.msra.mxu0 0.0
    %4731 = vmatprep.subr.mxu0 0.0
    %4732 = vmatpush1.msra.mxu0 0.0
    %4733 = vmatprep.subr.mxu0 0.0
    %4734 = vmatpush1.msra.mxu0 0.0
    %4735 = vmatprep.subr.mxu0 0.0
    %4736 = vmatpush1.msra.mxu0 0.0
    %4737 = vmatprep.subr.mxu0 0.0
    %4738 = vmatpush1.msra.mxu0 0.0
    %4739 = vmatprep.subr.mxu0 0.0
    %4740 = vmatpush1.msra.mxu0 0.0
    %4741 = vmatprep.subr.mxu0 0.0
    %4742 = vmatpush1.msra.mxu0 0.0
    %4743 = vmatprep.subr.mxu0 0.0
    %4744 = vmatpush1.msra.mxu0 0.0
    %4745 = vmatprep.subr.mxu0 0.0
    %4746 = vmatpush1.msra.mxu0 0.0
    %4747 = vmatprep.subr.mxu0 0.0
    %4748 = vmatpush1.msra.mxu0 0.0
    %4749 = vmatprep.subr.mxu0 0.0
    %4750 = vmatpush1.msra.mxu0 0.0
    %4751 = vmatprep.subr.mxu0 0.0
    %4752 = vmatpush1.msra.mxu0 0.0
    %4753 = vmatprep.subr.mxu0 0.0
    %4754 = vmatpush1.msra.mxu0 0.0
    %4755 = vmatprep.subr.mxu0 0.0
    %4756 = vmatpush1.msra.mxu0 0.0
    %4757 = vmatprep.mubr.f32.mxu0 0.0
    %4758 = vmatmul.mubr.f32.gmra.mrb[0].mxu0 %v4621
    %v4759 = vpop.f32.mrb[0].mxu0
    %v4760 = vadd.f32 0.0, %v4759
    %v4761 = vpop.f32.mrb[0].mxu0
    %4762 = vdwg.mxu0
    %4763 = vmatprep.subr.mxu0 %v86
    %4764 = vmatpush1.msra.mxu0 %v85
    %4765 = vmatprep.subr.mxu0 %v89
    %4766 = vmatpush1.msra.mxu0 %v88
    %4767 = vmatprep.subr.mxu0 0.0
    %4768 = vmatpush1.msra.mxu0 0.0
    %4769 = vmatprep.subr.mxu0 0.0
    %4770 = vmatpush1.msra.mxu0 0.0
    %4771 = vmatprep.subr.mxu0 0.0
    %4772 = vmatpush1.msra.mxu0 0.0
    %4773 = vmatprep.subr.mxu0 0.0
    %4774 = vmatpush1.msra.mxu0 0.0
    %4775 = vmatprep.subr.mxu0 0.0
    %4776 = vmatpush1.msra.mxu0 0.0
    %4777 = vmatprep.subr.mxu0 0.0
    %4778 = vmatpush1.msra.mxu0 0.0
    %4779 = vmatprep.subr.mxu0 0.0
    %4780 = vmatpush1.msra.mxu0 0.0
    %4781 = vmatprep.subr.mxu0 0.0
    %4782 = vmatpush1.msra.mxu0 0.0
    %4783 = vmatprep.subr.mxu0 0.0
    %4784 = vmatpush1.msra.mxu0 0.0
    %4785 = vmatprep.subr.mxu0 0.0
    %4786 = vmatpush1.msra.mxu0 0.0
    %4787 = vmatprep.subr.mxu0 0.0
    %4788 = vmatpush1.msra.mxu0 0.0
    %4789 = vmatprep.subr.mxu0 0.0
    %4790 = vmatpush1.msra.mxu0 0.0
    %4791 = vmatprep.subr.mxu0 0.0
    %4792 = vmatpush1.msra.mxu0 0.0
    %4793 = vmatprep.subr.mxu0 0.0
    %4794 = vmatpush1.msra.mxu0 0.0
    %4795 = vmatprep.subr.mxu0 0.0
    %4796 = vmatpush1.msra.mxu0 0.0
    %4797 = vmatprep.subr.mxu0 0.0
    %4798 = vmatpush1.msra.mxu0 0.0
    %4799 = vmatprep.subr.mxu0 0.0
    %4800 = vmatpush1.msra.mxu0 0.0
    %4801 = vmatprep.subr.mxu0 0.0
    %4802 = vmatpush1.msra.mxu0 0.0
    %4803 = vmatprep.subr.mxu0 0.0
    %4804 = vmatpush1.msra.mxu0 0.0
    %4805 = vmatprep.subr.mxu0 0.0
    %4806 = vmatpush1.msra.mxu0 0.0
    %4807 = vmatprep.subr.mxu0 0.0
    %4808 = vmatpush1.msra.mxu0 0.0
    %4809 = vmatprep.subr.mxu0 0.0
    %4810 = vmatpush1.msra.mxu0 0.0
    %4811 = vmatprep.subr.mxu0 0.0
    %4812 = vmatpush1.msra.mxu0 0.0
    %4813 = vmatprep.subr.mxu0 0.0
    %4814 = vmatpush1.msra.mxu0 0.0
    %4815 = vmatprep.subr.mxu0 0.0
    %4816 = vmatpush1.msra.mxu0 0.0
    %4817 = vmatprep.subr.mxu0 0.0
    %4818 = vmatpush1.msra.mxu0 0.0
    %4819 = vmatprep.subr.mxu0 0.0
    %4820 = vmatpush1.msra.mxu0 0.0
    %4821 = vmatprep.subr.mxu0 0.0
    %4822 = vmatpush1.msra.mxu0 0.0
    %4823 = vmatprep.subr.mxu0 0.0
    %4824 = vmatpush1.msra.mxu0 0.0
    %4825 = vmatprep.subr.mxu0 0.0
    %4826 = vmatpush1.msra.mxu0 0.0
    %4827 = vmatprep.mubr.f32.mxu0 0.0
    %4828 = vmatmul.mubr.f32.gmra.mrb[0].mxu0 %v4108
    %v4829 = vpop.f32.mrb[0].mxu0
    %v4830 = vpop.f32.mrb[0].mxu0
    %v4831 = vadd.f32 %v4691, %v4830
    %4832 = vdwg.mxu0
    %4833 = vmatprep.subr.mxu0 0.0
    %4834 = vmatpush1.msra.mxu0 %v87
    %4835 = vmatprep.subr.mxu0 0.0
    %4836 = vmatpush1.msra.mxu0 %v90
    %4837 = vmatprep.subr.mxu0 0.0
    %4838 = vmatpush1.msra.mxu0 0.0
    %4839 = vmatprep.subr.mxu0 0.0
    %4840 = vmatpush1.msra.mxu0 0.0
    %4841 = vmatprep.subr.mxu0 0.0
    %4842 = vmatpush1.msra.mxu0 0.0
    %4843 = vmatprep.subr.mxu0 0.0
    %4844 = vmatpush1.msra.mxu0 0.0
    %4845 = vmatprep.subr.mxu0 0.0
    %4846 = vmatpush1.msra.mxu0 0.0
    %4847 = vmatprep.subr.mxu0 0.0
    %4848 = vmatpush1.msra.mxu0 0.0
    %4849 = vmatprep.subr.mxu0 0.0
    %4850 = vmatpush1.msra.mxu0 0.0
    %4851 = vmatprep.subr.mxu0 0.0
    %4852 = vmatpush1.msra.mxu0 0.0
    %4853 = vmatprep.subr.mxu0 0.0
    %4854 = vmatpush1.msra.mxu0 0.0
    %4855 = vmatprep.subr.mxu0 0.0
    %4856 = vmatpush1.msra.mxu0 0.0
    %4857 = vmatprep.subr.mxu0 0.0
    %4858 = vmatpush1.msra.mxu0 0.0
    %4859 = vmatprep.subr.mxu0 0.0
    %4860 = vmatpush1.msra.mxu0 0.0
    %4861 = vmatprep.subr.mxu0 0.0
    %4862 = vmatpush1.msra.mxu0 0.0
    %4863 = vmatprep.subr.mxu0 0.0
    %4864 = vmatpush1.msra.mxu0 0.0
    %4865 = vmatprep.subr.mxu0 0.0
    %4866 = vmatpush1.msra.mxu0 0.0
    %4867 = vmatprep.subr.mxu0 0.0
    %4868 = vmatpush1.msra.mxu0 0.0
    %4869 = vmatprep.subr.mxu0 0.0
    %4870 = vmatpush1.msra.mxu0 0.0
    %4871 = vmatprep.subr.mxu0 0.0
    %4872 = vmatpush1.msra.mxu0 0.0
    %4873 = vmatprep.subr.mxu0 0.0
    %4874 = vmatpush1.msra.mxu0 0.0
    %4875 = vmatprep.subr.mxu0 0.0
    %4876 = vmatpush1.msra.mxu0 0.0
    %4877 = vmatprep.subr.mxu0 0.0
    %4878 = vmatpush1.msra.mxu0 0.0
    %4879 = vmatprep.subr.mxu0 0.0
    %4880 = vmatpush1.msra.mxu0 0.0
    %4881 = vmatprep.subr.mxu0 0.0
    %4882 = vmatpush1.msra.mxu0 0.0
    %4883 = vmatprep.subr.mxu0 0.0
    %4884 = vmatpush1.msra.mxu0 0.0
    %4885 = vmatprep.subr.mxu0 0.0
    %4886 = vmatpush1.msra.mxu0 0.0
    %4887 = vmatprep.subr.mxu0 0.0
    %4888 = vmatpush1.msra.mxu0 0.0
    %4889 = vmatprep.subr.mxu0 0.0
    %4890 = vmatpush1.msra.mxu0 0.0
    %4891 = vmatprep.subr.mxu0 0.0
    %4892 = vmatpush1.msra.mxu0 0.0
    %4893 = vmatprep.subr.mxu0 0.0
    %4894 = vmatpush1.msra.mxu0 0.0
    %4895 = vmatprep.subr.mxu0 0.0
    %4896 = vmatpush1.msra.mxu0 0.0
    %4897 = vmatprep.mubr.f32.mxu0 0.0
    %4898 = vmatmul.mubr.f32.gmra.mrb[0].mxu0 %v4108
    %v4899 = vpop.f32.mrb[0].mxu0
    %v4900 = vadd.f32 %v4760, %v4899
    %v4901 = vpop.f32.mrb[0].mxu0
    %4902 = vdwg.mxu0
    %4904 = vrot.lane.b32.xlu0 %v4600, 32
    %v4905 = vpop.permute.xlu0 %4904
    %v4906 = vsel %vm182, %v4905, 0
    %4908 = vmatprep.subr.mxu0 %v104
    %4909 = vmatpush1.msra.mxu0 %v103
    %4910 = vmatprep.subr.mxu0 %v107
    %4911 = vmatpush1.msra.mxu0 %v106
    %4912 = vmatprep.subr.mxu0 %v110
    %4913 = vmatpush1.msra.mxu0 %v109
    %4914 = vmatprep.subr.mxu0 %v113
    %4915 = vmatpush1.msra.mxu0 %v112
    %4916 = vmatprep.subr.mxu0 0.0
    %4917 = vmatpush1.msra.mxu0 0.0
    %4918 = vmatprep.subr.mxu0 0.0
    %4919 = vmatpush1.msra.mxu0 0.0
    %4920 = vmatprep.subr.mxu0 0.0
    %4921 = vmatpush1.msra.mxu0 0.0
    %4922 = vmatprep.subr.mxu0 0.0
    %4923 = vmatpush1.msra.mxu0 0.0
    %4924 = vmatprep.subr.mxu0 0.0
    %4925 = vmatpush1.msra.mxu0 0.0
    %4926 = vmatprep.subr.mxu0 0.0
    %4927 = vmatpush1.msra.mxu0 0.0
    %4928 = vmatprep.subr.mxu0 0.0
    %4929 = vmatpush1.msra.mxu0 0.0
    %4930 = vmatprep.subr.mxu0 0.0
    %4931 = vmatpush1.msra.mxu0 0.0
    %4932 = vmatprep.subr.mxu0 0.0
    %4933 = vmatpush1.msra.mxu0 0.0
    %4934 = vmatprep.subr.mxu0 0.0
    %4935 = vmatpush1.msra.mxu0 0.0
    %4936 = vmatprep.subr.mxu0 0.0
    %4937 = vmatpush1.msra.mxu0 0.0
    %4938 = vmatprep.subr.mxu0 0.0
    %4939 = vmatpush1.msra.mxu0 0.0
    %4940 = vmatprep.subr.mxu0 0.0
    %4941 = vmatpush1.msra.mxu0 0.0
    %4942 = vmatprep.subr.mxu0 0.0
    %4943 = vmatpush1.msra.mxu0 0.0
    %4944 = vmatprep.subr.mxu0 0.0
    %4945 = vmatpush1.msra.mxu0 0.0
    %4946 = vmatprep.subr.mxu0 0.0
    %4947 = vmatpush1.msra.mxu0 0.0
    %4948 = vmatprep.subr.mxu0 0.0
    %4949 = vmatpush1.msra.mxu0 0.0
    %4950 = vmatprep.subr.mxu0 0.0
    %4951 = vmatpush1.msra.mxu0 0.0
    %4952 = vmatprep.subr.mxu0 0.0
    %4953 = vmatpush1.msra.mxu0 0.0
    %4954 = vmatprep.subr.mxu0 0.0
    %4955 = vmatpush1.msra.mxu0 0.0
    %4956 = vmatprep.subr.mxu0 0.0
    %4957 = vmatpush1.msra.mxu0 0.0
    %4958 = vmatprep.subr.mxu0 0.0
    %4959 = vmatpush1.msra.mxu0 0.0
    %4960 = vmatprep.subr.mxu0 0.0
    %4961 = vmatpush1.msra.mxu0 0.0
    %4962 = vmatprep.subr.mxu0 0.0
    %4963 = vmatpush1.msra.mxu0 0.0
    %4964 = vmatprep.subr.mxu0 0.0
    %4965 = vmatpush1.msra.mxu0 0.0
    %4966 = vmatprep.subr.mxu0 0.0
    %4967 = vmatpush1.msra.mxu0 0.0
    %4968 = vmatprep.subr.mxu0 0.0
    %4969 = vmatpush1.msra.mxu0 0.0
    %4970 = vmatprep.subr.mxu0 0.0
    %4971 = vmatpush1.msra.mxu0 0.0
    %4972 = vmatprep.mubr.f32.mxu0 0.0
    %4973 = vmatmul.mubr.f32.gmra.mrb[0].mxu0 %v4906
    %v4974 = vpop.f32.mrb[0].mxu0
    %v4975 = vpop.f32.mrb[0].mxu0
    %v4976 = vadd.f32 0.0, %v4975
    %4977 = vdwg.mxu0
    %4978 = vmatprep.subr.mxu0 0.0
    %4979 = vmatpush1.msra.mxu0 %v105
    %4980 = vmatprep.subr.mxu0 0.0
    %4981 = vmatpush1.msra.mxu0 %v108
    %4982 = vmatprep.subr.mxu0 0.0
    %4983 = vmatpush1.msra.mxu0 %v111
    %4984 = vmatprep.subr.mxu0 0.0
    %4985 = vmatpush1.msra.mxu0 %v114
    %4986 = vmatprep.subr.mxu0 0.0
    %4987 = vmatpush1.msra.mxu0 0.0
    %4988 = vmatprep.subr.mxu0 0.0
    %4989 = vmatpush1.msra.mxu0 0.0
    %4990 = vmatprep.subr.mxu0 0.0
    %4991 = vmatpush1.msra.mxu0 0.0
    %4992 = vmatprep.subr.mxu0 0.0
    %4993 = vmatpush1.msra.mxu0 0.0
    %4994 = vmatprep.subr.mxu0 0.0
    %4995 = vmatpush1.msra.mxu0 0.0
    %4996 = vmatprep.subr.mxu0 0.0
    %4997 = vmatpush1.msra.mxu0 0.0
    %4998 = vmatprep.subr.mxu0 0.0
    %4999 = vmatpush1.msra.mxu0 0.0
    %5000 = vmatprep.subr.mxu0 0.0
    %5001 = vmatpush1.msra.mxu0 0.0
    %5002 = vmatprep.subr.mxu0 0.0
    %5003 = vmatpush1.msra.mxu0 0.0
    %5004 = vmatprep.subr.mxu0 0.0
    %5005 = vmatpush1.msra.mxu0 0.0
    %5006 = vmatprep.subr.mxu0 0.0
    %5007 = vmatpush1.msra.mxu0 0.0
    %5008 = vmatprep.subr.mxu0 0.0
    %5009 = vmatpush1.msra.mxu0 0.0
    %5010 = vmatprep.subr.mxu0 0.0
    %5011 = vmatpush1.msra.mxu0 0.0
    %5012 = vmatprep.subr.mxu0 0.0
    %5013 = vmatpush1.msra.mxu0 0.0
    %5014 = vmatprep.subr.mxu0 0.0
    %5015 = vmatpush1.msra.mxu0 0.0
    %5016 = vmatprep.subr.mxu0 0.0
    %5017 = vmatpush1.msra.mxu0 0.0
    %5018 = vmatprep.subr.mxu0 0.0
    %5019 = vmatpush1.msra.mxu0 0.0
    %5020 = vmatprep.subr.mxu0 0.0
    %5021 = vmatpush1.msra.mxu0 0.0
    %5022 = vmatprep.subr.mxu0 0.0
    %5023 = vmatpush1.msra.mxu0 0.0
    %5024 = vmatprep.subr.mxu0 0.0
    %5025 = vmatpush1.msra.mxu0 0.0
    %5026 = vmatprep.subr.mxu0 0.0
    %5027 = vmatpush1.msra.mxu0 0.0
    %5028 = vmatprep.subr.mxu0 0.0
    %5029 = vmatpush1.msra.mxu0 0.0
    %5030 = vmatprep.subr.mxu0 0.0
    %5031 = vmatpush1.msra.mxu0 0.0
    %5032 = vmatprep.subr.mxu0 0.0
    %5033 = vmatpush1.msra.mxu0 0.0
    %5034 = vmatprep.subr.mxu0 0.0
    %5035 = vmatpush1.msra.mxu0 0.0
    %5036 = vmatprep.subr.mxu0 0.0
    %5037 = vmatpush1.msra.mxu0 0.0
    %5038 = vmatprep.subr.mxu0 0.0
    %5039 = vmatpush1.msra.mxu0 0.0
    %5040 = vmatprep.subr.mxu0 0.0
    %5041 = vmatpush1.msra.mxu0 0.0
    %5042 = vmatprep.mubr.f32.mxu0 0.0
    %5043 = vmatmul.mubr.f32.gmra.mrb[0].mxu0 %v4906
    %v5044 = vpop.f32.mrb[0].mxu0
    %v5045 = vadd.f32 0.0, %v5044
    %v5046 = vpop.f32.mrb[0].mxu0
    %5047 = vdwg.mxu0
    %v5048 = vadd.f32 %v4831, %v4976
    %v5049 = vadd.f32 %v4900, %v5045
    %5051 = vrot.lane.b32.xlu0 %v4617, 32
    %v5052 = vpop.permute.xlu0 %5051
    %v5053 = vsel %vm182, %v5052, 0
    %5055 = vmatprep.subr.mxu0 %v116
    %5056 = vmatpush1.msra.mxu0 %v115
    %5057 = vmatprep.subr.mxu0 %v119
    %5058 = vmatpush1.msra.mxu0 %v118
    %5059 = vmatprep.subr.mxu0 %v122
    %5060 = vmatpush1.msra.mxu0 %v121
    %5061 = vmatprep.subr.mxu0 %v125
    %5062 = vmatpush1.msra.mxu0 %v124
    %5063 = vmatprep.subr.mxu0 0.0
    %5064 = vmatpush1.msra.mxu0 0.0
    %5065 = vmatprep.subr.mxu0 0.0
    %5066 = vmatpush1.msra.mxu0 0.0
    %5067 = vmatprep.subr.mxu0 0.0
    %5068 = vmatpush1.msra.mxu0 0.0
    %5069 = vmatprep.subr.mxu0 0.0
    %5070 = vmatpush1.msra.mxu0 0.0
    %5071 = vmatprep.subr.mxu0 0.0
    %5072 = vmatpush1.msra.mxu0 0.0
    %5073 = vmatprep.subr.mxu0 0.0
    %5074 = vmatpush1.msra.mxu0 0.0
    %5075 = vmatprep.subr.mxu0 0.0
    %5076 = vmatpush1.msra.mxu0 0.0
    %5077 = vmatprep.subr.mxu0 0.0
    %5078 = vmatpush1.msra.mxu0 0.0
    %5079 = vmatprep.subr.mxu0 0.0
    %5080 = vmatpush1.msra.mxu0 0.0
    %5081 = vmatprep.subr.mxu0 0.0
    %5082 = vmatpush1.msra.mxu0 0.0
    %5083 = vmatprep.subr.mxu0 0.0
    %5084 = vmatpush1.msra.mxu0 0.0
    %5085 = vmatprep.subr.mxu0 0.0
    %5086 = vmatpush1.msra.mxu0 0.0
    %5087 = vmatprep.subr.mxu0 0.0
    %5088 = vmatpush1.msra.mxu0 0.0
    %5089 = vmatprep.subr.mxu0 0.0
    %5090 = vmatpush1.msra.mxu0 0.0
    %5091 = vmatprep.subr.mxu0 0.0
    %5092 = vmatpush1.msra.mxu0 0.0
    %5093 = vmatprep.subr.mxu0 0.0
    %5094 = vmatpush1.msra.mxu0 0.0
    %5095 = vmatprep.subr.mxu0 0.0
    %5096 = vmatpush1.msra.mxu0 0.0
    %5097 = vmatprep.subr.mxu0 0.0
    %5098 = vmatpush1.msra.mxu0 0.0
    %5099 = vmatprep.subr.mxu0 0.0
    %5100 = vmatpush1.msra.mxu0 0.0
    %5101 = vmatprep.subr.mxu0 0.0
    %5102 = vmatpush1.msra.mxu0 0.0
    %5103 = vmatprep.subr.mxu0 0.0
    %5104 = vmatpush1.msra.mxu0 0.0
    %5105 = vmatprep.subr.mxu0 0.0
    %5106 = vmatpush1.msra.mxu0 0.0
    %5107 = vmatprep.subr.mxu0 0.0
    %5108 = vmatpush1.msra.mxu0 0.0
    %5109 = vmatprep.subr.mxu0 0.0
    %5110 = vmatpush1.msra.mxu0 0.0
    %5111 = vmatprep.subr.mxu0 0.0
    %5112 = vmatpush1.msra.mxu0 0.0
    %5113 = vmatprep.subr.mxu0 0.0
    %5114 = vmatpush1.msra.mxu0 0.0
    %5115 = vmatprep.subr.mxu0 0.0
    %5116 = vmatpush1.msra.mxu0 0.0
    %5117 = vmatprep.subr.mxu0 0.0
    %5118 = vmatpush1.msra.mxu0 0.0
    %5119 = vmatprep.mubr.f32.mxu0 0.0
    %5120 = vmatmul.mubr.f32.gmra.mrb[0].mxu0 %v5053
    %v5121 = vpop.f32.mrb[0].mxu0
    %v5122 = vpop.f32.mrb[0].mxu0
    %v5123 = vadd.f32 0.0, %v5122
    %5124 = vdwg.mxu0
    %5125 = vmatprep.subr.mxu0 0.0
    %5126 = vmatpush1.msra.mxu0 %v117
    %5127 = vmatprep.subr.mxu0 0.0
    %5128 = vmatpush1.msra.mxu0 %v120
    %5129 = vmatprep.subr.mxu0 0.0
    %5130 = vmatpush1.msra.mxu0 %v123
    %5131 = vmatprep.subr.mxu0 0.0
    %5132 = vmatpush1.msra.mxu0 %v126
    %5133 = vmatprep.subr.mxu0 0.0
    %5134 = vmatpush1.msra.mxu0 0.0
    %5135 = vmatprep.subr.mxu0 0.0
    %5136 = vmatpush1.msra.mxu0 0.0
    %5137 = vmatprep.subr.mxu0 0.0
    %5138 = vmatpush1.msra.mxu0 0.0
    %5139 = vmatprep.subr.mxu0 0.0
    %5140 = vmatpush1.msra.mxu0 0.0
    %5141 = vmatprep.subr.mxu0 0.0
    %5142 = vmatpush1.msra.mxu0 0.0
    %5143 = vmatprep.subr.mxu0 0.0
    %5144 = vmatpush1.msra.mxu0 0.0
    %5145 = vmatprep.subr.mxu0 0.0
    %5146 = vmatpush1.msra.mxu0 0.0
    %5147 = vmatprep.subr.mxu0 0.0
    %5148 = vmatpush1.msra.mxu0 0.0
    %5149 = vmatprep.subr.mxu0 0.0
    %5150 = vmatpush1.msra.mxu0 0.0
    %5151 = vmatprep.subr.mxu0 0.0
    %5152 = vmatpush1.msra.mxu0 0.0
    %5153 = vmatprep.subr.mxu0 0.0
    %5154 = vmatpush1.msra.mxu0 0.0
    %5155 = vmatprep.subr.mxu0 0.0
    %5156 = vmatpush1.msra.mxu0 0.0
    %5157 = vmatprep.subr.mxu0 0.0
    %5158 = vmatpush1.msra.mxu0 0.0
    %5159 = vmatprep.subr.mxu0 0.0
    %5160 = vmatpush1.msra.mxu0 0.0
    %5161 = vmatprep.subr.mxu0 0.0
    %5162 = vmatpush1.msra.mxu0 0.0
    %5163 = vmatprep.subr.mxu0 0.0
    %5164 = vmatpush1.msra.mxu0 0.0
    %5165 = vmatprep.subr.mxu0 0.0
    %5166 = vmatpush1.msra.mxu0 0.0
    %5167 = vmatprep.subr.mxu0 0.0
    %5168 = vmatpush1.msra.mxu0 0.0
    %5169 = vmatprep.subr.mxu0 0.0
    %5170 = vmatpush1.msra.mxu0 0.0
    %5171 = vmatprep.subr.mxu0 0.0
    %5172 = vmatpush1.msra.mxu0 0.0
    %5173 = vmatprep.subr.mxu0 0.0
    %5174 = vmatpush1.msra.mxu0 0.0
    %5175 = vmatprep.subr.mxu0 0.0
    %5176 = vmatpush1.msra.mxu0 0.0
    %5177 = vmatprep.subr.mxu0 0.0
    %5178 = vmatpush1.msra.mxu0 0.0
    %5179 = vmatprep.subr.mxu0 0.0
    %5180 = vmatpush1.msra.mxu0 0.0
    %5181 = vmatprep.subr.mxu0 0.0
    %5182 = vmatpush1.msra.mxu0 0.0
    %5183 = vmatprep.subr.mxu0 0.0
    %5184 = vmatpush1.msra.mxu0 0.0
    %5185 = vmatprep.subr.mxu0 0.0
    %5186 = vmatpush1.msra.mxu0 0.0
    %5187 = vmatprep.subr.mxu0 0.0
    %5188 = vmatpush1.msra.mxu0 0.0
    %5189 = vmatprep.mubr.f32.mxu0 0.0
    %5190 = vmatmul.mubr.f32.gmra.mrb[0].mxu0 %v5053
    %v5191 = vpop.f32.mrb[0].mxu0
    %v5192 = vadd.f32 0.0, %v5191
    %v5193 = vpop.f32.mrb[0].mxu0
    %5194 = vdwg.mxu0
    %v5195 = vadd.f32 %v5048, %v5123
    %v5196 = vadd.f32 %v5049, %v5192
    %v5197 = vadd.f32 %v5195, %v556
    %v5198 = vadd.f32 %v5196, %v560
    %v5199 = vmul.f32 %v5197, %v178
    %v5200 = vmul.f32 %v5198, %v179
    %v5201 = vtanh.pop %v5199
    %v5202 = vtanh.pop %v5200
    %v5203 = vmul.f32 %v5201, 0.5
    %v5204 = vmul.f32 %v5202, 0.5
    %v5205 = vadd.f32 %v5203, 0.5
    %v5206 = vadd.f32 %v5204, 0.5
    %v5207 = vsel %vm175, %v5201, %v5205
    %v5208 = vsel %vm176, %v5202, %v5206
    %v5209 = vmul.f32 %v5207, %v4594
    %5211 = vrot.lane.b32.xlu0 %v5207, 64
    %v5212 = vpop.permute.xlu0 %5211
    %v5214 = vmul.f32 %v5207, %v5212
    %5216 = vrot.lane.b32.xlu0 %v5214, 32
    %v5217 = vpop.permute.xlu0 %5216
    %v5219 = vadd.f32 %v5209, %v5217
    %v5220 = vtanh.pop %v5219
    %5222 = vrot.lane.b32.xlu0 %v5220, 64
    %v5223 = vpop.permute.xlu0 %5222
    %v5225 = vmul.f32 %v5207, %v5223
    %v5226 = vmul.f32 %v5208, %v4611
    %5228 = vrot.lane.b32.xlu0 %v5208, 64
    %v5229 = vpop.permute.xlu0 %5228
    %v5231 = vmul.f32 %v5208, %v5229
    %5233 = vrot.lane.b32.xlu0 %v5231, 32
    %v5234 = vpop.permute.xlu0 %5233
    %v5236 = vadd.f32 %v5226, %v5234
    %v5237 = vtanh.pop %v5236
    %5239 = vrot.lane.b32.xlu0 %v5237, 64
    %v5240 = vpop.permute.xlu0 %5239
    %v5242 = vmul.f32 %v5208, %v5240
    %5244 = vrot.lane.b32.xlu0 %v5225, 32
    %v5245 = vpop.permute.xlu0 %5244
    %v5246 = vsel %vm182, %v5245, 0
    %5248 = vmatprep.subr.mxu0 0.0
    %5249 = vmatpush1.msra.mxu0 %v105
    %5250 = vmatprep.subr.mxu0 0.0
    %5251 = vmatpush1.msra.mxu0 %v108
    %5252 = vmatprep.subr.mxu0 0.0
    %5253 = vmatpush1.msra.mxu0 %v111
    %5254 = vmatprep.subr.mxu0 0.0
    %5255 = vmatpush1.msra.mxu0 %v114
    %5256 = vmatprep.subr.mxu0 0.0
    %5257 = vmatpush1.msra.mxu0 0.0
    %5258 = vmatprep.subr.mxu0 0.0
    %5259 = vmatpush1.msra.mxu0 0.0
    %5260 = vmatprep.subr.mxu0 0.0
    %5261 = vmatpush1.msra.mxu0 0.0
    %5262 = vmatprep.subr.mxu0 0.0
    %5263 = vmatpush1.msra.mxu0 0.0
    %5264 = vmatprep.subr.mxu0 0.0
    %5265 = vmatpush1.msra.mxu0 0.0
    %5266 = vmatprep.subr.mxu0 0.0
    %5267 = vmatpush1.msra.mxu0 0.0
    %5268 = vmatprep.subr.mxu0 0.0
    %5269 = vmatpush1.msra.mxu0 0.0
    %5270 = vmatprep.subr.mxu0 0.0
    %5271 = vmatpush1.msra.mxu0 0.0
    %5272 = vmatprep.subr.mxu0 0.0
    %5273 = vmatpush1.msra.mxu0 0.0
    %5274 = vmatprep.subr.mxu0 0.0
    %5275 = vmatpush1.msra.mxu0 0.0
    %5276 = vmatprep.subr.mxu0 0.0
    %5277 = vmatpush1.msra.mxu0 0.0
    %5278 = vmatprep.subr.mxu0 0.0
    %5279 = vmatpush1.msra.mxu0 0.0
    %5280 = vmatprep.subr.mxu0 0.0
    %5281 = vmatpush1.msra.mxu0 0.0
    %5282 = vmatprep.subr.mxu0 0.0
    %5283 = vmatpush1.msra.mxu0 0.0
    %5284 = vmatprep.subr.mxu0 0.0
    %5285 = vmatpush1.msra.mxu0 0.0
    %5286 = vmatprep.subr.mxu0 0.0
    %5287 = vmatpush1.msra.mxu0 0.0
    %5288 = vmatprep.subr.mxu0 0.0
    %5289 = vmatpush1.msra.mxu0 0.0
    %5290 = vmatprep.subr.mxu0 0.0
    %5291 = vmatpush1.msra.mxu0 0.0
    %5292 = vmatprep.subr.mxu0 0.0
    %5293 = vmatpush1.msra.mxu0 0.0
    %5294 = vmatprep.subr.mxu0 0.0
    %5295 = vmatpush1.msra.mxu0 0.0
    %5296 = vmatprep.subr.mxu0 0.0
    %5297 = vmatpush1.msra.mxu0 0.0
    %5298 = vmatprep.subr.mxu0 0.0
    %5299 = vmatpush1.msra.mxu0 0.0
    %5300 = vmatprep.subr.mxu0 0.0
    %5301 = vmatpush1.msra.mxu0 0.0
    %5302 = vmatprep.subr.mxu0 0.0
    %5303 = vmatpush1.msra.mxu0 0.0
    %5304 = vmatprep.subr.mxu0 0.0
    %5305 = vmatpush1.msra.mxu0 0.0
    %5306 = vmatprep.subr.mxu0 0.0
    %5307 = vmatpush1.msra.mxu0 0.0
    %5308 = vmatprep.subr.mxu0 0.0
    %5309 = vmatpush1.msra.mxu0 0.0
    %5310 = vmatprep.subr.mxu0 0.0
    %5311 = vmatpush1.msra.mxu0 0.0
    %5312 = vmatprep.mubr.f32.mxu0 0.0
    %5313 = vmatmul.mubr.f32.gmra.mrb[0].mxu0 %v5246
    %v5314 = vpop.f32.mrb[0].mxu0
    %v5315 = vadd.f32 0.0, %v5314
    %v5316 = vpop.f32.mrb[0].mxu0
    %5317 = vdwg.mxu0
    %v5318 = vadd.f32 %v4900, %v5315
    %5320 = vrot.lane.b32.xlu0 %v5242, 32
    %v5321 = vpop.permute.xlu0 %5320
    %v5322 = vsel %vm182, %v5321, 0
    %5324 = vmatprep.subr.mxu0 0.0
    %5325 = vmatpush1.msra.mxu0 %v117
    %5326 = vmatprep.subr.mxu0 0.0
    %5327 = vmatpush1.msra.mxu0 %v120
    %5328 = vmatprep.subr.mxu0 0.0
    %5329 = vmatpush1.msra.mxu0 %v123
    %5330 = vmatprep.subr.mxu0 0.0
    %5331 = vmatpush1.msra.mxu0 %v126
    %5332 = vmatprep.subr.mxu0 0.0
    %5333 = vmatpush1.msra.mxu0 0.0
    %5334 = vmatprep.subr.mxu0 0.0
    %5335 = vmatpush1.msra.mxu0 0.0
    %5336 = vmatprep.subr.mxu0 0.0
    %5337 = vmatpush1.msra.mxu0 0.0
    %5338 = vmatprep.subr.mxu0 0.0
    %5339 = vmatpush1.msra.mxu0 0.0
    %5340 = vmatprep.subr.mxu0 0.0
    %5341 = vmatpush1.msra.mxu0 0.0
    %5342 = vmatprep.subr.mxu0 0.0
    %5343 = vmatpush1.msra.mxu0 0.0
    %5344 = vmatprep.subr.mxu0 0.0
    %5345 = vmatpush1.msra.mxu0 0.0
    %5346 = vmatprep.subr.mxu0 0.0
    %5347 = vmatpush1.msra.mxu0 0.0
    %5348 = vmatprep.subr.mxu0 0.0
    %5349 = vmatpush1.msra.mxu0 0.0
    %5350 = vmatprep.subr.mxu0 0.0
    %5351 = vmatpush1.msra.mxu0 0.0
    %5352 = vmatprep.subr.mxu0 0.0
    %5353 = vmatpush1.msra.mxu0 0.0
    %5354 = vmatprep.subr.mxu0 0.0
    %5355 = vmatpush1.msra.mxu0 0.0
    %5356 = vmatprep.subr.mxu0 0.0
    %5357 = vmatpush1.msra.mxu0 0.0
    %5358 = vmatprep.subr.mxu0 0.0
    %5359 = vmatpush1.msra.mxu0 0.0
    %5360 = vmatprep.subr.mxu0 0.0
    %5361 = vmatpush1.msra.mxu0 0.0
    %5362 = vmatprep.subr.mxu0 0.0
    %5363 = vmatpush1.msra.mxu0 0.0
    %5364 = vmatprep.subr.mxu0 0.0
    %5365 = vmatpush1.msra.mxu0 0.0
    %5366 = vmatprep.subr.mxu0 0.0
    %5367 = vmatpush1.msra.mxu0 0.0
    %5368 = vmatprep.subr.mxu0 0.0
    %5369 = vmatpush1.msra.mxu0 0.0
    %5370 = vmatprep.subr.mxu0 0.0
    %5371 = vmatpush1.msra.mxu0 0.0
    %5372 = vmatprep.subr.mxu0 0.0
    %5373 = vmatpush1.msra.mxu0 0.0
    %5374 = vmatprep.subr.mxu0 0.0
    %5375 = vmatpush1.msra.mxu0 0.0
    %5376 = vmatprep.subr.mxu0 0.0
    %5377 = vmatpush1.msra.mxu0 0.0
    %5378 = vmatprep.subr.mxu0 0.0
    %5379 = vmatpush1.msra.mxu0 0.0
    %5380 = vmatprep.subr.mxu0 0.0
    %5381 = vmatpush1.msra.mxu0 0.0
    %5382 = vmatprep.subr.mxu0 0.0
    %5383 = vmatpush1.msra.mxu0 0.0
    %5384 = vmatprep.subr.mxu0 0.0
    %5385 = vmatpush1.msra.mxu0 0.0
    %5386 = vmatprep.subr.mxu0 0.0
    %5387 = vmatpush1.msra.mxu0 0.0
    %5388 = vmatprep.mubr.f32.mxu0 0.0
    %5389 = vmatmul.mubr.f32.gmra.mrb[0].mxu0 %v5322
    %v5390 = vpop.f32.mrb[0].mxu0
    %v5391 = vadd.f32 0.0, %v5390
    %v5392 = vpop.f32.mrb[0].mxu0
    %5393 = vdwg.mxu0
    %v5394 = vadd.f32 %v5318, %v5391
    %v5395 = vadd.f32 %v5394, %v560
    %v5396 = vmul.f32 %v5395, %v179
    %v5397 = vtanh.pop %v5396
    %v5398 = vmul.f32 %v5397, 0.5
    %v5399 = vadd.f32 %v5398, 0.5
    %v5400 = vsel %vm176, %v5397, %v5399
    %v5401 = vmul.f32 %v5400, %v5236
    %5403 = vrot.lane.b32.xlu0 %v5400, 64
    %v5404 = vpop.permute.xlu0 %5403
    %v5406 = vmul.f32 %v5400, %v5404
    %5408 = vrot.lane.b32.xlu0 %v5406, 32
    %v5409 = vpop.permute.xlu0 %5408
    %v5411 = vadd.f32 %v5401, %v5409
    %v5412 = vtanh.pop %v5411
    %5414 = vrot.lane.b32.xlu0 %v5412, 64
    %v5415 = vpop.permute.xlu0 %5414
    %v5417 = vmul.f32 %v5400, %v5415
    %v5418 = vld [vmem:[%s6] sm:$0xff]
    %v5419 = vld [vmem:[%s6 + $0x8] sm:$0xff]
    %v5420 = vld [vmem:[%s6 + $0x10] sm:$0xff]
    %v5421 = vld [vmem:[%s6 + $0x18] sm:$0xff]
    %v5422 = vld [vmem:[%s7] sm:$0x1]
    %v5424 = vlaneseq
    %v5425 = vshrl.u32 %v5424, 7
    %v5426 = vsub.s32 0, %v5425
    %v5427 = vrot.slane %v5422, %v5426
    %5430 = vrot.lane.b32.xlu0 %v5417, 32
    %v5431 = vpop.permute.xlu0 %5430
    %v5432 = vsel %vm182, %v5431, 0
    %5434 = vmatprep.subr.mxu0 0.0
    %5435 = vmatpush1.msra.mxu0 %v5418
    %5436 = vmatprep.subr.mxu0 0.0
    %5437 = vmatpush1.msra.mxu0 %v5419
    %5438 = vmatprep.subr.mxu0 0.0
    %5439 = vmatpush1.msra.mxu0 %v5420
    %5440 = vmatprep.subr.mxu0 0.0
    %5441 = vmatpush1.msra.mxu0 %v5421
    %5442 = vmatprep.subr.mxu0 0.0
    %5443 = vmatpush1.msra.mxu0 0.0
    %5444 = vmatprep.subr.mxu0 0.0
    %5445 = vmatpush1.msra.mxu0 0.0
    %5446 = vmatprep.subr.mxu0 0.0
    %5447 = vmatpush1.msra.mxu0 0.0
    %5448 = vmatprep.subr.mxu0 0.0
    %5449 = vmatpush1.msra.mxu0 0.0
    %5450 = vmatprep.subr.mxu0 0.0
    %5451 = vmatpush1.msra.mxu0 0.0
    %5452 = vmatprep.subr.mxu0 0.0
    %5453 = vmatpush1.msra.mxu0 0.0
    %5454 = vmatprep.subr.mxu0 0.0
    %5455 = vmatpush1.msra.mxu0 0.0
    %5456 = vmatprep.subr.mxu0 0.0
    %5457 = vmatpush1.msra.mxu0 0.0
    %5458 = vmatprep.subr.mxu0 0.0
    %5459 = vmatpush1.msra.mxu0 0.0
    %5460 = vmatprep.subr.mxu0 0.0
    %5461 = vmatpush1.msra.mxu0 0.0
    %5462 = vmatprep.subr.mxu0 0.0
    %5463 = vmatpush1.msra.mxu0 0.0
    %5464 = vmatprep.subr.mxu0 0.0
    %5465 = vmatpush1.msra.mxu0 0.0
    %5466 = vmatprep.subr.mxu0 0.0
    %5467 = vmatpush1.msra.mxu0 0.0
    %5468 = vmatprep.subr.mxu0 0.0
    %5469 = vmatpush1.msra.mxu0 0.0
    %5470 = vmatprep.subr.mxu0 0.0
    %5471 = vmatpush1.msra.mxu0 0.0
    %5472 = vmatprep.subr.mxu0 0.0
    %5473 = vmatpush1.msra.mxu0 0.0
    %5474 = vmatprep.subr.mxu0 0.0
    %5475 = vmatpush1.msra.mxu0 0.0
    %5476 = vmatprep.subr.mxu0 0.0
    %5477 = vmatpush1.msra.mxu0 0.0
    %5478 = vmatprep.subr.mxu0 0.0
    %5479 = vmatpush1.msra.mxu0 0.0
    %5480 = vmatprep.subr.mxu0 0.0
    %5481 = vmatpush1.msra.mxu0 0.0
    %5482 = vmatprep.subr.mxu0 0.0
    %5483 = vmatpush1.msra.mxu0 0.0
    %5484 = vmatprep.subr.mxu0 0.0
    %5485 = vmatpush1.msra.mxu0 0.0
    %5486 = vmatprep.subr.mxu0 0.0
    %5487 = vmatpush1.msra.mxu0 0.0
    %5488 = vmatprep.subr.mxu0 0.0
    %5489 = vmatpush1.msra.mxu0 0.0
    %5490 = vmatprep.subr.mxu0 0.0
    %5491 = vmatpush1.msra.mxu0 0.0
    %5492 = vmatprep.subr.mxu0 0.0
    %5493 = vmatpush1.msra.mxu0 0.0
    %5494 = vmatprep.subr.mxu0 0.0
    %5495 = vmatpush1.msra.mxu0 0.0
    %5496 = vmatprep.subr.mxu0 0.0
    %5497 = vmatpush1.msra.mxu0 0.0
    %5498 = vmatprep.mubr.f32.mxu0 0.0
    %5499 = vmatmul.mubr.f32.gmra.mrb[0].mxu0 %v5432
    %v5500 = vpop.f32.mrb[0].mxu0
    %v5501 = vadd.f32 %v5427, %v5500
    %v5502 = vpop.f32.mrb[0].mxu0
    %5503 = vdwg.mxu0
    %vm5504 = vcmask 9216
    %5505 = vst.msk [vmem:[#allocation10] sm:$0x3] %vm5504, %v5501
    // Predicated region
    $region50: #{lstm_classifier_forward_fn.1} parent=1 // pred_check
      _
    $region51: #{lstm_classifier_forward_fn.1} parent=1 // pred_check_branch
      %5507 = sbr.rel (0) target = $region53
    $region52: #{lstm_classifier_forward_fn.1} parent=1 // pred_region
      %s5509 = ssub.s32 32, 32
      %5510 = vsyncadd [#allocation4], %s5509
      %s5512 = sshll.u32 [#allocation10], 4
      %s5513 = int_to_ptr.vmem [resolvable:$true] %s5512
      %5515 = dma.vmem_to_hbm [thread:$0]  %s5513, 32, %s8, [#allocation4]
    $region53: #{lstm_classifier_forward_fn.1} parent=1 // pred_fallthru
      _
    // Predicated region
    $region54: #{lstm_classifier_forward_fn.1} parent=1 // pred_check
      _
    $region55: #{lstm_classifier_forward_fn.1} parent=1 // pred_check_branch
      %5517 = sbr.rel (0) target = $region57
    $region56: #{lstm_classifier_forward_fn.1} parent=1 // pred_region
      %5518 = dma.done [#allocation4], 32
    $region57: #{lstm_classifier_forward_fn.1} parent=1 // pred_fallthru
      _
    %5519 = vsyncpa [#allocation3], 1
    %5520 = vsyncpa [#allocation6], 1
    %5521 = vsyncpa [#allocation9], 1
    %5522 = vsyncpa [#allocation4], 1

</llo_original>
